<compile_context>
chip_gen: v5e
topology: v5e:2x2
jax: 0.10.0
libtpu: 0.0.40
codegen_flags: <defaults>
</compile_context>

<pallas_src>
import functools
import math

import jax
import jax.numpy as jnp
from jax import lax
from jax.experimental import pallas as pl
from jax.experimental.pallas import tpu as pltpu


# ----------------------------- shared math -----------------------------------


def _layer_norm(x, gamma, beta, eps=1e-6):
    mean = jnp.mean(x, axis=-1, keepdims=True)
    var = jnp.mean((x - mean) ** 2, axis=-1, keepdims=True)
    return (x - mean) * lax.rsqrt(var + eps) * gamma + beta


# ------------------------------- kernel ---------------------------------------


def _encoder_layer_kernel(num_heads,
                          x_ref, bias_ref,
                          wqkv_ref, bqkv_ref, wo_ref, bo_ref,
                          w1_ref, b1_ref, w2_ref, b2_ref,
                          g1_ref, be1_ref, g2_ref, be2_ref,
                          out_ref):
    xb = x_ref[...]                                   # (Bt, S, D) f32
    Bt, S, D = xb.shape
    H = num_heads
    dk = D // H
    M = Bt * S                                        # folded MXU row dimension
    scale = 1.0 / math.sqrt(dk)

    x = xb.reshape(M, D)                              # fold batch into matmul rows

    # ------------- sublayer 1: pre-norm self-attention + residual -------------
    n1 = _layer_norm(x, g1_ref[...], be1_ref[...])    # (M, D) f32

    # Fused Q|K|V projection: one (M, D) @ (D, 3D) matmul + lane-dense (1, 3D) bias.
    qkv = jnp.dot(n1.astype(jnp.bfloat16), wqkv_ref[...],
                  preferred_element_type=jnp.float32) + bqkv_ref[...]     # (M, 3D) f32

    # Head split after the projection: lane slices -> (H, M, dk) -> (H*Bt, S, dk).
    # Only leading dims are regrouped; the lane dim never moves (S, dk kept minor).
    def split_heads(col_off):
        hs = jnp.stack(
            [qkv[:, col_off + h * dk: col_off + (h + 1) * dk] for h in range(H)],
            axis=0)                                   # (H, M, dk)
        return hs.reshape(H * Bt, S, dk).astype(jnp.bfloat16)

    q = split_heads(0)                                # g = h*Bt + b
    k = split_heads(D)
    v = split_heads(2 * D)

    # Scores / softmax in f32; mask arrives as a precomputed additive bias.
    scores = jnp.einsum('gqc,gkc->gqk', q, k,
                        preferred_element_type=jnp.float32) * scale       # (G, S, S)
    scores = scores + bias_ref[...][None, :, :]

    m = jnp.max(scores, axis=-1, keepdims=True)
    e = jnp.exp(scores - m)
    p = e * pl.reciprocal(jnp.sum(e, axis=-1, keepdims=True), approx=True)

    ctx = jnp.einsum('gqk,gkc->gqc', p.astype(jnp.bfloat16), v,
                     preferred_element_type=jnp.float32)                  # (G, S, dk)

    # Concat heads back to a lane-dense (M, D) slab -> one full-depth (K = D) output
    # projection; no (H, S, D) intermediate, no head-axis reduction.
    ctx = ctx.reshape(H, M, dk)
    ctx = jnp.concatenate([ctx[h] for h in range(H)], axis=-1)            # (M, D)
    attn = jnp.dot(ctx.astype(jnp.bfloat16), wo_ref[...],
                   preferred_element_type=jnp.float32) + bo_ref[...]

    x = x + attn

    # ------------- sublayer 2: pre-norm feed-forward + residual ---------------
    n2 = _layer_norm(x, g2_ref[...], be2_ref[...])
    h1 = jnp.dot(n2.astype(jnp.bfloat16), w1_ref[...],
                 preferred_element_type=jnp.float32) + b1_ref[...]
    h1 = jnp.maximum(h1, 0.0)
    ffn = jnp.dot(h1.astype(jnp.bfloat16), w2_ref[...],
                  preferred_element_type=jnp.float32) + b2_ref[...]

    out_ref[...] = (x + ffn).reshape(Bt, S, D).astype(out_ref.dtype)


# ------------------------------- wrapper ---------------------------------------


def transformer_encoder_layer(x, mask, params, *, num_heads, block_batch=None):
    B, S, D = x.shape
    H = num_heads
    assert D % H == 0 and D % 128 == 0 and S % 8 == 0
    (wq, bq, wk, bk, wv, bv, wo, bo,
     w1, b1, w2, b2, g1, be1, g2, be2) = params

    # Additive mask bias computed ONCE outside the kernel (hoisted compare/select).
    if mask is None:
        mask_bias = jnp.zeros((S, S), jnp.float32)
    else:
        mask_bias = jnp.where(mask == 0, jnp.float32(-1e9), jnp.float32(0.0))

    # Fused QKV weight (D, 3D) + lane-dense (1, 3D) bias; matmul weights in bf16,
    # biases / layernorm params stay f32 (added after f32 accumulation).
    wqkv = jnp.concatenate([wq, wk, wv], axis=1).astype(jnp.bfloat16)
    bqkv = jnp.concatenate([bq, bk, bv], axis=1).astype(jnp.float32)

    kparams = (wqkv, bqkv,
               wo.astype(jnp.bfloat16), bo,
               w1.astype(jnp.bfloat16), b1,
               w2.astype(jnp.bfloat16), b2,
               g1, be1, g2, be2)

    # Batch folding: Bt examples per grid step so M = Bt*S fills MXU rows (target ~256
    # rows for v6e/v7x; pass block_batch explicitly to target ~128 on v5e), while keeping
    # >= 2 grid steps when possible so both v7x TensorCores get work.
    if block_batch is None:
        bt = max(1, min(B, 256 // max(S, 1)))
        while B % bt:
            bt -= 1
        if bt == B and B > 1:
            bt = next(d for d in range(B // 2, 0, -1) if B % d == 0)
    else:
        bt = int(block_batch)
    assert B % bt == 0
    grid = (B // bt,)

    data_spec = pl.BlockSpec((bt, S, D), lambda i: (i, 0, 0))
    kernel = functools.partial(_encoder_layer_kernel, H)

    def build(single_buffer_weights):
        # Grid-invariant operands: their block index never changes across the batch grid,
        # so single-buffer them (halves weight VMEM at real widths; matters most on v7x).
        def const_spec(a):
            nd = a.ndim
            idx = lambda i, nd=nd: (0,) * nd
            if single_buffer_weights:
                return pl.BlockSpec(a.shape, idx, pipeline_mode=pl.Buffered(1))
            return pl.BlockSpec(a.shape, idx)

        in_specs = [data_spec, const_spec(mask_bias)] + [const_spec(p) for p in kparams]
        return pl.pallas_call(
            kernel,
            out_shape=jax.ShapeDtypeStruct((B, S, D), jnp.float32),
            grid_spec=pltpu.PrefetchScalarGridSpec(
                num_scalar_prefetch=0,
                grid=grid,
                in_specs=in_specs,
                out_specs=data_spec,
            ),
            compiler_params=pltpu.CompilerParams(
                dimension_semantics=("parallel",),
                vmem_limit_bytes=48 * 1024 * 1024,
            ),
        )

    try:
        return build(single_buffer_weights=True)(x, mask_bias, *kparams)
    except Exception:
        # TODO(synk): drop this fallback once pl.Buffered(1) pipeline_mode is confirmed on
        # the target jax build; the kernel itself is identical, only weight buffering differs.
        return build(single_buffer_weights=False)(x, mask_bias, *kparams)


# --------------------------- pure-JAX reference --------------------------------


def _reference(x, mask, params, num_heads):
    (wq, bq, wk, bk, wv, bv, wo, bo,
     w1, b1, w2, b2, g1, be1, g2, be2) = params
    B, S, D = x.shape
    H = num_heads
    dk = D // H

    def split_heads(t):                     # (S, D) -> (H, S, dk)
        return jnp.transpose(t.reshape(S, H, dk), (1, 0, 2))

    def mha(n):
        q = split_heads(n @ wq + bq)
        k = split_heads(n @ wk + bk)
        v = split_heads(n @ wv + bv)
        s = jnp.einsum('hqd,hkd->hqk', q, k) / math.sqrt(dk)
        if mask is not None:
            s = jnp.where(mask == 0, -1e9, s)
        p = jax.nn.softmax(s, axis=-1)
        ctx = jnp.einsum('hqk,hkd->hqd', p, v)
        ctx = jnp.transpose(ctx, (1, 0, 2)).reshape(S, D)
        return ctx @ wo + bo

    def per_example(xb):
        h = xb + mha(_layer_norm(xb, g1, be1))
        n2 = _layer_norm(h, g2, be2)
        ff = jnp.maximum(n2 @ w1 + b1, 0.0) @ w2 + b2
        return h + ff

    return jax.vmap(per_example)(x)


# ----------------------------------- main ---------------------------------------


if __name__ == "__main__":
    B, S, D_MODEL, H = 4, 8, 128, 4
    D_FF = 4 * D_MODEL

    key = jax.random.PRNGKey(0)
    ks = iter(jax.random.split(key, 32))

    def lin(fan_in, fan_out):
        # PyTorch Linear stores (out, in); pre-transposed here to (in, out) for x @ W.
        w = jax.random.normal(next(ks), (fan_in, fan_out), jnp.float32) / math.sqrt(fan_in)
        b = jax.random.normal(next(ks), (1, fan_out), jnp.float32) * 0.01
        return w, b

    params = []
    for _ in range(4):                       # Wq, Wk, Wv, Wo
        params.extend(lin(D_MODEL, D_MODEL))
    params.extend(lin(D_MODEL, D_FF))        # FFN W1, b1
    params.extend(lin(D_FF, D_MODEL))        # FFN W2, b2
    for _ in range(2):                       # 2 LayerNorms: gamma, beta
        params.append(jnp.ones((1, D_MODEL), jnp.float32))
        params.append(jnp.zeros((1, D_MODEL), jnp.float32))
    params = tuple(params)

    x = jax.random.normal(next(ks), (B, S, D_MODEL), jnp.float32)
    # 1 = attend, 0 = masked out (annotated-transformer convention); shared across batch.
    mask = jnp.tril(jnp.ones((S, S), jnp.float32))

    out = transformer_encoder_layer(x, mask, params, num_heads=H)
    out = jax.block_until_ready(out)

    ref = _reference(x, mask, params, H)
    max_err = float(jnp.max(jnp.abs(out - ref)))
    # bf16 matmul inputs (f32 accumulate) + approx reciprocal vs f32 reference -> ~1e-2 abs.
    if not bool(jnp.all(jnp.isfinite(out))) or max_err > 1e-1:
        raise RuntimeError(f"mismatch vs reference: max_err={max_err}")

    print("KERNEL_OK")
</pallas_src>

<mosaic_0001>
module attributes {stable_mosaic.version = 11 : i64} {
  func.func @_encoder_layer_kernel(%arg0: i32, %arg1: memref<2x8x128xf32, #tpu.memory_space<vmem>>, %arg2: memref<8x8xf32, #tpu.memory_space<vmem>>, %arg3: memref<128x384xbf16, #tpu.memory_space<vmem>>, %arg4: memref<1x384xf32, #tpu.memory_space<vmem>>, %arg5: memref<128x128xbf16, #tpu.memory_space<vmem>>, %arg6: memref<1x128xf32, #tpu.memory_space<vmem>>, %arg7: memref<128x512xbf16, #tpu.memory_space<vmem>>, %arg8: memref<1x512xf32, #tpu.memory_space<vmem>>, %arg9: memref<512x128xbf16, #tpu.memory_space<vmem>>, %arg10: memref<1x128xf32, #tpu.memory_space<vmem>>, %arg11: memref<1x128xf32, #tpu.memory_space<vmem>>, %arg12: memref<1x128xf32, #tpu.memory_space<vmem>>, %arg13: memref<1x128xf32, #tpu.memory_space<vmem>>, %arg14: memref<1x128xf32, #tpu.memory_space<vmem>>, %arg15: memref<2x8x128xf32, #tpu.memory_space<vmem>>) attributes {dimension_semantics = [#tpu.dimension_semantics<parallel>], iteration_bounds = array<i64: 2>, scalar_prefetch = 0 : i64, scratch_operands = 0 : i64, tpu.core_type = #tpu.core_type<tc>, window_params = [{transform_indices = @transform_0, window_bounds = array<i64: 2, 8, 128>}, {pipeline_mode = #tpu.pipeline_mode<synchronous>, transform_indices = @transform_1, window_bounds = array<i64: 8, 8>}, {pipeline_mode = #tpu.pipeline_mode<synchronous>, transform_indices = @transform_2, window_bounds = array<i64: 128, 384>}, {pipeline_mode = #tpu.pipeline_mode<synchronous>, transform_indices = @transform_3, window_bounds = array<i64: 1, 384>}, {pipeline_mode = #tpu.pipeline_mode<synchronous>, transform_indices = @transform_4, window_bounds = array<i64: 128, 128>}, {pipeline_mode = #tpu.pipeline_mode<synchronous>, transform_indices = @transform_5, window_bounds = array<i64: 1, 128>}, {pipeline_mode = #tpu.pipeline_mode<synchronous>, transform_indices = @transform_6, window_bounds = array<i64: 128, 512>}, {pipeline_mode = #tpu.pipeline_mode<synchronous>, transform_indices = @transform_7, window_bounds = array<i64: 1, 512>}, {pipeline_mode = #tpu.pipeline_mode<synchronous>, transform_indices = @transform_8, window_bounds = array<i64: 512, 128>}, {pipeline_mode = #tpu.pipeline_mode<synchronous>, transform_indices = @transform_9, window_bounds = array<i64: 1, 128>}, {pipeline_mode = #tpu.pipeline_mode<synchronous>, transform_indices = @transform_10, window_bounds = array<i64: 1, 128>}, {pipeline_mode = #tpu.pipeline_mode<synchronous>, transform_indices = @transform_11, window_bounds = array<i64: 1, 128>}, {pipeline_mode = #tpu.pipeline_mode<synchronous>, transform_indices = @transform_12, window_bounds = array<i64: 1, 128>}, {pipeline_mode = #tpu.pipeline_mode<synchronous>, transform_indices = @transform_13, window_bounds = array<i64: 1, 128>}, {transform_indices = @transform_14, window_bounds = array<i64: 2, 8, 128>}]} {
    %c0 = arith.constant 0 : index
    %c0_0 = arith.constant 0 : index
    %c0_1 = arith.constant 0 : index
    %0 = vector.load %arg1[%c0, %c0_0, %c0_1] : memref<2x8x128xf32, #tpu.memory_space<vmem>>, vector<2x8x128xf32>
    %1 = vector.shape_cast %0 : vector<2x8x128xf32> to vector<16x128xf32>
    %c0_2 = arith.constant 0 : index
    %c0_3 = arith.constant 0 : index
    %2 = vector.load %arg11[%c0_2, %c0_3] : memref<1x128xf32, #tpu.memory_space<vmem>>, vector<1x128xf32>
    %c0_4 = arith.constant 0 : index
    %c0_5 = arith.constant 0 : index
    %3 = vector.load %arg12[%c0_4, %c0_5] : memref<1x128xf32, #tpu.memory_space<vmem>>, vector<1x128xf32>
    %cst = arith.constant dense<0.000000e+00> : vector<16xf32>
    %4 = vector.multi_reduction <add>, %1, %cst [1] : vector<16x128xf32> to vector<16xf32>
    %5 = vector.shape_cast %4 : vector<16xf32> to vector<16x1xf32>
    %cst_6 = arith.constant 1.280000e+02 : f32
    %6 = vector.broadcast %cst_6 : f32 to vector<16x1xf32>
    %7 = arith.divf %5, %6 : vector<16x1xf32>
    %8 = vector.broadcast %7 : vector<16x1xf32> to vector<16x128xf32>
    %9 = arith.subf %1, %8 : vector<16x128xf32>
    %10 = arith.mulf %9, %9 : vector<16x128xf32>
    %cst_7 = arith.constant dense<0.000000e+00> : vector<16xf32>
    %11 = vector.multi_reduction <add>, %10, %cst_7 [1] : vector<16x128xf32> to vector<16xf32>
    %12 = vector.shape_cast %11 : vector<16xf32> to vector<16x1xf32>
    %cst_8 = arith.constant 1.280000e+02 : f32
    %13 = vector.broadcast %cst_8 : f32 to vector<16x1xf32>
    %14 = arith.divf %12, %13 : vector<16x1xf32>
    %15 = vector.broadcast %7 : vector<16x1xf32> to vector<16x128xf32>
    %16 = arith.subf %1, %15 : vector<16x128xf32>
    %cst_9 = arith.constant 9.99999997E-7 : f32
    %17 = vector.broadcast %cst_9 : f32 to vector<16x1xf32>
    %18 = arith.addf %14, %17 : vector<16x1xf32>
    %19 = math.rsqrt %18 : vector<16x1xf32>
    %20 = vector.broadcast %19 : vector<16x1xf32> to vector<16x128xf32>
    %21 = arith.mulf %16, %20 : vector<16x128xf32>
    %22 = vector.broadcast %2 : vector<1x128xf32> to vector<16x128xf32>
    %23 = arith.mulf %21, %22 : vector<16x128xf32>
    %24 = vector.broadcast %3 : vector<1x128xf32> to vector<16x128xf32>
    %25 = arith.addf %23, %24 : vector<16x128xf32>
    %26 = arith.truncf %25 : vector<16x128xf32> to vector<16x128xbf16>
    %c0_10 = arith.constant 0 : index
    %c0_11 = arith.constant 0 : index
    %27 = vector.load %arg3[%c0_10, %c0_11] : memref<128x384xbf16, #tpu.memory_space<vmem>>, vector<128x384xbf16>
    %cst_12 = arith.constant dense<0.000000e+00> : vector<16x384xf32>
    %28 = tpu.matmul %26, %27, %cst_12 {dimension_numbers = #tpu.dot_dimension_numbers<[1], [0], [0], [1], [0, 0, 1, 1], [], []>} : vector<16x128xbf16>, vector<128x384xbf16>, vector<16x384xf32> -> vector<16x384xf32>
    %c0_13 = arith.constant 0 : index
    %c0_14 = arith.constant 0 : index
    %29 = vector.load %arg4[%c0_13, %c0_14] : memref<1x384xf32, #tpu.memory_space<vmem>>, vector<1x384xf32>
    %30 = vector.broadcast %29 : vector<1x384xf32> to vector<16x384xf32>
    %31 = arith.addf %28, %30 : vector<16x384xf32>
    %32 = vector.extract_strided_slice %31 {offsets = [0, 0], sizes = [16, 32], strides = [1, 1]} : vector<16x384xf32> to vector<16x32xf32>
    %33 = vector.extract_strided_slice %31 {offsets = [0, 32], sizes = [16, 32], strides = [1, 1]} : vector<16x384xf32> to vector<16x32xf32>
    %34 = vector.extract_strided_slice %31 {offsets = [0, 64], sizes = [16, 32], strides = [1, 1]} : vector<16x384xf32> to vector<16x32xf32>
    %35 = vector.extract_strided_slice %31 {offsets = [0, 96], sizes = [16, 32], strides = [1, 1]} : vector<16x384xf32> to vector<16x32xf32>
    %36 = vector.shape_cast %32 : vector<16x32xf32> to vector<1x16x32xf32>
    %37 = vector.shape_cast %33 : vector<16x32xf32> to vector<1x16x32xf32>
    %38 = vector.shape_cast %34 : vector<16x32xf32> to vector<1x16x32xf32>
    %39 = vector.shape_cast %35 : vector<16x32xf32> to vector<1x16x32xf32>
    %40 = tpu.concatenate %36, %37, %38, %39 in 0 : vector<1x16x32xf32>, vector<1x16x32xf32>, vector<1x16x32xf32>, vector<1x16x32xf32> -> vector<4x16x32xf32>
    %41 = vector.shape_cast %40 : vector<4x16x32xf32> to vector<8x8x32xf32>
    %42 = arith.truncf %41 : vector<8x8x32xf32> to vector<8x8x32xbf16>
    %43 = vector.extract_strided_slice %31 {offsets = [0, 128], sizes = [16, 32], strides = [1, 1]} : vector<16x384xf32> to vector<16x32xf32>
    %44 = vector.extract_strided_slice %31 {offsets = [0, 160], sizes = [16, 32], strides = [1, 1]} : vector<16x384xf32> to vector<16x32xf32>
    %45 = vector.extract_strided_slice %31 {offsets = [0, 192], sizes = [16, 32], strides = [1, 1]} : vector<16x384xf32> to vector<16x32xf32>
    %46 = vector.extract_strided_slice %31 {offsets = [0, 224], sizes = [16, 32], strides = [1, 1]} : vector<16x384xf32> to vector<16x32xf32>
    %47 = vector.shape_cast %43 : vector<16x32xf32> to vector<1x16x32xf32>
    %48 = vector.shape_cast %44 : vector<16x32xf32> to vector<1x16x32xf32>
    %49 = vector.shape_cast %45 : vector<16x32xf32> to vector<1x16x32xf32>
    %50 = vector.shape_cast %46 : vector<16x32xf32> to vector<1x16x32xf32>
    %51 = tpu.concatenate %47, %48, %49, %50 in 0 : vector<1x16x32xf32>, vector<1x16x32xf32>, vector<1x16x32xf32>, vector<1x16x32xf32> -> vector<4x16x32xf32>
    %52 = vector.shape_cast %51 : vector<4x16x32xf32> to vector<8x8x32xf32>
    %53 = arith.truncf %52 : vector<8x8x32xf32> to vector<8x8x32xbf16>
    %54 = vector.extract_strided_slice %31 {offsets = [0, 256], sizes = [16, 32], strides = [1, 1]} : vector<16x384xf32> to vector<16x32xf32>
    %55 = vector.extract_strided_slice %31 {offsets = [0, 288], sizes = [16, 32], strides = [1, 1]} : vector<16x384xf32> to vector<16x32xf32>
    %56 = vector.extract_strided_slice %31 {offsets = [0, 320], sizes = [16, 32], strides = [1, 1]} : vector<16x384xf32> to vector<16x32xf32>
    %57 = vector.extract_strided_slice %31 {offsets = [0, 352], sizes = [16, 32], strides = [1, 1]} : vector<16x384xf32> to vector<16x32xf32>
    %58 = vector.shape_cast %54 : vector<16x32xf32> to vector<1x16x32xf32>
    %59 = vector.shape_cast %55 : vector<16x32xf32> to vector<1x16x32xf32>
    %60 = vector.shape_cast %56 : vector<16x32xf32> to vector<1x16x32xf32>
    %61 = vector.shape_cast %57 : vector<16x32xf32> to vector<1x16x32xf32>
    %62 = tpu.concatenate %58, %59, %60, %61 in 0 : vector<1x16x32xf32>, vector<1x16x32xf32>, vector<1x16x32xf32>, vector<1x16x32xf32> -> vector<4x16x32xf32>
    %63 = vector.shape_cast %62 : vector<4x16x32xf32> to vector<8x8x32xf32>
    %64 = arith.truncf %63 : vector<8x8x32xf32> to vector<8x8x32xbf16>
    "tpu.trace_start"() <{level = 10 : i32, message = "gqc,gkc->gqk"}> : () -> ()
    %cst_15 = arith.constant dense<0.000000e+00> : vector<8x8x8xf32>
    %65 = tpu.matmul %42, %53, %cst_15 {dimension_numbers = #tpu.dot_dimension_numbers<[2], [2], [1], [1], [0, 0, 0, 1, 1, 1], [0], [0]>} : vector<8x8x32xbf16>, vector<8x8x32xbf16>, vector<8x8x8xf32> -> vector<8x8x8xf32>
    "tpu.trace_stop"() : () -> ()
    %cst_16 = arith.constant 0.176776692 : f32
    %66 = vector.broadcast %cst_16 : f32 to vector<8x8x8xf32>
    %67 = arith.mulf %65, %66 : vector<8x8x8xf32>
    %c0_17 = arith.constant 0 : index
    %c0_18 = arith.constant 0 : index
    %68 = vector.load %arg2[%c0_17, %c0_18] : memref<8x8xf32, #tpu.memory_space<vmem>>, vector<8x8xf32>
    %69 = vector.shape_cast %68 : vector<8x8xf32> to vector<1x8x8xf32>
    %70 = vector.broadcast %69 : vector<1x8x8xf32> to vector<8x8x8xf32>
    %71 = arith.addf %67, %70 : vector<8x8x8xf32>
    %cst_19 = arith.constant dense<0xFF800000> : vector<8x8xf32>
    %72 = vector.multi_reduction <maximumf>, %71, %cst_19 [2] : vector<8x8x8xf32> to vector<8x8xf32>
    %73 = vector.shape_cast %72 : vector<8x8xf32> to vector<8x8x1xf32>
    %74 = vector.broadcast %73 : vector<8x8x1xf32> to vector<8x8x8xf32>
    %75 = arith.subf %71, %74 : vector<8x8x8xf32>
    %76 = math.exp %75 : vector<8x8x8xf32>
    %cst_20 = arith.constant dense<0.000000e+00> : vector<8x8xf32>
    %77 = vector.multi_reduction <add>, %76, %cst_20 [2] : vector<8x8x8xf32> to vector<8x8xf32>
    %78 = vector.shape_cast %77 : vector<8x8xf32> to vector<8x8x1xf32>
    %79 = tpu.reciprocal %78 {approx = true} : vector<8x8x1xf32> -> vector<8x8x1xf32>
    %80 = vector.broadcast %79 : vector<8x8x1xf32> to vector<8x8x8xf32>
    %81 = arith.mulf %76, %80 : vector<8x8x8xf32>
    %82 = arith.truncf %81 : vector<8x8x8xf32> to vector<8x8x8xbf16>
    "tpu.trace_start"() <{level = 10 : i32, message = "gqk,gkc->gqc"}> : () -> ()
    %cst_21 = arith.constant dense<0.000000e+00> : vector<8x8x32xf32>
    %83 = tpu.matmul %82, %64, %cst_21 {dimension_numbers = #tpu.dot_dimension_numbers<[2], [1], [1], [2], [0, 0, 0, 1, 1, 2], [0], [0]>} : vector<8x8x8xbf16>, vector<8x8x32xbf16>, vector<8x8x32xf32> -> vector<8x8x32xf32>
    "tpu.trace_stop"() : () -> ()
    %84 = vector.shape_cast %83 : vector<8x8x32xf32> to vector<4x16x32xf32>
    %85 = vector.extract_strided_slice %84 {offsets = [0, 0, 0], sizes = [1, 16, 32], strides = [1, 1, 1]} : vector<4x16x32xf32> to vector<1x16x32xf32>
    %86 = vector.shape_cast %85 : vector<1x16x32xf32> to vector<16x32xf32>
    %87 = vector.extract_strided_slice %84 {offsets = [1, 0, 0], sizes = [1, 16, 32], strides = [1, 1, 1]} : vector<4x16x32xf32> to vector<1x16x32xf32>
    %88 = vector.shape_cast %87 : vector<1x16x32xf32> to vector<16x32xf32>
    %89 = vector.extract_strided_slice %84 {offsets = [2, 0, 0], sizes = [1, 16, 32], strides = [1, 1, 1]} : vector<4x16x32xf32> to vector<1x16x32xf32>
    %90 = vector.shape_cast %89 : vector<1x16x32xf32> to vector<16x32xf32>
    %91 = vector.extract_strided_slice %84 {offsets = [3, 0, 0], sizes = [1, 16, 32], strides = [1, 1, 1]} : vector<4x16x32xf32> to vector<1x16x32xf32>
    %92 = vector.shape_cast %91 : vector<1x16x32xf32> to vector<16x32xf32>
    %93 = tpu.concatenate %86, %88, %90, %92 in 1 : vector<16x32xf32>, vector<16x32xf32>, vector<16x32xf32>, vector<16x32xf32> -> vector<16x128xf32>
    %94 = arith.truncf %93 : vector<16x128xf32> to vector<16x128xbf16>
    %c0_22 = arith.constant 0 : index
    %c0_23 = arith.constant 0 : index
    %95 = vector.load %arg5[%c0_22, %c0_23] : memref<128x128xbf16, #tpu.memory_space<vmem>>, vector<128x128xbf16>
    %cst_24 = arith.constant dense<0.000000e+00> : vector<16x128xf32>
    %96 = tpu.matmul %94, %95, %cst_24 {dimension_numbers = #tpu.dot_dimension_numbers<[1], [0], [0], [1], [0, 0, 1, 1], [], []>} : vector<16x128xbf16>, vector<128x128xbf16>, vector<16x128xf32> -> vector<16x128xf32>
    %c0_25 = arith.constant 0 : index
    %c0_26 = arith.constant 0 : index
    %97 = vector.load %arg6[%c0_25, %c0_26] : memref<1x128xf32, #tpu.memory_space<vmem>>, vector<1x128xf32>
    %98 = vector.broadcast %97 : vector<1x128xf32> to vector<16x128xf32>
    %99 = arith.addf %96, %98 : vector<16x128xf32>
    %100 = arith.addf %1, %99 : vector<16x128xf32>
    %c0_27 = arith.constant 0 : index
    %c0_28 = arith.constant 0 : index
    %101 = vector.load %arg13[%c0_27, %c0_28] : memref<1x128xf32, #tpu.memory_space<vmem>>, vector<1x128xf32>
    %c0_29 = arith.constant 0 : index
    %c0_30 = arith.constant 0 : index
    %102 = vector.load %arg14[%c0_29, %c0_30] : memref<1x128xf32, #tpu.memory_space<vmem>>, vector<1x128xf32>
    %cst_31 = arith.constant dense<0.000000e+00> : vector<16xf32>
    %103 = vector.multi_reduction <add>, %100, %cst_31 [1] : vector<16x128xf32> to vector<16xf32>
    %104 = vector.shape_cast %103 : vector<16xf32> to vector<16x1xf32>
    %cst_32 = arith.constant 1.280000e+02 : f32
    %105 = vector.broadcast %cst_32 : f32 to vector<16x1xf32>
    %106 = arith.divf %104, %105 : vector<16x1xf32>
    %107 = vector.broadcast %106 : vector<16x1xf32> to vector<16x128xf32>
    %108 = arith.subf %100, %107 : vector<16x128xf32>
    %109 = arith.mulf %108, %108 : vector<16x128xf32>
    %cst_33 = arith.constant dense<0.000000e+00> : vector<16xf32>
    %110 = vector.multi_reduction <add>, %109, %cst_33 [1] : vector<16x128xf32> to vector<16xf32>
    %111 = vector.shape_cast %110 : vector<16xf32> to vector<16x1xf32>
    %cst_34 = arith.constant 1.280000e+02 : f32
    %112 = vector.broadcast %cst_34 : f32 to vector<16x1xf32>
    %113 = arith.divf %111, %112 : vector<16x1xf32>
    %114 = vector.broadcast %106 : vector<16x1xf32> to vector<16x128xf32>
    %115 = arith.subf %100, %114 : vector<16x128xf32>
    %cst_35 = arith.constant 9.99999997E-7 : f32
    %116 = vector.broadcast %cst_35 : f32 to vector<16x1xf32>
    %117 = arith.addf %113, %116 : vector<16x1xf32>
    %118 = math.rsqrt %117 : vector<16x1xf32>
    %119 = vector.broadcast %118 : vector<16x1xf32> to vector<16x128xf32>
    %120 = arith.mulf %115, %119 : vector<16x128xf32>
    %121 = vector.broadcast %101 : vector<1x128xf32> to vector<16x128xf32>
    %122 = arith.mulf %120, %121 : vector<16x128xf32>
    %123 = vector.broadcast %102 : vector<1x128xf32> to vector<16x128xf32>
    %124 = arith.addf %122, %123 : vector<16x128xf32>
    %125 = arith.truncf %124 : vector<16x128xf32> to vector<16x128xbf16>
    %c0_36 = arith.constant 0 : index
    %c0_37 = arith.constant 0 : index
    %126 = vector.load %arg7[%c0_36, %c0_37] : memref<128x512xbf16, #tpu.memory_space<vmem>>, vector<128x512xbf16>
    %cst_38 = arith.constant dense<0.000000e+00> : vector<16x512xf32>
    %127 = tpu.matmul %125, %126, %cst_38 {dimension_numbers = #tpu.dot_dimension_numbers<[1], [0], [0], [1], [0, 0, 1, 1], [], []>} : vector<16x128xbf16>, vector<128x512xbf16>, vector<16x512xf32> -> vector<16x512xf32>
    %c0_39 = arith.constant 0 : index
    %c0_40 = arith.constant 0 : index
    %128 = vector.load %arg8[%c0_39, %c0_40] : memref<1x512xf32, #tpu.memory_space<vmem>>, vector<1x512xf32>
    %129 = vector.broadcast %128 : vector<1x512xf32> to vector<16x512xf32>
    %130 = arith.addf %127, %129 : vector<16x512xf32>
    %cst_41 = arith.constant 0.000000e+00 : f32
    %131 = vector.broadcast %cst_41 : f32 to vector<16x512xf32>
    %132 = arith.maximumf %130, %131 : vector<16x512xf32>
    %133 = arith.truncf %132 : vector<16x512xf32> to vector<16x512xbf16>
    %c0_42 = arith.constant 0 : index
    %c0_43 = arith.constant 0 : index
    %134 = vector.load %arg9[%c0_42, %c0_43] : memref<512x128xbf16, #tpu.memory_space<vmem>>, vector<512x128xbf16>
    %cst_44 = arith.constant dense<0.000000e+00> : vector<16x128xf32>
    %135 = tpu.matmul %133, %134, %cst_44 {dimension_numbers = #tpu.dot_dimension_numbers<[1], [0], [0], [1], [0, 0, 1, 1], [], []>} : vector<16x512xbf16>, vector<512x128xbf16>, vector<16x128xf32> -> vector<16x128xf32>
    %c0_45 = arith.constant 0 : index
    %c0_46 = arith.constant 0 : index
    %136 = vector.load %arg10[%c0_45, %c0_46] : memref<1x128xf32, #tpu.memory_space<vmem>>, vector<1x128xf32>
    %137 = vector.broadcast %136 : vector<1x128xf32> to vector<16x128xf32>
    %138 = arith.addf %135, %137 : vector<16x128xf32>
    %139 = arith.addf %100, %138 : vector<16x128xf32>
    %140 = vector.shape_cast %139 : vector<16x128xf32> to vector<2x8x128xf32>
    %c0_47 = arith.constant 0 : index
    %c0_48 = arith.constant 0 : index
    %c0_49 = arith.constant 0 : index
    %141 = vector.load %arg15[%c0_47, %c0_48, %c0_49] : memref<2x8x128xf32, #tpu.memory_space<vmem>>, vector<2x8x128xf32>
    tpu.vector_store %arg15[%c0_47, %c0_48, %c0_49], %140 {strides = array<i32>} : memref<2x8x128xf32, #tpu.memory_space<vmem>>, vector<2x8x128xf32>,
    return
  }
  func.func @transform_0(%arg0: i32) -> (i32, i32, i32) {
    %c0_i32 = arith.constant 0 : i32
    %c0_i32_0 = arith.constant 0 : i32
    %c0_i32_1 = arith.constant 0 : i32
    return %arg0, %c0_i32, %c0_i32_0 : i32, i32, i32
  }
  func.func @transform_1(%arg0: i32) -> (i32, i32) {
    %c0_i32 = arith.constant 0 : i32
    %c0_i32_0 = arith.constant 0 : i32
    %c0_i32_1 = arith.constant 0 : i32
    return %c0_i32, %c0_i32_0 : i32, i32
  }
  func.func @transform_2(%arg0: i32) -> (i32, i32) {
    %c0_i32 = arith.constant 0 : i32
    %c0_i32_0 = arith.constant 0 : i32
    %c0_i32_1 = arith.constant 0 : i32
    return %c0_i32, %c0_i32_0 : i32, i32
  }
  func.func @transform_3(%arg0: i32) -> (i32, i32) {
    %c0_i32 = arith.constant 0 : i32
    %c0_i32_0 = arith.constant 0 : i32
    %c0_i32_1 = arith.constant 0 : i32
    return %c0_i32, %c0_i32_0 : i32, i32
  }
  func.func @transform_4(%arg0: i32) -> (i32, i32) {
    %c0_i32 = arith.constant 0 : i32
    %c0_i32_0 = arith.constant 0 : i32
    %c0_i32_1 = arith.constant 0 : i32
    return %c0_i32, %c0_i32_0 : i32, i32
  }
  func.func @transform_5(%arg0: i32) -> (i32, i32) {
    %c0_i32 = arith.constant 0 : i32
    %c0_i32_0 = arith.constant 0 : i32
    %c0_i32_1 = arith.constant 0 : i32
    return %c0_i32, %c0_i32_0 : i32, i32
  }
  func.func @transform_6(%arg0: i32) -> (i32, i32) {
    %c0_i32 = arith.constant 0 : i32
    %c0_i32_0 = arith.constant 0 : i32
    %c0_i32_1 = arith.constant 0 : i32
    return %c0_i32, %c0_i32_0 : i32, i32
  }
  func.func @transform_7(%arg0: i32) -> (i32, i32) {
    %c0_i32 = arith.constant 0 : i32
    %c0_i32_0 = arith.constant 0 : i32
    %c0_i32_1 = arith.constant 0 : i32
    return %c0_i32, %c0_i32_0 : i32, i32
  }
  func.func @transform_8(%arg0: i32) -> (i32, i32) {
    %c0_i32 = arith.constant 0 : i32
    %c0_i32_0 = arith.constant 0 : i32
    %c0_i32_1 = arith.constant 0 : i32
    return %c0_i32, %c0_i32_0 : i32, i32
  }
  func.func @transform_9(%arg0: i32) -> (i32, i32) {
    %c0_i32 = arith.constant 0 : i32
    %c0_i32_0 = arith.constant 0 : i32
    %c0_i32_1 = arith.constant 0 : i32
    return %c0_i32, %c0_i32_0 : i32, i32
  }
  func.func @transform_10(%arg0: i32) -> (i32, i32) {
    %c0_i32 = arith.constant 0 : i32
    %c0_i32_0 = arith.constant 0 : i32
    %c0_i32_1 = arith.constant 0 : i32
    return %c0_i32, %c0_i32_0 : i32, i32
  }
  func.func @transform_11(%arg0: i32) -> (i32, i32) {
    %c0_i32 = arith.constant 0 : i32
    %c0_i32_0 = arith.constant 0 : i32
    %c0_i32_1 = arith.constant 0 : i32
    return %c0_i32, %c0_i32_0 : i32, i32
  }
  func.func @transform_12(%arg0: i32) -> (i32, i32) {
    %c0_i32 = arith.constant 0 : i32
    %c0_i32_0 = arith.constant 0 : i32
    %c0_i32_1 = arith.constant 0 : i32
    return %c0_i32, %c0_i32_0 : i32, i32
  }
  func.func @transform_13(%arg0: i32) -> (i32, i32) {
    %c0_i32 = arith.constant 0 : i32
    %c0_i32_0 = arith.constant 0 : i32
    %c0_i32_1 = arith.constant 0 : i32
    return %c0_i32, %c0_i32_0 : i32, i32
  }
  func.func @transform_14(%arg0: i32) -> (i32, i32, i32) {
    %c0_i32 = arith.constant 0 : i32
    %c0_i32_0 = arith.constant 0 : i32
    %c0_i32_1 = arith.constant 0 : i32
    return %arg0, %c0_i32, %c0_i32_0 : i32, i32, i32
  }
}

module attributes {stable_mosaic.version = 11 : i64} {
  func.func @_encoder_layer_kernel(%arg0: i32, %arg1: memref<2x8x128xf32, #tpu.memory_space<vmem>>, %arg2: memref<8x8xf32, #tpu.memory_space<vmem>>, %arg3: memref<128x384xbf16, #tpu.memory_space<vmem>>, %arg4: memref<1x384xf32, #tpu.memory_space<vmem>>, %arg5: memref<128x128xbf16, #tpu.memory_space<vmem>>, %arg6: memref<1x128xf32, #tpu.memory_space<vmem>>, %arg7: memref<128x512xbf16, #tpu.memory_space<vmem>>, %arg8: memref<1x512xf32, #tpu.memory_space<vmem>>, %arg9: memref<512x128xbf16, #tpu.memory_space<vmem>>, %arg10: memref<1x128xf32, #tpu.memory_space<vmem>>, %arg11: memref<1x128xf32, #tpu.memory_space<vmem>>, %arg12: memref<1x128xf32, #tpu.memory_space<vmem>>, %arg13: memref<1x128xf32, #tpu.memory_space<vmem>>, %arg14: memref<1x128xf32, #tpu.memory_space<vmem>>, %arg15: memref<2x8x128xf32, #tpu.memory_space<vmem>>) attributes {dimension_semantics = [#tpu.dimension_semantics<parallel>], iteration_bounds = array<i64: 2>, scalar_prefetch = 0 : i64, scratch_operands = 0 : i64, tpu.core_type = #tpu.core_type<tc>, window_params = [{transform_indices = @transform_0, window_bounds = array<i64: 2, 8, 128>}, {pipeline_mode = #tpu.pipeline_mode<synchronous>, transform_indices = @transform_1, window_bounds = array<i64: 8, 8>}, {pipeline_mode = #tpu.pipeline_mode<synchronous>, transform_indices = @transform_2, window_bounds = array<i64: 128, 384>}, {pipeline_mode = #tpu.pipeline_mode<synchronous>, transform_indices = @transform_3, window_bounds = array<i64: 1, 384>}, {pipeline_mode = #tpu.pipeline_mode<synchronous>, transform_indices = @transform_4, window_bounds = array<i64: 128, 128>}, {pipeline_mode = #tpu.pipeline_mode<synchronous>, transform_indices = @transform_5, window_bounds = array<i64: 1, 128>}, {pipeline_mode = #tpu.pipeline_mode<synchronous>, transform_indices = @transform_6, window_bounds = array<i64: 128, 512>}, {pipeline_mode = #tpu.pipeline_mode<synchronous>, transform_indices = @transform_7, window_bounds = array<i64: 1, 512>}, {pipeline_mode = #tpu.pipeline_mode<synchronous>, transform_indices = @transform_8, window_bounds = array<i64: 512, 128>}, {pipeline_mode = #tpu.pipeline_mode<synchronous>, transform_indices = @transform_9, window_bounds = array<i64: 1, 128>}, {pipeline_mode = #tpu.pipeline_mode<synchronous>, transform_indices = @transform_10, window_bounds = array<i64: 1, 128>}, {pipeline_mode = #tpu.pipeline_mode<synchronous>, transform_indices = @transform_11, window_bounds = array<i64: 1, 128>}, {pipeline_mode = #tpu.pipeline_mode<synchronous>, transform_indices = @transform_12, window_bounds = array<i64: 1, 128>}, {pipeline_mode = #tpu.pipeline_mode<synchronous>, transform_indices = @transform_13, window_bounds = array<i64: 1, 128>}, {transform_indices = @transform_14, window_bounds = array<i64: 2, 8, 128>}]} {
    %c0 = arith.constant 0 : index
    %c0_0 = arith.constant 0 : index
    %c0_1 = arith.constant 0 : index
    %0 = vector.load %arg1[%c0, %c0_0, %c0_1] : memref<2x8x128xf32, #tpu.memory_space<vmem>>, vector<2x8x128xf32>
    %1 = vector.shape_cast %0 : vector<2x8x128xf32> to vector<16x128xf32>
    %c0_2 = arith.constant 0 : index
    %c0_3 = arith.constant 0 : index
    %2 = vector.load %arg11[%c0_2, %c0_3] : memref<1x128xf32, #tpu.memory_space<vmem>>, vector<1x128xf32>
    %c0_4 = arith.constant 0 : index
    %c0_5 = arith.constant 0 : index
    %3 = vector.load %arg12[%c0_4, %c0_5] : memref<1x128xf32, #tpu.memory_space<vmem>>, vector<1x128xf32>
    %cst = arith.constant dense<0.000000e+00> : vector<16xf32>
    %4 = vector.multi_reduction <add>, %1, %cst [1] : vector<16x128xf32> to vector<16xf32>
    %5 = vector.shape_cast %4 : vector<16xf32> to vector<16x1xf32>
    %cst_6 = arith.constant 1.280000e+02 : f32
    %6 = vector.broadcast %cst_6 : f32 to vector<16x1xf32>
    %7 = arith.divf %5, %6 : vector<16x1xf32>
    %8 = vector.broadcast %7 : vector<16x1xf32> to vector<16x128xf32>
    %9 = arith.subf %1, %8 : vector<16x128xf32>
    %10 = arith.mulf %9, %9 : vector<16x128xf32>
    %cst_7 = arith.constant dense<0.000000e+00> : vector<16xf32>
    %11 = vector.multi_reduction <add>, %10, %cst_7 [1] : vector<16x128xf32> to vector<16xf32>
    %12 = vector.shape_cast %11 : vector<16xf32> to vector<16x1xf32>
    %cst_8 = arith.constant 1.280000e+02 : f32
    %13 = vector.broadcast %cst_8 : f32 to vector<16x1xf32>
    %14 = arith.divf %12, %13 : vector<16x1xf32>
    %15 = vector.broadcast %7 : vector<16x1xf32> to vector<16x128xf32>
    %16 = arith.subf %1, %15 : vector<16x128xf32>
    %cst_9 = arith.constant 9.99999997E-7 : f32
    %17 = vector.broadcast %cst_9 : f32 to vector<16x1xf32>
    %18 = arith.addf %14, %17 : vector<16x1xf32>
    %19 = math.rsqrt %18 : vector<16x1xf32>
    %20 = vector.broadcast %19 : vector<16x1xf32> to vector<16x128xf32>
    %21 = arith.mulf %16, %20 : vector<16x128xf32>
    %22 = vector.broadcast %2 : vector<1x128xf32> to vector<16x128xf32>
    %23 = arith.mulf %21, %22 : vector<16x128xf32>
    %24 = vector.broadcast %3 : vector<1x128xf32> to vector<16x128xf32>
    %25 = arith.addf %23, %24 : vector<16x128xf32>
    %26 = arith.truncf %25 : vector<16x128xf32> to vector<16x128xbf16>
    %c0_10 = arith.constant 0 : index
    %c0_11 = arith.constant 0 : index
    %27 = vector.load %arg3[%c0_10, %c0_11] : memref<128x384xbf16, #tpu.memory_space<vmem>>, vector<128x384xbf16>
    %cst_12 = arith.constant dense<0.000000e+00> : vector<16x384xf32>
    %28 = tpu.matmul %26, %27, %cst_12 {dimension_numbers = #tpu.dot_dimension_numbers<[1], [0], [0], [1], [0, 0, 1, 1], [], []>} : vector<16x128xbf16>, vector<128x384xbf16>, vector<16x384xf32> -> vector<16x384xf32>
    %c0_13 = arith.constant 0 : index
    %c0_14 = arith.constant 0 : index
    %29 = vector.load %arg4[%c0_13, %c0_14] : memref<1x384xf32, #tpu.memory_space<vmem>>, vector<1x384xf32>
    %30 = vector.broadcast %29 : vector<1x384xf32> to vector<16x384xf32>
    %31 = arith.addf %28, %30 : vector<16x384xf32>
    %32 = vector.extract_strided_slice %31 {offsets = [0, 0], sizes = [16, 32], strides = [1, 1]} : vector<16x384xf32> to vector<16x32xf32>
    %33 = vector.extract_strided_slice %31 {offsets = [0, 32], sizes = [16, 32], strides = [1, 1]} : vector<16x384xf32> to vector<16x32xf32>
    %34 = vector.extract_strided_slice %31 {offsets = [0, 64], sizes = [16, 32], strides = [1, 1]} : vector<16x384xf32> to vector<16x32xf32>
    %35 = vector.extract_strided_slice %31 {offsets = [0, 96], sizes = [16, 32], strides = [1, 1]} : vector<16x384xf32> to vector<16x32xf32>
    %36 = vector.shape_cast %32 : vector<16x32xf32> to vector<1x16x32xf32>
    %37 = vector.shape_cast %33 : vector<16x32xf32> to vector<1x16x32xf32>
    %38 = vector.shape_cast %34 : vector<16x32xf32> to vector<1x16x32xf32>
    %39 = vector.shape_cast %35 : vector<16x32xf32> to vector<1x16x32xf32>
    %40 = tpu.concatenate %36, %37, %38, %39 in 0 : vector<1x16x32xf32>, vector<1x16x32xf32>, vector<1x16x32xf32>, vector<1x16x32xf32> -> vector<4x16x32xf32>
    %41 = vector.shape_cast %40 : vector<4x16x32xf32> to vector<8x8x32xf32>
    %42 = arith.truncf %41 : vector<8x8x32xf32> to vector<8x8x32xbf16>
    %43 = vector.extract_strided_slice %31 {offsets = [0, 128], sizes = [16, 32], strides = [1, 1]} : vector<16x384xf32> to vector<16x32xf32>
    %44 = vector.extract_strided_slice %31 {offsets = [0, 160], sizes = [16, 32], strides = [1, 1]} : vector<16x384xf32> to vector<16x32xf32>
    %45 = vector.extract_strided_slice %31 {offsets = [0, 192], sizes = [16, 32], strides = [1, 1]} : vector<16x384xf32> to vector<16x32xf32>
    %46 = vector.extract_strided_slice %31 {offsets = [0, 224], sizes = [16, 32], strides = [1, 1]} : vector<16x384xf32> to vector<16x32xf32>
    %47 = vector.shape_cast %43 : vector<16x32xf32> to vector<1x16x32xf32>
    %48 = vector.shape_cast %44 : vector<16x32xf32> to vector<1x16x32xf32>
    %49 = vector.shape_cast %45 : vector<16x32xf32> to vector<1x16x32xf32>
    %50 = vector.shape_cast %46 : vector<16x32xf32> to vector<1x16x32xf32>
    %51 = tpu.concatenate %47, %48, %49, %50 in 0 : vector<1x16x32xf32>, vector<1x16x32xf32>, vector<1x16x32xf32>, vector<1x16x32xf32> -> vector<4x16x32xf32>
    %52 = vector.shape_cast %51 : vector<4x16x32xf32> to vector<8x8x32xf32>
    %53 = arith.truncf %52 : vector<8x8x32xf32> to vector<8x8x32xbf16>
    %54 = vector.extract_strided_slice %31 {offsets = [0, 256], sizes = [16, 32], strides = [1, 1]} : vector<16x384xf32> to vector<16x32xf32>
    %55 = vector.extract_strided_slice %31 {offsets = [0, 288], sizes = [16, 32], strides = [1, 1]} : vector<16x384xf32> to vector<16x32xf32>
    %56 = vector.extract_strided_slice %31 {offsets = [0, 320], sizes = [16, 32], strides = [1, 1]} : vector<16x384xf32> to vector<16x32xf32>
    %57 = vector.extract_strided_slice %31 {offsets = [0, 352], sizes = [16, 32], strides = [1, 1]} : vector<16x384xf32> to vector<16x32xf32>
    %58 = vector.shape_cast %54 : vector<16x32xf32> to vector<1x16x32xf32>
    %59 = vector.shape_cast %55 : vector<16x32xf32> to vector<1x16x32xf32>
    %60 = vector.shape_cast %56 : vector<16x32xf32> to vector<1x16x32xf32>
    %61 = vector.shape_cast %57 : vector<16x32xf32> to vector<1x16x32xf32>
    %62 = tpu.concatenate %58, %59, %60, %61 in 0 : vector<1x16x32xf32>, vector<1x16x32xf32>, vector<1x16x32xf32>, vector<1x16x32xf32> -> vector<4x16x32xf32>
    %63 = vector.shape_cast %62 : vector<4x16x32xf32> to vector<8x8x32xf32>
    %64 = arith.truncf %63 : vector<8x8x32xf32> to vector<8x8x32xbf16>
    "tpu.trace_start"() <{level = 10 : i32, message = "gqc,gkc->gqk"}> : () -> ()
    %cst_15 = arith.constant dense<0.000000e+00> : vector<8x8x8xf32>
    %65 = tpu.matmul %42, %53, %cst_15 {dimension_numbers = #tpu.dot_dimension_numbers<[2], [2], [1], [1], [0, 0, 0, 1, 1, 1], [0], [0]>} : vector<8x8x32xbf16>, vector<8x8x32xbf16>, vector<8x8x8xf32> -> vector<8x8x8xf32>
    "tpu.trace_stop"() : () -> ()
    %cst_16 = arith.constant 0.176776692 : f32
    %66 = vector.broadcast %cst_16 : f32 to vector<8x8x8xf32>
    %67 = arith.mulf %65, %66 : vector<8x8x8xf32>
    %c0_17 = arith.constant 0 : index
    %c0_18 = arith.constant 0 : index
    %68 = vector.load %arg2[%c0_17, %c0_18] : memref<8x8xf32, #tpu.memory_space<vmem>>, vector<8x8xf32>
    %69 = vector.shape_cast %68 : vector<8x8xf32> to vector<1x8x8xf32>
    %70 = vector.broadcast %69 : vector<1x8x8xf32> to vector<8x8x8xf32>
    %71 = arith.addf %67, %70 : vector<8x8x8xf32>
    %cst_19 = arith.constant dense<0xFF800000> : vector<8x8xf32>
    %72 = vector.multi_reduction <maximumf>, %71, %cst_19 [2] : vector<8x8x8xf32> to vector<8x8xf32>
    %73 = vector.shape_cast %72 : vector<8x8xf32> to vector<8x8x1xf32>
    %74 = vector.broadcast %73 : vector<8x8x1xf32> to vector<8x8x8xf32>
    %75 = arith.subf %71, %74 : vector<8x8x8xf32>
    %76 = math.exp %75 : vector<8x8x8xf32>
    %cst_20 = arith.constant dense<0.000000e+00> : vector<8x8xf32>
    %77 = vector.multi_reduction <add>, %76, %cst_20 [2] : vector<8x8x8xf32> to vector<8x8xf32>
    %78 = vector.shape_cast %77 : vector<8x8xf32> to vector<8x8x1xf32>
    %79 = tpu.reciprocal %78 {approx = true} : vector<8x8x1xf32> -> vector<8x8x1xf32>
    %80 = vector.broadcast %79 : vector<8x8x1xf32> to vector<8x8x8xf32>
    %81 = arith.mulf %76, %80 : vector<8x8x8xf32>
    %82 = arith.truncf %81 : vector<8x8x8xf32> to vector<8x8x8xbf16>
    "tpu.trace_start"() <{level = 10 : i32, message = "gqk,gkc->gqc"}> : () -> ()
    %cst_21 = arith.constant dense<0.000000e+00> : vector<8x8x32xf32>
    %83 = tpu.matmul %82, %64, %cst_21 {dimension_numbers = #tpu.dot_dimension_numbers<[2], [1], [1], [2], [0, 0, 0, 1, 1, 2], [0], [0]>} : vector<8x8x8xbf16>, vector<8x8x32xbf16>, vector<8x8x32xf32> -> vector<8x8x32xf32>
    "tpu.trace_stop"() : () -> ()
    %84 = vector.shape_cast %83 : vector<8x8x32xf32> to vector<4x16x32xf32>
    %85 = vector.extract_strided_slice %84 {offsets = [0, 0, 0], sizes = [1, 16, 32], strides = [1, 1, 1]} : vector<4x16x32xf32> to vector<1x16x32xf32>
    %86 = vector.shape_cast %85 : vector<1x16x32xf32> to vector<16x32xf32>
    %87 = vector.extract_strided_slice %84 {offsets = [1, 0, 0], sizes = [1, 16, 32], strides = [1, 1, 1]} : vector<4x16x32xf32> to vector<1x16x32xf32>
    %88 = vector.shape_cast %87 : vector<1x16x32xf32> to vector<16x32xf32>
    %89 = vector.extract_strided_slice %84 {offsets = [2, 0, 0], sizes = [1, 16, 32], strides = [1, 1, 1]} : vector<4x16x32xf32> to vector<1x16x32xf32>
    %90 = vector.shape_cast %89 : vector<1x16x32xf32> to vector<16x32xf32>
    %91 = vector.extract_strided_slice %84 {offsets = [3, 0, 0], sizes = [1, 16, 32], strides = [1, 1, 1]} : vector<4x16x32xf32> to vector<1x16x32xf32>
    %92 = vector.shape_cast %91 : vector<1x16x32xf32> to vector<16x32xf32>
    %93 = tpu.concatenate %86, %88, %90, %92 in 1 : vector<16x32xf32>, vector<16x32xf32>, vector<16x32xf32>, vector<16x32xf32> -> vector<16x128xf32>
    %94 = arith.truncf %93 : vector<16x128xf32> to vector<16x128xbf16>
    %c0_22 = arith.constant 0 : index
    %c0_23 = arith.constant 0 : index
    %95 = vector.load %arg5[%c0_22, %c0_23] : memref<128x128xbf16, #tpu.memory_space<vmem>>, vector<128x128xbf16>
    %cst_24 = arith.constant dense<0.000000e+00> : vector<16x128xf32>
    %96 = tpu.matmul %94, %95, %cst_24 {dimension_numbers = #tpu.dot_dimension_numbers<[1], [0], [0], [1], [0, 0, 1, 1], [], []>} : vector<16x128xbf16>, vector<128x128xbf16>, vector<16x128xf32> -> vector<16x128xf32>
    %c0_25 = arith.constant 0 : index
    %c0_26 = arith.constant 0 : index
    %97 = vector.load %arg6[%c0_25, %c0_26] : memref<1x128xf32, #tpu.memory_space<vmem>>, vector<1x128xf32>
    %98 = vector.broadcast %97 : vector<1x128xf32> to vector<16x128xf32>
    %99 = arith.addf %96, %98 : vector<16x128xf32>
    %100 = arith.addf %1, %99 : vector<16x128xf32>
    %c0_27 = arith.constant 0 : index
    %c0_28 = arith.constant 0 : index
    %101 = vector.load %arg13[%c0_27, %c0_28] : memref<1x128xf32, #tpu.memory_space<vmem>>, vector<1x128xf32>
    %c0_29 = arith.constant 0 : index
    %c0_30 = arith.constant 0 : index
    %102 = vector.load %arg14[%c0_29, %c0_30] : memref<1x128xf32, #tpu.memory_space<vmem>>, vector<1x128xf32>
    %cst_31 = arith.constant dense<0.000000e+00> : vector<16xf32>
    %103 = vector.multi_reduction <add>, %100, %cst_31 [1] : vector<16x128xf32> to vector<16xf32>
    %104 = vector.shape_cast %103 : vector<16xf32> to vector<16x1xf32>
    %cst_32 = arith.constant 1.280000e+02 : f32
    %105 = vector.broadcast %cst_32 : f32 to vector<16x1xf32>
    %106 = arith.divf %104, %105 : vector<16x1xf32>
    %107 = vector.broadcast %106 : vector<16x1xf32> to vector<16x128xf32>
    %108 = arith.subf %100, %107 : vector<16x128xf32>
    %109 = arith.mulf %108, %108 : vector<16x128xf32>
    %cst_33 = arith.constant dense<0.000000e+00> : vector<16xf32>
    %110 = vector.multi_reduction <add>, %109, %cst_33 [1] : vector<16x128xf32> to vector<16xf32>
    %111 = vector.shape_cast %110 : vector<16xf32> to vector<16x1xf32>
    %cst_34 = arith.constant 1.280000e+02 : f32
    %112 = vector.broadcast %cst_34 : f32 to vector<16x1xf32>
    %113 = arith.divf %111, %112 : vector<16x1xf32>
    %114 = vector.broadcast %106 : vector<16x1xf32> to vector<16x128xf32>
    %115 = arith.subf %100, %114 : vector<16x128xf32>
    %cst_35 = arith.constant 9.99999997E-7 : f32
    %116 = vector.broadcast %cst_35 : f32 to vector<16x1xf32>
    %117 = arith.addf %113, %116 : vector<16x1xf32>
    %118 = math.rsqrt %117 : vector<16x1xf32>
    %119 = vector.broadcast %118 : vector<16x1xf32> to vector<16x128xf32>
    %120 = arith.mulf %115, %119 : vector<16x128xf32>
    %121 = vector.broadcast %101 : vector<1x128xf32> to vector<16x128xf32>
    %122 = arith.mulf %120, %121 : vector<16x128xf32>
    %123 = vector.broadcast %102 : vector<1x128xf32> to vector<16x128xf32>
    %124 = arith.addf %122, %123 : vector<16x128xf32>
    %125 = arith.truncf %124 : vector<16x128xf32> to vector<16x128xbf16>
    %c0_36 = arith.constant 0 : index
    %c0_37 = arith.constant 0 : index
    %126 = vector.load %arg7[%c0_36, %c0_37] : memref<128x512xbf16, #tpu.memory_space<vmem>>, vector<128x512xbf16>
    %cst_38 = arith.constant dense<0.000000e+00> : vector<16x512xf32>
    %127 = tpu.matmul %125, %126, %cst_38 {dimension_numbers = #tpu.dot_dimension_numbers<[1], [0], [0], [1], [0, 0, 1, 1], [], []>} : vector<16x128xbf16>, vector<128x512xbf16>, vector<16x512xf32> -> vector<16x512xf32>
    %c0_39 = arith.constant 0 : index
    %c0_40 = arith.constant 0 : index
    %128 = vector.load %arg8[%c0_39, %c0_40] : memref<1x512xf32, #tpu.memory_space<vmem>>, vector<1x512xf32>
    %129 = vector.broadcast %128 : vector<1x512xf32> to vector<16x512xf32>
    %130 = arith.addf %127, %129 : vector<16x512xf32>
    %cst_41 = arith.constant 0.000000e+00 : f32
    %131 = vector.broadcast %cst_41 : f32 to vector<16x512xf32>
    %132 = arith.maximumf %130, %131 : vector<16x512xf32>
    %133 = arith.truncf %132 : vector<16x512xf32> to vector<16x512xbf16>
    %c0_42 = arith.constant 0 : index
    %c0_43 = arith.constant 0 : index
    %134 = vector.load %arg9[%c0_42, %c0_43] : memref<512x128xbf16, #tpu.memory_space<vmem>>, vector<512x128xbf16>
    %cst_44 = arith.constant dense<0.000000e+00> : vector<16x128xf32>
    %135 = tpu.matmul %133, %134, %cst_44 {dimension_numbers = #tpu.dot_dimension_numbers<[1], [0], [0], [1], [0, 0, 1, 1], [], []>} : vector<16x512xbf16>, vector<512x128xbf16>, vector<16x128xf32> -> vector<16x128xf32>
    %c0_45 = arith.constant 0 : index
    %c0_46 = arith.constant 0 : index
    %136 = vector.load %arg10[%c0_45, %c0_46] : memref<1x128xf32, #tpu.memory_space<vmem>>, vector<1x128xf32>
    %137 = vector.broadcast %136 : vector<1x128xf32> to vector<16x128xf32>
    %138 = arith.addf %135, %137 : vector<16x128xf32>
    %139 = arith.addf %100, %138 : vector<16x128xf32>
    %140 = vector.shape_cast %139 : vector<16x128xf32> to vector<2x8x128xf32>
    %c0_47 = arith.constant 0 : index
    %c0_48 = arith.constant 0 : index
    %c0_49 = arith.constant 0 : index
    %141 = vector.load %arg15[%c0_47, %c0_48, %c0_49] : memref<2x8x128xf32, #tpu.memory_space<vmem>>, vector<2x8x128xf32>
    tpu.vector_store %arg15[%c0_47, %c0_48, %c0_49], %140 {strides = array<i32>} : memref<2x8x128xf32, #tpu.memory_space<vmem>>, vector<2x8x128xf32>,
    return
  }
  func.func @transform_0(%arg0: i32) -> (i32, i32, i32) {
    %c0_i32 = arith.constant 0 : i32
    %c0_i32_0 = arith.constant 0 : i32
    %c0_i32_1 = arith.constant 0 : i32
    return %arg0, %c0_i32, %c0_i32_0 : i32, i32, i32
  }
  func.func @transform_1(%arg0: i32) -> (i32, i32) {
    %c0_i32 = arith.constant 0 : i32
    %c0_i32_0 = arith.constant 0 : i32
    %c0_i32_1 = arith.constant 0 : i32
    return %c0_i32, %c0_i32_0 : i32, i32
  }
  func.func @transform_2(%arg0: i32) -> (i32, i32) {
    %c0_i32 = arith.constant 0 : i32
    %c0_i32_0 = arith.constant 0 : i32
    %c0_i32_1 = arith.constant 0 : i32
    return %c0_i32, %c0_i32_0 : i32, i32
  }
  func.func @transform_3(%arg0: i32) -> (i32, i32) {
    %c0_i32 = arith.constant 0 : i32
    %c0_i32_0 = arith.constant 0 : i32
    %c0_i32_1 = arith.constant 0 : i32
    return %c0_i32, %c0_i32_0 : i32, i32
  }
  func.func @transform_4(%arg0: i32) -> (i32, i32) {
    %c0_i32 = arith.constant 0 : i32
    %c0_i32_0 = arith.constant 0 : i32
    %c0_i32_1 = arith.constant 0 : i32
    return %c0_i32, %c0_i32_0 : i32, i32
  }
  func.func @transform_5(%arg0: i32) -> (i32, i32) {
    %c0_i32 = arith.constant 0 : i32
    %c0_i32_0 = arith.constant 0 : i32
    %c0_i32_1 = arith.constant 0 : i32
    return %c0_i32, %c0_i32_0 : i32, i32
  }
  func.func @transform_6(%arg0: i32) -> (i32, i32) {
    %c0_i32 = arith.constant 0 : i32
    %c0_i32_0 = arith.constant 0 : i32
    %c0_i32_1 = arith.constant 0 : i32
    return %c0_i32, %c0_i32_0 : i32, i32
  }
  func.func @transform_7(%arg0: i32) -> (i32, i32) {
    %c0_i32 = arith.constant 0 : i32
    %c0_i32_0 = arith.constant 0 : i32
    %c0_i32_1 = arith.constant 0 : i32
    return %c0_i32, %c0_i32_0 : i32, i32
  }
  func.func @transform_8(%arg0: i32) -> (i32, i32) {
    %c0_i32 = arith.constant 0 : i32
    %c0_i32_0 = arith.constant 0 : i32
    %c0_i32_1 = arith.constant 0 : i32
    return %c0_i32, %c0_i32_0 : i32, i32
  }
  func.func @transform_9(%arg0: i32) -> (i32, i32) {
    %c0_i32 = arith.constant 0 : i32
    %c0_i32_0 = arith.constant 0 : i32
    %c0_i32_1 = arith.constant 0 : i32
    return %c0_i32, %c0_i32_0 : i32, i32
  }
  func.func @transform_10(%arg0: i32) -> (i32, i32) {
    %c0_i32 = arith.constant 0 : i32
    %c0_i32_0 = arith.constant 0 : i32
    %c0_i32_1 = arith.constant 0 : i32
    return %c0_i32, %c0_i32_0 : i32, i32
  }
  func.func @transform_11(%arg0: i32) -> (i32, i32) {
    %c0_i32 = arith.constant 0 : i32
    %c0_i32_0 = arith.constant 0 : i32
    %c0_i32_1 = arith.constant 0 : i32
    return %c0_i32, %c0_i32_0 : i32, i32
  }
  func.func @transform_12(%arg0: i32) -> (i32, i32) {
    %c0_i32 = arith.constant 0 : i32
    %c0_i32_0 = arith.constant 0 : i32
    %c0_i32_1 = arith.constant 0 : i32
    return %c0_i32, %c0_i32_0 : i32, i32
  }
  func.func @transform_13(%arg0: i32) -> (i32, i32) {
    %c0_i32 = arith.constant 0 : i32
    %c0_i32_0 = arith.constant 0 : i32
    %c0_i32_1 = arith.constant 0 : i32
    return %c0_i32, %c0_i32_0 : i32, i32
  }
  func.func @transform_14(%arg0: i32) -> (i32, i32, i32) {
    %c0_i32 = arith.constant 0 : i32
    %c0_i32_0 = arith.constant 0 : i32
    %c0_i32_1 = arith.constant 0 : i32
    return %arg0, %c0_i32, %c0_i32_0 : i32, i32, i32
  }
}

</mosaic_0001>

<llo_original>
// kernel: tpu_custom_call.1
$region0: #{tpu_custom_call.1}
  #allocation0 [shape = 'u32[]', space=smem, size = 0x4, offset = 0x4, fixed_abs, tag = 'smem constant byte address 0x4 - core index']
  #allocation1 [shape = 'u32[72,128]{1,0:T(1,128)}', space=vmem, size = 0x9000, scoped, tag = 'internal scratch']
  %s0 = inlined_call_operand.hbm [shape: f32[4,8,128], index: 0, kind: input, shape index: {}]
  %s1 = inlined_call_operand.hbm [shape: f32[8,8], index: 1, kind: input, shape index: {}]
  %s2 = inlined_call_operand.hbm [shape: bf16[128,384], index: 2, kind: input, shape index: {}]
  %s3 = inlined_call_operand.hbm [shape: f32[1,384], index: 3, kind: input, shape index: {}]
  %s4 = inlined_call_operand.hbm [shape: bf16[128,128], index: 4, kind: input, shape index: {}]
  %s5 = inlined_call_operand.vmem [shape: f32[1,128], index: 5, kind: input, shape index: {}]
  %s6 = inlined_call_operand.hbm [shape: bf16[128,512], index: 6, kind: input, shape index: {}]
  %s7 = inlined_call_operand.vmem [shape: f32[1,512], index: 7, kind: input, shape index: {}]
  %s8 = inlined_call_operand.hbm [shape: bf16[512,128], index: 8, kind: input, shape index: {}]
  %s9 = inlined_call_operand.vmem [shape: f32[1,128], index: 9, kind: input, shape index: {}]
  %s10 = inlined_call_operand.vmem [shape: f32[1,128], index: 10, kind: input, shape index: {}]
  %s11 = inlined_call_operand.vmem [shape: f32[1,128], index: 11, kind: input, shape index: {}]
  %s12 = inlined_call_operand.vmem [shape: f32[1,128], index: 12, kind: input, shape index: {}]
  %s13 = inlined_call_operand.vmem [shape: f32[1,128], index: 13, kind: input, shape index: {}]
  %s14 = inlined_call_operand.hbm [shape: f32[4,8,128], index: 14, kind: output, shape index: {}]
  %s15 = sld [smem:[#allocation0]]
  $region117: #{tpu_custom_call.1} parent=0
    _
  %s17 = ssub.s32 1, %s15
  %s18 = scalar_select 0, %s17, %s15
  $region1: #{tpu_custom_call.1} parent=0
    #allocation2 [shape = 'u8[16384]{0}', space=vmem, size = 0x4000, scoped, tag = 'input window, operand 0']
    #allocation3 [shape = 's32[2]{0}', space=sflag, size = 0x8, scoped, tag = 'scoped memory for tpu_custom_call.1']
    #allocation4 [shape = 's32[2]{0}', space=sflag, size = 0x8, scoped, tag = 'scoped memory for tpu_custom_call.1']
    #allocation5 [shape = 'u8[4096]{0}', space=vmem, size = 0x1000, scoped, tag = 'input window, operand 1, single buffered']
    #allocation6 [shape = 's32[1]{0}', space=sflag, size = 0x4, scoped, tag = 'scoped memory for tpu_custom_call.1']
    #allocation7 [shape = 'u8[98304]{0}', space=vmem, size = 0x18000, scoped, tag = 'input window, operand 2, single buffered']
    #allocation8 [shape = 'u8[1536]{0}', space=vmem, size = 0x800, scoped, tag = 'input window, operand 3, single buffered']
    #allocation9 [shape = 's32[1]{0}', space=sflag, size = 0x4, scoped, tag = 'scoped memory for tpu_custom_call.1']
    #allocation10 [shape = 'u8[32768]{0}', space=vmem, size = 0x8000, scoped, tag = 'input window, operand 4, single buffered']
    #allocation11 [shape = 'u8[131072]{0}', space=vmem, size = 0x20000, scoped, tag = 'input window, operand 6, single buffered']
    #allocation12 [shape = 's32[1]{0}', space=sflag, size = 0x4, scoped, tag = 'scoped memory for tpu_custom_call.1']
    #allocation13 [shape = 'u8[131072]{0}', space=vmem, size = 0x20000, scoped, tag = 'input window, operand 8, single buffered']
    #allocation14 [shape = 'u8[16384]{0}', space=vmem, size = 0x4000, scoped, tag = 'output window, operand 0']
    %19 = vsyncpa [#allocation3], 0
    %s20 = scalar_lea.sflag [#allocation3], 1
    %21 = vsyncpa %s20, 0
    %22 = vsyncpa [#allocation6], 0
    %23 = vsyncpa [#allocation9], 0
    %24 = vsyncpa [#allocation12], 0
    %25 = vsyncpa [#allocation4], 0
    %s26 = scalar_lea.sflag [#allocation4], 1
    %27 = vsyncpa %s26, 0
    loop: start=0, step=1, limit=4
    $region2: #{tpu_custom_call.1} parent=1 // loop_pre_header
      _
    $region3: #{tpu_custom_call.1} parent=1 // loop_header
      %s29 = sphi 0, %s33
      %p30 = scmp.ge.s32.totalorder %s29, 4
      %s39 = sphi 0, %s41
      %s42 = sphi 0, %s39
      %s43 = sphi 0, %s42
      %s59 = sphi 0, %s43
      %s63 = sphi 0, %s63
      %s65 = sphi 0, %s63
      %s66 = sphi 0, %s65
      %s80 = sphi 0, %s66
      %s84 = sphi 0, %s84
      %s86 = sphi 0, %s84
      %s87 = sphi 0, %s86
      %s101 = sphi 0, %s87
      %s105 = sphi 0, %s105
      %s107 = sphi 0, %s105
      %s108 = sphi 0, %s107
      %s122 = sphi 0, %s108
      %s126 = sphi 0, %s126
      %s128 = sphi 0, %s126
      %s129 = sphi 0, %s128
      %s143 = sphi 0, %s129
      %s147 = sphi 0, %s147
      %s149 = sphi 0, %s147
      %s150 = sphi 0, %s149
      %s164 = sphi 0, %s150
      %s168 = sphi 0, %s168
      %s170 = sphi 0, %s168
      %s171 = sphi 0, %s170
      %s185 = sphi 0, %s171
      %s189 = sphi 0, %s189
      %s191 = sphi 0, %s189
      %s192 = sphi 0, %s191
      %s206 = sphi 0, %s192
      %s210 = sphi 0, %s210
      %s212 = sphi 0, %s210
      %s213 = sphi 0, %s212
      %s227 = sphi 0, %s213
      %s231 = sphi 0, %s231
      %s233 = sphi 0, %s231
      %s234 = sphi 0, %s233
      %s248 = sphi 0, %s234
      %s252 = sphi 0, %s252
      %s254 = sphi 0, %s252
      %s255 = sphi 0, %s254
      %s269 = sphi 0, %s255
      %s273 = sphi 0, %s273
      %s275 = sphi 0, %s273
      %s276 = sphi 0, %s275
      %s290 = sphi 0, %s276
      %s294 = sphi 0, %s294
      %s296 = sphi 0, %s294
      %s297 = sphi 0, %s296
      %s311 = sphi 0, %s297
      %s315 = sphi 0, %s315
      %s317 = sphi 0, %s315
      %s318 = sphi 0, %s317
      %s332 = sphi 0, %s318
      %s338 = sphi 0, %s340
      %s341 = sphi 0, %s338
      %s342 = sphi 0, %s341
      %s358 = sphi 0, %s342
    $region4: #{tpu_custom_call.1} parent=1 // loop_header_branch
      %32 = sbr.rel (%p30) target = $region8
    $region5: #{tpu_custom_call.1} parent=1 // loop_body
      %s34 = ssub.s32 %s29, 1
      %s35 = ssub.s32 %s29, 2
      %s36 = sadd.s32 %s29, 1
      %s37 = ssub.s32 %s29, %s36
      %p38 = scmp.eq.s32.totalorder %s37, 0
      %s40 = sadd.s32 %s39, 1
      %s41 = scalar_select %p38, %s39, %s40
      %p44 = pneg %p38
      %p45 = scmp.eq.s32.totalorder %s29, 1
      %p46 = por %p44, %p45
      %p47 = scmp.ne.s32.totalorder %s39, %s42
      %p48 = scmp.eq.s32.totalorder %s29, 0
      %p49 = por %p47, %p48
      %p50 = scmp.ne.s32.totalorder %s39, %s42
      %p51 = scmp.eq.s32.totalorder %s34, 1
      %p52 = por %p50, %p51
      %p53 = scmp.ne.s32.totalorder %s42, %s43
      %p54 = scmp.eq.s32.totalorder %s34, 0
      %p55 = por %p53, %p54
      %p56 = scmp.ne.s32.totalorder %s42, %s43
      %p57 = scmp.eq.s32.totalorder %s35, 1
      %p58 = por %p56, %p57
      %p60 = scmp.ne.s32.totalorder %s43, %s59
      %p61 = scmp.eq.s32.totalorder %s35, 0
      %p62 = por %p60, %p61
      %s64 = sadd.s32 %s63, 1
      %p67 = scmp.eq.s32.totalorder %s29, 1
      %p68 = scmp.ne.s32.totalorder %s63, %s65
      %p69 = scmp.eq.s32.totalorder %s29, 0
      %p70 = por %p68, %p69
      %p71 = scmp.ne.s32.totalorder %s63, %s65
      %p72 = scmp.eq.s32.totalorder %s34, 1
      %p73 = por %p71, %p72
      %p74 = scmp.ne.s32.totalorder %s65, %s66
      %p75 = scmp.eq.s32.totalorder %s34, 0
      %p76 = por %p74, %p75
      %p77 = scmp.ne.s32.totalorder %s65, %s66
      %p78 = scmp.eq.s32.totalorder %s35, 1
      %p79 = por %p77, %p78
      %p81 = scmp.ne.s32.totalorder %s66, %s80
      %p82 = scmp.eq.s32.totalorder %s35, 0
      %p83 = por %p81, %p82
      %s85 = sadd.s32 %s84, 1
      %p88 = scmp.eq.s32.totalorder %s29, 1
      %p89 = scmp.ne.s32.totalorder %s84, %s86
      %p90 = scmp.eq.s32.totalorder %s29, 0
      %p91 = por %p89, %p90
      %p92 = scmp.ne.s32.totalorder %s84, %s86
      %p93 = scmp.eq.s32.totalorder %s34, 1
      %p94 = por %p92, %p93
      %p95 = scmp.ne.s32.totalorder %s86, %s87
      %p96 = scmp.eq.s32.totalorder %s34, 0
      %p97 = por %p95, %p96
      %p98 = scmp.ne.s32.totalorder %s86, %s87
      %p99 = scmp.eq.s32.totalorder %s35, 1
      %p100 = por %p98, %p99
      %p102 = scmp.ne.s32.totalorder %s87, %s101
      %p103 = scmp.eq.s32.totalorder %s35, 0
      %p104 = por %p102, %p103
      %s106 = sadd.s32 %s105, 1
      %p109 = scmp.eq.s32.totalorder %s29, 1
      %p110 = scmp.ne.s32.totalorder %s105, %s107
      %p111 = scmp.eq.s32.totalorder %s29, 0
      %p112 = por %p110, %p111
      %p113 = scmp.ne.s32.totalorder %s105, %s107
      %p114 = scmp.eq.s32.totalorder %s34, 1
      %p115 = por %p113, %p114
      %p116 = scmp.ne.s32.totalorder %s107, %s108
      %p117 = scmp.eq.s32.totalorder %s34, 0
      %p118 = por %p116, %p117
      %p119 = scmp.ne.s32.totalorder %s107, %s108
      %p120 = scmp.eq.s32.totalorder %s35, 1
      %p121 = por %p119, %p120
      %p123 = scmp.ne.s32.totalorder %s108, %s122
      %p124 = scmp.eq.s32.totalorder %s35, 0
      %p125 = por %p123, %p124
      %s127 = sadd.s32 %s126, 1
      %p130 = scmp.eq.s32.totalorder %s29, 1
      %p131 = scmp.ne.s32.totalorder %s126, %s128
      %p132 = scmp.eq.s32.totalorder %s29, 0
      %p133 = por %p131, %p132
      %p134 = scmp.ne.s32.totalorder %s126, %s128
      %p135 = scmp.eq.s32.totalorder %s34, 1
      %p136 = por %p134, %p135
      %p137 = scmp.ne.s32.totalorder %s128, %s129
      %p138 = scmp.eq.s32.totalorder %s34, 0
      %p139 = por %p137, %p138
      %p140 = scmp.ne.s32.totalorder %s128, %s129
      %p141 = scmp.eq.s32.totalorder %s35, 1
      %p142 = por %p140, %p141
      %p144 = scmp.ne.s32.totalorder %s129, %s143
      %p145 = scmp.eq.s32.totalorder %s35, 0
      %p146 = por %p144, %p145
      %s148 = sadd.s32 %s147, 1
      %p151 = scmp.eq.s32.totalorder %s29, 1
      %p152 = scmp.ne.s32.totalorder %s147, %s149
      %p153 = scmp.eq.s32.totalorder %s29, 0
      %p154 = por %p152, %p153
      %p155 = scmp.ne.s32.totalorder %s147, %s149
      %p156 = scmp.eq.s32.totalorder %s34, 1
      %p157 = por %p155, %p156
      %p158 = scmp.ne.s32.totalorder %s149, %s150
      %p159 = scmp.eq.s32.totalorder %s34, 0
      %p160 = por %p158, %p159
      %p161 = scmp.ne.s32.totalorder %s149, %s150
      %p162 = scmp.eq.s32.totalorder %s35, 1
      %p163 = por %p161, %p162
      %p165 = scmp.ne.s32.totalorder %s150, %s164
      %p166 = scmp.eq.s32.totalorder %s35, 0
      %p167 = por %p165, %p166
      %s169 = sadd.s32 %s168, 1
      %p172 = scmp.eq.s32.totalorder %s29, 1
      %p173 = scmp.ne.s32.totalorder %s168, %s170
      %p174 = scmp.eq.s32.totalorder %s29, 0
      %p175 = por %p173, %p174
      %p176 = scmp.ne.s32.totalorder %s168, %s170
      %p177 = scmp.eq.s32.totalorder %s34, 1
      %p178 = por %p176, %p177
      %p179 = scmp.ne.s32.totalorder %s170, %s171
      %p180 = scmp.eq.s32.totalorder %s34, 0
      %p181 = por %p179, %p180
      %p182 = scmp.ne.s32.totalorder %s170, %s171
      %p183 = scmp.eq.s32.totalorder %s35, 1
      %p184 = por %p182, %p183
      %p186 = scmp.ne.s32.totalorder %s171, %s185
      %p187 = scmp.eq.s32.totalorder %s35, 0
      %p188 = por %p186, %p187
      %s190 = sadd.s32 %s189, 1
      %p193 = scmp.eq.s32.totalorder %s29, 1
      %p194 = scmp.ne.s32.totalorder %s189, %s191
      %p195 = scmp.eq.s32.totalorder %s29, 0
      %p196 = por %p194, %p195
      %p197 = scmp.ne.s32.totalorder %s189, %s191
      %p198 = scmp.eq.s32.totalorder %s34, 1
      %p199 = por %p197, %p198
      %p200 = scmp.ne.s32.totalorder %s191, %s192
      %p201 = scmp.eq.s32.totalorder %s34, 0
      %p202 = por %p200, %p201
      %p203 = scmp.ne.s32.totalorder %s191, %s192
      %p204 = scmp.eq.s32.totalorder %s35, 1
      %p205 = por %p203, %p204
      %p207 = scmp.ne.s32.totalorder %s192, %s206
      %p208 = scmp.eq.s32.totalorder %s35, 0
      %p209 = por %p207, %p208
      %s211 = sadd.s32 %s210, 1
      %p214 = scmp.eq.s32.totalorder %s29, 1
      %p215 = scmp.ne.s32.totalorder %s210, %s212
      %p216 = scmp.eq.s32.totalorder %s29, 0
      %p217 = por %p215, %p216
      %p218 = scmp.ne.s32.totalorder %s210, %s212
      %p219 = scmp.eq.s32.totalorder %s34, 1
      %p220 = por %p218, %p219
      %p221 = scmp.ne.s32.totalorder %s212, %s213
      %p222 = scmp.eq.s32.totalorder %s34, 0
      %p223 = por %p221, %p222
      %p224 = scmp.ne.s32.totalorder %s212, %s213
      %p225 = scmp.eq.s32.totalorder %s35, 1
      %p226 = por %p224, %p225
      %p228 = scmp.ne.s32.totalorder %s213, %s227
      %p229 = scmp.eq.s32.totalorder %s35, 0
      %p230 = por %p228, %p229
      %s232 = sadd.s32 %s231, 1
      %p235 = scmp.eq.s32.totalorder %s29, 1
      %p236 = scmp.ne.s32.totalorder %s231, %s233
      %p237 = scmp.eq.s32.totalorder %s29, 0
      %p238 = por %p236, %p237
      %p239 = scmp.ne.s32.totalorder %s231, %s233
      %p240 = scmp.eq.s32.totalorder %s34, 1
      %p241 = por %p239, %p240
      %p242 = scmp.ne.s32.totalorder %s233, %s234
      %p243 = scmp.eq.s32.totalorder %s34, 0
      %p244 = por %p242, %p243
      %p245 = scmp.ne.s32.totalorder %s233, %s234
      %p246 = scmp.eq.s32.totalorder %s35, 1
      %p247 = por %p245, %p246
      %p249 = scmp.ne.s32.totalorder %s234, %s248
      %p250 = scmp.eq.s32.totalorder %s35, 0
      %p251 = por %p249, %p250
      %s253 = sadd.s32 %s252, 1
      %p256 = scmp.eq.s32.totalorder %s29, 1
      %p257 = scmp.ne.s32.totalorder %s252, %s254
      %p258 = scmp.eq.s32.totalorder %s29, 0
      %p259 = por %p257, %p258
      %p260 = scmp.ne.s32.totalorder %s252, %s254
      %p261 = scmp.eq.s32.totalorder %s34, 1
      %p262 = por %p260, %p261
      %p263 = scmp.ne.s32.totalorder %s254, %s255
      %p264 = scmp.eq.s32.totalorder %s34, 0
      %p265 = por %p263, %p264
      %p266 = scmp.ne.s32.totalorder %s254, %s255
      %p267 = scmp.eq.s32.totalorder %s35, 1
      %p268 = por %p266, %p267
      %p270 = scmp.ne.s32.totalorder %s255, %s269
      %p271 = scmp.eq.s32.totalorder %s35, 0
      %p272 = por %p270, %p271
      %s274 = sadd.s32 %s273, 1
      %p277 = scmp.eq.s32.totalorder %s29, 1
      %p278 = scmp.ne.s32.totalorder %s273, %s275
      %p279 = scmp.eq.s32.totalorder %s29, 0
      %p280 = por %p278, %p279
      %p281 = scmp.ne.s32.totalorder %s273, %s275
      %p282 = scmp.eq.s32.totalorder %s34, 1
      %p283 = por %p281, %p282
      %p284 = scmp.ne.s32.totalorder %s275, %s276
      %p285 = scmp.eq.s32.totalorder %s34, 0
      %p286 = por %p284, %p285
      %p287 = scmp.ne.s32.totalorder %s275, %s276
      %p288 = scmp.eq.s32.totalorder %s35, 1
      %p289 = por %p287, %p288
      %p291 = scmp.ne.s32.totalorder %s276, %s290
      %p292 = scmp.eq.s32.totalorder %s35, 0
      %p293 = por %p291, %p292
      %s295 = sadd.s32 %s294, 1
      %p298 = scmp.eq.s32.totalorder %s29, 1
      %p299 = scmp.ne.s32.totalorder %s294, %s296
      %p300 = scmp.eq.s32.totalorder %s29, 0
      %p301 = por %p299, %p300
      %p302 = scmp.ne.s32.totalorder %s294, %s296
      %p303 = scmp.eq.s32.totalorder %s34, 1
      %p304 = por %p302, %p303
      %p305 = scmp.ne.s32.totalorder %s296, %s297
      %p306 = scmp.eq.s32.totalorder %s34, 0
      %p307 = por %p305, %p306
      %p308 = scmp.ne.s32.totalorder %s296, %s297
      %p309 = scmp.eq.s32.totalorder %s35, 1
      %p310 = por %p308, %p309
      %p312 = scmp.ne.s32.totalorder %s297, %s311
      %p313 = scmp.eq.s32.totalorder %s35, 0
      %p314 = por %p312, %p313
      %s316 = sadd.s32 %s315, 1
      %p319 = scmp.eq.s32.totalorder %s29, 1
      %p320 = scmp.ne.s32.totalorder %s315, %s317
      %p321 = scmp.eq.s32.totalorder %s29, 0
      %p322 = por %p320, %p321
      %p323 = scmp.ne.s32.totalorder %s315, %s317
      %p324 = scmp.eq.s32.totalorder %s34, 1
      %p325 = por %p323, %p324
      %p326 = scmp.ne.s32.totalorder %s317, %s318
      %p327 = scmp.eq.s32.totalorder %s34, 0
      %p328 = por %p326, %p327
      %p329 = scmp.ne.s32.totalorder %s317, %s318
      %p330 = scmp.eq.s32.totalorder %s35, 1
      %p331 = por %p329, %p330
      %p333 = scmp.ne.s32.totalorder %s318, %s332
      %p334 = scmp.eq.s32.totalorder %s35, 0
      %p335 = por %p333, %p334
      %s336 = ssub.s32 %s29, %s36
      %p337 = scmp.eq.s32.totalorder %s336, 0
      %s339 = sadd.s32 %s338, 1
      %s340 = scalar_select %p337, %s338, %s339
      %p343 = pneg %p337
      %p344 = scmp.eq.s32.totalorder %s29, 1
      %p345 = por %p343, %p344
      %p346 = scmp.ne.s32.totalorder %s338, %s341
      %p347 = scmp.eq.s32.totalorder %s29, 0
      %p348 = por %p346, %p347
      %p349 = scmp.ne.s32.totalorder %s338, %s341
      %p350 = scmp.eq.s32.totalorder %s34, 1
      %p351 = por %p349, %p350
      %p352 = scmp.ne.s32.totalorder %s341, %s342
      %p353 = scmp.eq.s32.totalorder %s34, 0
      %p354 = por %p352, %p353
      %p355 = scmp.ne.s32.totalorder %s341, %s342
      %p356 = scmp.eq.s32.totalorder %s35, 1
      %p357 = por %p355, %p356
      %p359 = scmp.ne.s32.totalorder %s342, %s358
      %p360 = scmp.eq.s32.totalorder %s35, 0
      %p361 = por %p359, %p360
      %p362 = scmp.le.s32.totalorder 1, %s29
      %p363 = scmp.lt.s32.totalorder %s29, 3
      %p364 = pnand %p362, %p363
      %p365 = pneg %p364
      // Predicated region
      $region9: #{tpu_custom_call.1} parent=5 // pred_check
        _
      $region10: #{tpu_custom_call.1} parent=5 // pred_check_branch
        %367 = sbr.rel (%p364) target = $region12
      $region11: #{tpu_custom_call.1} parent=5 // pred_region
        %s368 = ssub.s32 %s29, 1
        // Predicated region
        $region13: #{tpu_custom_call.1} parent=11 // pred_check
          %p369 = pneg %p76
        $region14: #{tpu_custom_call.1} parent=11 // pred_check_branch
          %371 = sbr.rel (%p369) target = $region16
        $region15: #{tpu_custom_call.1} parent=11 // pred_region
          %373 = vsyncadd [#allocation6], 0
          %s375 = sshll.u32 %s1, 4
          %s376 = int_to_ptr.hbm [resolvable:$true] %s375
          %s377 = sshll.u32 [#allocation5], 4
          %s378 = int_to_ptr.vmem [resolvable:$true] %s377
          %380 = dma.hbm_to_vmem [thread:$0]  %s376, 128, %s378, [#allocation6]
        $region16: #{tpu_custom_call.1} parent=11 // pred_fallthru
          _
        // Predicated region
        $region17: #{tpu_custom_call.1} parent=11 // pred_check
          %p381 = pneg %p97
        $region18: #{tpu_custom_call.1} parent=11 // pred_check_branch
          %383 = sbr.rel (%p381) target = $region20
        $region19: #{tpu_custom_call.1} parent=11 // pred_region
          %385 = vsyncadd [#allocation6], 0
          %s386 = sshll.u32 %s2, 4
          %s387 = int_to_ptr.hbm [resolvable:$true] %s386
          %s388 = sshll.u32 [#allocation7], 4
          %s389 = int_to_ptr.vmem [resolvable:$true] %s388
          %394 = dma.hbm_to_vmem [thread:$0]  %s387, 3072, %s389, [#allocation6], 192, 192, 12
        $region20: #{tpu_custom_call.1} parent=11 // pred_fallthru
          _
        // Predicated region
        $region21: #{tpu_custom_call.1} parent=11 // pred_check
          %p395 = pneg %p118
        $region22: #{tpu_custom_call.1} parent=11 // pred_check_branch
          %397 = sbr.rel (%p395) target = $region24
        $region23: #{tpu_custom_call.1} parent=11 // pred_region
          %399 = vsyncadd [#allocation9], 0
          %s401 = sshll.u32 %s3, 4
          %s402 = int_to_ptr.hbm [resolvable:$true] %s401
          %s403 = sshll.u32 [#allocation8], 4
          %s404 = int_to_ptr.vmem [resolvable:$true] %s403
          %406 = dma.hbm_to_vmem [thread:$0]  %s402, 48, %s404, [#allocation9]
        $region24: #{tpu_custom_call.1} parent=11 // pred_fallthru
          _
        // Predicated region
        $region25: #{tpu_custom_call.1} parent=11 // pred_check
          %p407 = pneg %p139
        $region26: #{tpu_custom_call.1} parent=11 // pred_check_branch
          %409 = sbr.rel (%p407) target = $region28
        $region27: #{tpu_custom_call.1} parent=11 // pred_region
          %411 = vsyncadd [#allocation9], 0
          %s412 = sshll.u32 %s4, 4
          %s413 = int_to_ptr.hbm [resolvable:$true] %s412
          %s414 = sshll.u32 [#allocation10], 4
          %s415 = int_to_ptr.vmem [resolvable:$true] %s414
          %420 = dma.hbm_to_vmem [thread:$0]  %s413, 1024, %s415, [#allocation9], 64, 64, 4
        $region28: #{tpu_custom_call.1} parent=11 // pred_fallthru
          _
        // Predicated region
        $region29: #{tpu_custom_call.1} parent=11 // pred_check
          %p421 = pneg %p160
        $region30: #{tpu_custom_call.1} parent=11 // pred_check_branch
          %423 = sbr.rel (%p421) target = $region32
        $region31: #{tpu_custom_call.1} parent=11 // pred_region
          _
        $region32: #{tpu_custom_call.1} parent=11 // pred_fallthru
          _
        // Predicated region
        $region33: #{tpu_custom_call.1} parent=11 // pred_check
          %p424 = pneg %p181
        $region34: #{tpu_custom_call.1} parent=11 // pred_check_branch
          %426 = sbr.rel (%p424) target = $region36
        $region35: #{tpu_custom_call.1} parent=11 // pred_region
          %428 = vsyncadd [#allocation12], 0
          %s429 = sshll.u32 %s6, 4
          %s430 = int_to_ptr.hbm [resolvable:$true] %s429
          %s431 = sshll.u32 [#allocation11], 4
          %s432 = int_to_ptr.vmem [resolvable:$true] %s431
          %437 = dma.hbm_to_vmem [thread:$0]  %s430, 4096, %s432, [#allocation12], 256, 256, 16
        $region36: #{tpu_custom_call.1} parent=11 // pred_fallthru
          _
        // Predicated region
        $region37: #{tpu_custom_call.1} parent=11 // pred_check
          %p438 = pneg %p202
        $region38: #{tpu_custom_call.1} parent=11 // pred_check_branch
          %440 = sbr.rel (%p438) target = $region40
        $region39: #{tpu_custom_call.1} parent=11 // pred_region
          _
        $region40: #{tpu_custom_call.1} parent=11 // pred_fallthru
          _
        // Predicated region
        $region41: #{tpu_custom_call.1} parent=11 // pred_check
          %p441 = pneg %p223
        $region42: #{tpu_custom_call.1} parent=11 // pred_check_branch
          %443 = sbr.rel (%p441) target = $region44
        $region43: #{tpu_custom_call.1} parent=11 // pred_region
          %445 = vsyncadd [#allocation12], 0
          %s446 = sshll.u32 %s8, 4
          %s447 = int_to_ptr.hbm [resolvable:$true] %s446
          %s448 = sshll.u32 [#allocation13], 4
          %s449 = int_to_ptr.vmem [resolvable:$true] %s448
          %454 = dma.hbm_to_vmem [thread:$0]  %s447, 4096, %s449, [#allocation12], 64, 64, 4
        $region44: #{tpu_custom_call.1} parent=11 // pred_fallthru
          _
        // Predicated region
        $region45: #{tpu_custom_call.1} parent=11 // pred_check
          %p455 = pneg %p244
        $region46: #{tpu_custom_call.1} parent=11 // pred_check_branch
          %457 = sbr.rel (%p455) target = $region48
        $region47: #{tpu_custom_call.1} parent=11 // pred_region
          _
        $region48: #{tpu_custom_call.1} parent=11 // pred_fallthru
          _
        // Predicated region
        $region49: #{tpu_custom_call.1} parent=11 // pred_check
          %p458 = pneg %p265
        $region50: #{tpu_custom_call.1} parent=11 // pred_check_branch
          %460 = sbr.rel (%p458) target = $region52
        $region51: #{tpu_custom_call.1} parent=11 // pred_region
          _
        $region52: #{tpu_custom_call.1} parent=11 // pred_fallthru
          _
        // Predicated region
        $region53: #{tpu_custom_call.1} parent=11 // pred_check
          %p461 = pneg %p286
        $region54: #{tpu_custom_call.1} parent=11 // pred_check_branch
          %463 = sbr.rel (%p461) target = $region56
        $region55: #{tpu_custom_call.1} parent=11 // pred_region
          _
        $region56: #{tpu_custom_call.1} parent=11 // pred_fallthru
          _
        // Predicated region
        $region57: #{tpu_custom_call.1} parent=11 // pred_check
          %p464 = pneg %p307
        $region58: #{tpu_custom_call.1} parent=11 // pred_check_branch
          %466 = sbr.rel (%p464) target = $region60
        $region59: #{tpu_custom_call.1} parent=11 // pred_region
          _
        $region60: #{tpu_custom_call.1} parent=11 // pred_fallthru
          _
        // Predicated region
        $region61: #{tpu_custom_call.1} parent=11 // pred_check
          %p467 = pneg %p328
        $region62: #{tpu_custom_call.1} parent=11 // pred_check_branch
          %469 = sbr.rel (%p467) target = $region64
        $region63: #{tpu_custom_call.1} parent=11 // pred_region
          _
        $region64: #{tpu_custom_call.1} parent=11 // pred_fallthru
          _
      $region12: #{tpu_custom_call.1} parent=5 // pred_fallthru
        _
      %p470 = scmp.lt.s32.totalorder %s29, 2
      // Predicated region
      $region65: #{tpu_custom_call.1} parent=5 // pred_check
        %p471 = pneg %p470
      $region66: #{tpu_custom_call.1} parent=5 // pred_check_branch
        %473 = sbr.rel (%p471) target = $region68
      $region67: #{tpu_custom_call.1} parent=5 // pred_region
        // Predicated region
        $region69: #{tpu_custom_call.1} parent=67 // pred_check
          %p474 = pneg %p49
        $region70: #{tpu_custom_call.1} parent=67 // pred_check_branch
          %476 = sbr.rel (%p474) target = $region72
        $region71: #{tpu_custom_call.1} parent=67 // pred_region
          %s477 = sand.u32 %s39, 1
          %s478 = scalar_lea.sflag [#allocation3], %s477
          %s479 = sand.u32 %s39, 1
          %s480 = smul.addr %s479, 16
          %s481 = scalar_lea.vmem [#allocation2], %s480
          %s482 = smul.u32 2, %s29
          %484 = vsyncadd %s478, 0
          %s485 = smul.addr %s482, 8
          %s486 = scalar_lea.hbm %s0, %s485
          %s487 = sshll.u32 %s486, 4
          %s488 = int_to_ptr.hbm [resolvable:$true] %s487
          %s489 = sshll.u32 %s481, 4
          %s490 = int_to_ptr.vmem [resolvable:$true] %s489
          %495 = dma.hbm_to_vmem [thread:$0]  %s488, 256, %s490, %s478, 128, 128, 8
        $region72: #{tpu_custom_call.1} parent=67 // pred_fallthru
          _
      $region68: #{tpu_custom_call.1} parent=5 // pred_fallthru
        _
      %p496 = scmp.le.s32.totalorder 1, %s29
      %p497 = scmp.lt.s32.totalorder %s29, 3
      %p498 = pnand %p496, %p497
      %p499 = pneg %p498
      // Predicated region
      $region73: #{tpu_custom_call.1} parent=5 // pred_check
        _
      $region74: #{tpu_custom_call.1} parent=5 // pred_check_branch
        %501 = sbr.rel (%p498) target = $region76
      $region75: #{tpu_custom_call.1} parent=5 // pred_region
        %s502 = ssub.s32 %s29, 1
        %s503 = sand.u32 %s42, 1
        %s504 = scalar_lea.sflag [#allocation3], %s503
        %s505 = sand.u32 %s42, 1
        %s506 = smul.addr %s505, 16
        %s507 = scalar_lea.vmem [#allocation2], %s506
        // Predicated region
        $region77: #{tpu_custom_call.1} parent=75 // pred_check
          %p508 = pneg %p55
        $region78: #{tpu_custom_call.1} parent=75 // pred_check_branch
          %510 = sbr.rel (%p508) target = $region80
        $region79: #{tpu_custom_call.1} parent=75 // pred_region
          %512 = dma.done %s504, 256
        $region80: #{tpu_custom_call.1} parent=75 // pred_fallthru
          _
        // Predicated region
        $region81: #{tpu_custom_call.1} parent=75 // pred_check
          %p513 = pneg %p76
        $region82: #{tpu_custom_call.1} parent=75 // pred_check_branch
          %515 = sbr.rel (%p513) target = $region84
        $region83: #{tpu_custom_call.1} parent=75 // pred_region
          %517 = dma.done [#allocation6], 128
        $region84: #{tpu_custom_call.1} parent=75 // pred_fallthru
          _
        // Predicated region
        $region85: #{tpu_custom_call.1} parent=75 // pred_check
          %p518 = pneg %p97
        $region86: #{tpu_custom_call.1} parent=75 // pred_check_branch
          %520 = sbr.rel (%p518) target = $region88
        $region87: #{tpu_custom_call.1} parent=75 // pred_region
          %522 = dma.done [#allocation6], 3072
        $region88: #{tpu_custom_call.1} parent=75 // pred_fallthru
          _
        // Predicated region
        $region89: #{tpu_custom_call.1} parent=75 // pred_check
          %p523 = pneg %p118
        $region90: #{tpu_custom_call.1} parent=75 // pred_check_branch
          %525 = sbr.rel (%p523) target = $region92
        $region91: #{tpu_custom_call.1} parent=75 // pred_region
          %527 = dma.done [#allocation9], 48
        $region92: #{tpu_custom_call.1} parent=75 // pred_fallthru
          _
        // Predicated region
        $region93: #{tpu_custom_call.1} parent=75 // pred_check
          %p528 = pneg %p139
        $region94: #{tpu_custom_call.1} parent=75 // pred_check_branch
          %530 = sbr.rel (%p528) target = $region96
        $region95: #{tpu_custom_call.1} parent=75 // pred_region
          %532 = dma.done [#allocation9], 1024
        $region96: #{tpu_custom_call.1} parent=75 // pred_fallthru
          _
        // Predicated region
        $region97: #{tpu_custom_call.1} parent=75 // pred_check
          %p533 = pneg %p181
        $region98: #{tpu_custom_call.1} parent=75 // pred_check_branch
          %535 = sbr.rel (%p533) target = $region100
        $region99: #{tpu_custom_call.1} parent=75 // pred_region
          %537 = dma.done [#allocation12], 4096
        $region100: #{tpu_custom_call.1} parent=75 // pred_fallthru
          _
        // Predicated region
        $region101: #{tpu_custom_call.1} parent=75 // pred_check
          %p538 = pneg %p223
        $region102: #{tpu_custom_call.1} parent=75 // pred_check_branch
          %540 = sbr.rel (%p538) target = $region104
        $region103: #{tpu_custom_call.1} parent=75 // pred_region
          %542 = dma.done [#allocation12], 4096
        $region104: #{tpu_custom_call.1} parent=75 // pred_fallthru
          _
        %s543 = sand.u32 %s42, 1
        %s544 = scalar_lea.sflag [#allocation3], %s543
        %s545 = sand.u32 %s42, 1
        %s546 = smul.addr %s545, 16
        %s547 = scalar_lea.vmem [#allocation2], %s546
        %p548 = pneg %p55
        %p549 = pneg %p52
        %p550 = pneg %p76
        %p551 = pneg %p73
        %p552 = pneg %p97
        %p553 = pneg %p94
        %p554 = pneg %p118
        %p555 = pneg %p115
        %p556 = pneg %p139
        %p557 = pneg %p136
        %p558 = pneg %p160
        %p559 = pneg %p157
        %p560 = pneg %p181
        %p561 = pneg %p178
        %p562 = pneg %p202
        %p563 = pneg %p199
        %p564 = pneg %p223
        %p565 = pneg %p220
        %p566 = pneg %p244
        %p567 = pneg %p241
        %p568 = pneg %p265
        %p569 = pneg %p262
        %p570 = pneg %p286
        %p571 = pneg %p283
        %p572 = pneg %p307
        %p573 = pneg %p304
        %p574 = pneg %p328
        %p575 = pneg %p325
        %p576 = pneg %p354
        %p577 = pneg %p351
        %s578 = sand.u32 %s341, 1
        %s579 = scalar_lea.sflag [#allocation4], %s578
        %s580 = sand.u32 %s341, 1
        %s581 = smul.addr %s580, 16
        %s582 = scalar_lea.vmem [#allocation14], %s581
        %s583 = smul.u32 2, %s34
        %s584 = smul.u32 2, %s34
        %v586 = vld [vmem:[%s507] sm:$0xff]
        %v587 = vld [vmem:[%s507 + $0x8] sm:$0xff]
        %v588 = vld [vmem:[%s10] sm:$0x1]
        %v589 = vld [vmem:[%s11] sm:$0x1]
        %590 = vadd.xlane.f32.xlu0 %v586
        %v591 = vpop.xlane.xlu0 %590
        %592 = vadd.xlane.f32.xlu0 %v587
        %v593 = vpop.xlane.xlu0 %592
        %v594 = vrcp.pop 128.0
        %v595 = vmul.f32 128.0, %v594
        %v596 = vsub.f32 1.0, %v595
        %v597 = vmul.f32 %v594, %v596
        %v598 = vadd.f32 %v594, %v597
        %vm599 = vweird.f32 %v594
        %v600 = vsel %vm599, %v594, %v598
        %v601 = vmul.f32 %v591, %v600
        %v602 = vmul.f32 %v593, %v600
        %v603 = vsub.f32 %v586, %v601
        %v604 = vsub.f32 %v587, %v602
        %v605 = vmul.f32 %v603, %v603
        %v606 = vmul.f32 %v604, %v604
        %607 = vadd.xlane.f32.xlu0 %v605
        %v608 = vpop.xlane.xlu0 %607
        %609 = vadd.xlane.f32.xlu0 %v606
        %v610 = vpop.xlane.xlu0 %609
        %v611 = vmul.f32 %v608, %v600
        %v612 = vmul.f32 %v610, %v600
        %v613 = vadd.f32 %v611, 1e-06
        %v614 = vadd.f32 %v612, 1e-06
        %v615 = vrsqrt.pop %v613
        %v616 = vmul.f32 %v615, %v613
        %v617 = vmul.f32 %v616, %v615
        %v618 = vmul.f32 0.5, %v617
        %v619 = vsub.f32 1.5, %v618
        %v620 = vmul.f32 %v615, %v619
        %vm621 = vweird.f32 %v613
        %vm622 = vweird.f32 %v615
        %vm623 = vmor %vm621, %vm622
        %v624 = vsel %vm623, %v615, %v620
        %v625 = vrsqrt.pop %v614
        %v626 = vmul.f32 %v625, %v614
        %v627 = vmul.f32 %v626, %v625
        %v628 = vmul.f32 0.5, %v627
        %v629 = vsub.f32 1.5, %v628
        %v630 = vmul.f32 %v625, %v629
        %vm631 = vweird.f32 %v614
        %vm632 = vweird.f32 %v625
        %vm633 = vmor %vm631, %vm632
        %v634 = vsel %vm633, %v625, %v630
        %v635 = vmul.f32 %v603, %v624
        %v636 = vmul.f32 %v604, %v634
        %v638 = vperm.slane %v588, 0
        %v640 = vmul.f32 %v635, %v638
        %v641 = vmul.f32 %v636, %v638
        %v643 = vperm.slane %v589, 0
        %v645 = vadd.f32 %v640, %v643
        %v646 = vadd.f32 %v641, %v643
        %v647 = vpack.c.bf16 %v646, %v645
        %v648 = vld [vmem:[#allocation7] sm:$0xff]
        %v649 = vld [vmem:[#allocation7 + $0x8] sm:$0xf]
        %v650 = vld [vmem:[#allocation7 + $0xc] sm:$0xff]
        %v651 = vld [vmem:[#allocation7 + $0x14] sm:$0xf]
        %v652 = vld [vmem:[#allocation7 + $0x18] sm:$0xff]
        %v653 = vld [vmem:[#allocation7 + $0x20] sm:$0xf]
        %v654 = vld [vmem:[#allocation7 + $0x24] sm:$0xff]
        %v655 = vld [vmem:[#allocation7 + $0x2c] sm:$0xf]
        %v656 = vld [vmem:[#allocation7 + $0x30] sm:$0xff]
        %v657 = vld [vmem:[#allocation7 + $0x38] sm:$0xf]
        %v658 = vld [vmem:[#allocation7 + $0x3c] sm:$0xff]
        %v659 = vld [vmem:[#allocation7 + $0x44] sm:$0xf]
        %v660 = vld [vmem:[#allocation7 + $0x48] sm:$0xff]
        %v661 = vld [vmem:[#allocation7 + $0x50] sm:$0xf]
        %v662 = vld [vmem:[#allocation7 + $0x54] sm:$0xff]
        %v663 = vld [vmem:[#allocation7 + $0x5c] sm:$0xf]
        %v664 = vld [vmem:[#allocation7 + $0x60] sm:$0xff]
        %v665 = vld [vmem:[#allocation7 + $0x68] sm:$0xf]
        %v666 = vld [vmem:[#allocation7 + $0x6c] sm:$0xff]
        %v667 = vld [vmem:[#allocation7 + $0x74] sm:$0xf]
        %v668 = vld [vmem:[#allocation7 + $0x78] sm:$0xff]
        %v669 = vld [vmem:[#allocation7 + $0x80] sm:$0xf]
        %v670 = vld [vmem:[#allocation7 + $0x84] sm:$0xff]
        %v671 = vld [vmem:[#allocation7 + $0x8c] sm:$0xf]
        %v672 = vld [vmem:[#allocation7 + $0x90] sm:$0xff]
        %v673 = vld [vmem:[#allocation7 + $0x98] sm:$0xf]
        %v674 = vld [vmem:[#allocation7 + $0x9c] sm:$0xff]
        %v675 = vld [vmem:[#allocation7 + $0xa4] sm:$0xf]
        %v676 = vld [vmem:[#allocation7 + $0xa8] sm:$0xff]
        %v677 = vld [vmem:[#allocation7 + $0xb0] sm:$0xf]
        %v678 = vld [vmem:[#allocation7 + $0xb4] sm:$0xff]
        %v679 = vld [vmem:[#allocation7 + $0xbc] sm:$0xf]
        %v680 = vld [vmem:[#allocation8] sm:$0x7]
        %v682 = vperm.slane %v680, 0
        %v683 = vperm.slane %v680, 1
        %v684 = vperm.slane %v680, 2
        %v720 = vunpack.c.l.b16 %v648
        %v721 = vunpack.c.h.b16 %v648
        %v722 = vunpack.c.l.b16 %v649
        %v723 = vunpack.c.l.b16 %v650
        %v724 = vunpack.c.h.b16 %v650
        %v725 = vunpack.c.l.b16 %v651
        %v726 = vunpack.c.l.b16 %v652
        %v727 = vunpack.c.h.b16 %v652
        %v728 = vunpack.c.l.b16 %v653
        %v729 = vunpack.c.l.b16 %v654
        %v730 = vunpack.c.h.b16 %v654
        %v731 = vunpack.c.l.b16 %v655
        %v732 = vunpack.c.l.b16 %v656
        %v733 = vunpack.c.h.b16 %v656
        %v734 = vunpack.c.l.b16 %v657
        %v735 = vunpack.c.l.b16 %v658
        %v736 = vunpack.c.h.b16 %v658
        %v737 = vunpack.c.l.b16 %v659
        %v738 = vunpack.c.l.b16 %v660
        %v739 = vunpack.c.h.b16 %v660
        %v740 = vunpack.c.l.b16 %v661
        %v741 = vunpack.c.l.b16 %v662
        %v742 = vunpack.c.h.b16 %v662
        %v743 = vunpack.c.l.b16 %v663
        %v744 = vunpack.c.l.b16 %v664
        %v745 = vunpack.c.h.b16 %v664
        %v746 = vunpack.c.l.b16 %v665
        %v747 = vunpack.c.l.b16 %v666
        %v748 = vunpack.c.h.b16 %v666
        %v749 = vunpack.c.l.b16 %v667
        %v750 = vunpack.c.l.b16 %v668
        %v751 = vunpack.c.h.b16 %v668
        %v752 = vunpack.c.l.b16 %v669
        %v753 = vunpack.c.l.b16 %v670
        %v754 = vunpack.c.h.b16 %v670
        %v755 = vunpack.c.l.b16 %v671
        %v756 = vunpack.c.l.b16 %v672
        %v757 = vunpack.c.h.b16 %v672
        %v758 = vunpack.c.l.b16 %v673
        %v759 = vunpack.c.l.b16 %v674
        %v760 = vunpack.c.h.b16 %v674
        %v761 = vunpack.c.l.b16 %v675
        %v762 = vunpack.c.l.b16 %v676
        %v763 = vunpack.c.h.b16 %v676
        %v764 = vunpack.c.l.b16 %v677
        %v765 = vunpack.c.l.b16 %v678
        %v766 = vunpack.c.h.b16 %v678
        %v767 = vunpack.c.l.b16 %v679
        %v768 = vpack.c.b16 %v723, %v720
        %v769 = vpack.c.b16 %v724, %v721
        %v770 = vpack.c.b16 %v725, %v722
        %v771 = vpack.c.b16 %v729, %v726
        %v772 = vpack.c.b16 %v730, %v727
        %v773 = vpack.c.b16 %v731, %v728
        %v774 = vpack.c.b16 %v735, %v732
        %v775 = vpack.c.b16 %v736, %v733
        %v776 = vpack.c.b16 %v737, %v734
        %v777 = vpack.c.b16 %v741, %v738
        %v778 = vpack.c.b16 %v742, %v739
        %v779 = vpack.c.b16 %v743, %v740
        %v780 = vpack.c.b16 %v747, %v744
        %v781 = vpack.c.b16 %v748, %v745
        %v782 = vpack.c.b16 %v749, %v746
        %v783 = vpack.c.b16 %v753, %v750
        %v784 = vpack.c.b16 %v754, %v751
        %v785 = vpack.c.b16 %v755, %v752
        %v786 = vpack.c.b16 %v759, %v756
        %v787 = vpack.c.b16 %v760, %v757
        %v788 = vpack.c.b16 %v761, %v758
        %v789 = vpack.c.b16 %v765, %v762
        %v790 = vpack.c.b16 %v766, %v763
        %v791 = vpack.c.b16 %v767, %v764
        %816 = vmatpush.bf16.msra.mxu0 %v789
        %817 = vmatpush.bf16.msra.mxu0 %v786
        %818 = vmatpush.bf16.msra.mxu0 %v783
        %819 = vmatpush.bf16.msra.mxu0 %v780
        %820 = vmatpush.bf16.msra.mxu0 %v777
        %821 = vmatpush.bf16.msra.mxu0 %v774
        %822 = vmatpush.bf16.msra.mxu0 %v771
        %823 = vmatpush.bf16.msra.mxu0 %v768
        %824 = vmatmul.bf16.gmra.mxu0 %v647
        %v825 = vpop.f32.mrf.mxu0
        %v826 = vadd.f32 %v682, %v825
        %v827 = vpop.f32.mrf.mxu0
        %v828 = vadd.f32 %v682, %v827
        %829 = vdwg.mxu0
        %830 = vmatpush.bf16.msra.mxu0 %v790
        %831 = vmatpush.bf16.msra.mxu0 %v787
        %832 = vmatpush.bf16.msra.mxu0 %v784
        %833 = vmatpush.bf16.msra.mxu0 %v781
        %834 = vmatpush.bf16.msra.mxu0 %v778
        %835 = vmatpush.bf16.msra.mxu0 %v775
        %836 = vmatpush.bf16.msra.mxu0 %v772
        %837 = vmatpush.bf16.msra.mxu0 %v769
        %838 = vmatmul.bf16.gmra.mxu0 %v647
        %v839 = vpop.f32.mrf.mxu0
        %v840 = vadd.f32 %v683, %v839
        %v841 = vpop.f32.mrf.mxu0
        %v842 = vadd.f32 %v683, %v841
        %843 = vdwg.mxu0
        %844 = vmatpush.bf16.msra.mxu0 %v791
        %845 = vmatpush.bf16.msra.mxu0 %v788
        %846 = vmatpush.bf16.msra.mxu0 %v785
        %847 = vmatpush.bf16.msra.mxu0 %v782
        %848 = vmatpush.bf16.msra.mxu0 %v779
        %849 = vmatpush.bf16.msra.mxu0 %v776
        %850 = vmatpush.bf16.msra.mxu0 %v773
        %851 = vmatpush.bf16.msra.mxu0 %v770
        %852 = vmatmul.bf16.gmra.mxu0 %v647
        %v853 = vpop.f32.mrf.mxu0
        %v854 = vadd.f32 %v684, %v853
        %v855 = vpop.f32.mrf.mxu0
        %v856 = vadd.f32 %v684, %v855
        %857 = vdwg.mxu0
        %860 = vrot.lane.b32.xlu0 %v826, 96
        %v861 = vpop.permute.xlu0 %860
        %862 = vrot.lane.b32.xlu0 %v828, 96
        %v863 = vpop.permute.xlu0 %862
        %866 = vrot.lane.b32.xlu0 %v826, 64
        %v867 = vpop.permute.xlu0 %866
        %868 = vrot.lane.b32.xlu0 %v828, 64
        %v869 = vpop.permute.xlu0 %868
        %872 = vrot.lane.b32.xlu0 %v826, 32
        %v873 = vpop.permute.xlu0 %872
        %874 = vrot.lane.b32.xlu0 %v828, 32
        %v875 = vpop.permute.xlu0 %874
        %v878 = vpack.c.bf16 %v826, %v826
        %v879 = vpack.c.bf16 %v828, %v828
        %v880 = vpack.c.bf16 %v861, %v861
        %v881 = vpack.c.bf16 %v863, %v863
        %v882 = vpack.c.bf16 %v867, %v867
        %v883 = vpack.c.bf16 %v869, %v869
        %v884 = vpack.c.bf16 %v873, %v873
        %v885 = vpack.c.bf16 %v875, %v875
        %888 = vrot.lane.b32.xlu0 %v840, 96
        %v889 = vpop.permute.xlu0 %888
        %890 = vrot.lane.b32.xlu0 %v842, 96
        %v891 = vpop.permute.xlu0 %890
        %894 = vrot.lane.b32.xlu0 %v840, 64
        %v895 = vpop.permute.xlu0 %894
        %896 = vrot.lane.b32.xlu0 %v842, 64
        %v897 = vpop.permute.xlu0 %896
        %900 = vrot.lane.b32.xlu0 %v840, 32
        %v901 = vpop.permute.xlu0 %900
        %902 = vrot.lane.b32.xlu0 %v842, 32
        %v903 = vpop.permute.xlu0 %902
        %v906 = vpack.c.bf16 %v840, %v840
        %v907 = vpack.c.bf16 %v842, %v842
        %v908 = vpack.c.bf16 %v889, %v889
        %v909 = vpack.c.bf16 %v891, %v891
        %v910 = vpack.c.bf16 %v895, %v895
        %v911 = vpack.c.bf16 %v897, %v897
        %v912 = vpack.c.bf16 %v901, %v901
        %v913 = vpack.c.bf16 %v903, %v903
        %916 = vrot.lane.b32.xlu0 %v854, 96
        %v917 = vpop.permute.xlu0 %916
        %918 = vrot.lane.b32.xlu0 %v856, 96
        %v919 = vpop.permute.xlu0 %918
        %922 = vrot.lane.b32.xlu0 %v854, 64
        %v923 = vpop.permute.xlu0 %922
        %924 = vrot.lane.b32.xlu0 %v856, 64
        %v925 = vpop.permute.xlu0 %924
        %928 = vrot.lane.b32.xlu0 %v854, 32
        %v929 = vpop.permute.xlu0 %928
        %930 = vrot.lane.b32.xlu0 %v856, 32
        %v931 = vpop.permute.xlu0 %930
        %v934 = vpack.c.bf16 %v854, %v854
        %v935 = vpack.c.bf16 %v856, %v856
        %v936 = vpack.c.bf16 %v917, %v917
        %v937 = vpack.c.bf16 %v919, %v919
        %v938 = vpack.c.bf16 %v923, %v923
        %v939 = vpack.c.bf16 %v925, %v925
        %v940 = vpack.c.bf16 %v929, %v929
        %v941 = vpack.c.bf16 %v931, %v931
        %vm942 = vcmask 261120
        %v944 = vsel %vm942, %v878, 0
        %v947 = vsel %vm942, %v906, 0
        %949 = vmatpush.bf16.xpose.msra.mxu0 0
        %950 = vmatpush.bf16.xpose.msra.mxu0 0
        %951 = vmatpush.bf16.xpose.msra.mxu0 0
        %952 = vmatpush.bf16.xpose.msra.mxu0 0
        %953 = vmatpush.bf16.xpose.msra.mxu0 0
        %954 = vmatpush.bf16.xpose.msra.mxu0 0
        %955 = vmatpush.bf16.xpose.msra.mxu0 0
        %956 = vmatpush.bf16.xpose.msra.mxu0 %v947
        %957 = vmatmul.bf16.gmra.mxu0 %v944
        %v958 = vpop.f32.mrf.mxu0
        %v959 = vadd.f32 0.0, %v958
        %v960 = vpop.f32.mrf.mxu0
        %961 = vdwg.mxu0
        %v963 = vsel %vm942, %v879, 0
        %v966 = vsel %vm942, %v907, 0
        %968 = vmatpush.bf16.xpose.msra.mxu0 0
        %969 = vmatpush.bf16.xpose.msra.mxu0 0
        %970 = vmatpush.bf16.xpose.msra.mxu0 0
        %971 = vmatpush.bf16.xpose.msra.mxu0 0
        %972 = vmatpush.bf16.xpose.msra.mxu0 0
        %973 = vmatpush.bf16.xpose.msra.mxu0 0
        %974 = vmatpush.bf16.xpose.msra.mxu0 0
        %975 = vmatpush.bf16.xpose.msra.mxu0 %v966
        %976 = vmatmul.bf16.gmra.mxu0 %v963
        %v977 = vpop.f32.mrf.mxu0
        %v978 = vadd.f32 0.0, %v977
        %v979 = vpop.f32.mrf.mxu0
        %980 = vdwg.mxu0
        %v982 = vsel %vm942, %v880, 0
        %v985 = vsel %vm942, %v908, 0
        %987 = vmatpush.bf16.xpose.msra.mxu0 0
        %988 = vmatpush.bf16.xpose.msra.mxu0 0
        %989 = vmatpush.bf16.xpose.msra.mxu0 0
        %990 = vmatpush.bf16.xpose.msra.mxu0 0
        %991 = vmatpush.bf16.xpose.msra.mxu0 0
        %992 = vmatpush.bf16.xpose.msra.mxu0 0
        %993 = vmatpush.bf16.xpose.msra.mxu0 0
        %994 = vmatpush.bf16.xpose.msra.mxu0 %v985
        %995 = vmatmul.bf16.gmra.mxu0 %v982
        %v996 = vpop.f32.mrf.mxu0
        %v997 = vadd.f32 0.0, %v996
        %v998 = vpop.f32.mrf.mxu0
        %999 = vdwg.mxu0
        %v1001 = vsel %vm942, %v881, 0
        %v1004 = vsel %vm942, %v909, 0
        %1006 = vmatpush.bf16.xpose.msra.mxu0 0
        %1007 = vmatpush.bf16.xpose.msra.mxu0 0
        %1008 = vmatpush.bf16.xpose.msra.mxu0 0
        %1009 = vmatpush.bf16.xpose.msra.mxu0 0
        %1010 = vmatpush.bf16.xpose.msra.mxu0 0
        %1011 = vmatpush.bf16.xpose.msra.mxu0 0
        %1012 = vmatpush.bf16.xpose.msra.mxu0 0
        %1013 = vmatpush.bf16.xpose.msra.mxu0 %v1004
        %1014 = vmatmul.bf16.gmra.mxu0 %v1001
        %v1015 = vpop.f32.mrf.mxu0
        %v1016 = vadd.f32 0.0, %v1015
        %v1017 = vpop.f32.mrf.mxu0
        %1018 = vdwg.mxu0
        %v1020 = vsel %vm942, %v882, 0
        %v1023 = vsel %vm942, %v910, 0
        %1025 = vmatpush.bf16.xpose.msra.mxu0 0
        %1026 = vmatpush.bf16.xpose.msra.mxu0 0
        %1027 = vmatpush.bf16.xpose.msra.mxu0 0
        %1028 = vmatpush.bf16.xpose.msra.mxu0 0
        %1029 = vmatpush.bf16.xpose.msra.mxu0 0
        %1030 = vmatpush.bf16.xpose.msra.mxu0 0
        %1031 = vmatpush.bf16.xpose.msra.mxu0 0
        %1032 = vmatpush.bf16.xpose.msra.mxu0 %v1023
        %1033 = vmatmul.bf16.gmra.mxu0 %v1020
        %v1034 = vpop.f32.mrf.mxu0
        %v1035 = vadd.f32 0.0, %v1034
        %v1036 = vpop.f32.mrf.mxu0
        %1037 = vdwg.mxu0
        %v1039 = vsel %vm942, %v883, 0
        %v1042 = vsel %vm942, %v911, 0
        %1044 = vmatpush.bf16.xpose.msra.mxu0 0
        %1045 = vmatpush.bf16.xpose.msra.mxu0 0
        %1046 = vmatpush.bf16.xpose.msra.mxu0 0
        %1047 = vmatpush.bf16.xpose.msra.mxu0 0
        %1048 = vmatpush.bf16.xpose.msra.mxu0 0
        %1049 = vmatpush.bf16.xpose.msra.mxu0 0
        %1050 = vmatpush.bf16.xpose.msra.mxu0 0
        %1051 = vmatpush.bf16.xpose.msra.mxu0 %v1042
        %1052 = vmatmul.bf16.gmra.mxu0 %v1039
        %v1053 = vpop.f32.mrf.mxu0
        %v1054 = vadd.f32 0.0, %v1053
        %v1055 = vpop.f32.mrf.mxu0
        %1056 = vdwg.mxu0
        %v1058 = vsel %vm942, %v884, 0
        %v1061 = vsel %vm942, %v912, 0
        %1063 = vmatpush.bf16.xpose.msra.mxu0 0
        %1064 = vmatpush.bf16.xpose.msra.mxu0 0
        %1065 = vmatpush.bf16.xpose.msra.mxu0 0
        %1066 = vmatpush.bf16.xpose.msra.mxu0 0
        %1067 = vmatpush.bf16.xpose.msra.mxu0 0
        %1068 = vmatpush.bf16.xpose.msra.mxu0 0
        %1069 = vmatpush.bf16.xpose.msra.mxu0 0
        %1070 = vmatpush.bf16.xpose.msra.mxu0 %v1061
        %1071 = vmatmul.bf16.gmra.mxu0 %v1058
        %v1072 = vpop.f32.mrf.mxu0
        %v1073 = vadd.f32 0.0, %v1072
        %v1074 = vpop.f32.mrf.mxu0
        %1075 = vdwg.mxu0
        %v1077 = vsel %vm942, %v885, 0
        %v1080 = vsel %vm942, %v913, 0
        %1082 = vmatpush.bf16.xpose.msra.mxu0 0
        %1083 = vmatpush.bf16.xpose.msra.mxu0 0
        %1084 = vmatpush.bf16.xpose.msra.mxu0 0
        %1085 = vmatpush.bf16.xpose.msra.mxu0 0
        %1086 = vmatpush.bf16.xpose.msra.mxu0 0
        %1087 = vmatpush.bf16.xpose.msra.mxu0 0
        %1088 = vmatpush.bf16.xpose.msra.mxu0 0
        %1089 = vmatpush.bf16.xpose.msra.mxu0 %v1080
        %1090 = vmatmul.bf16.gmra.mxu0 %v1077
        %v1091 = vpop.f32.mrf.mxu0
        %v1092 = vadd.f32 0.0, %v1091
        %v1093 = vpop.f32.mrf.mxu0
        %1094 = vdwg.mxu0
        %v1095 = vmul.f32 %v959, 0.17677669
        %v1096 = vmul.f32 %v978, 0.17677669
        %v1097 = vmul.f32 %v997, 0.17677669
        %v1098 = vmul.f32 %v1016, 0.17677669
        %v1099 = vmul.f32 %v1035, 0.17677669
        %v1100 = vmul.f32 %v1054, 0.17677669
        %v1101 = vmul.f32 %v1073, 0.17677669
        %v1102 = vmul.f32 %v1092, 0.17677669
        %v1103 = vld [vmem:[#allocation5] sm:$0xff]
        %v1104 = vadd.f32 %v1095, %v1103
        %v1105 = vadd.f32 %v1096, %v1103
        %v1106 = vadd.f32 %v1097, %v1103
        %v1107 = vadd.f32 %v1098, %v1103
        %v1108 = vadd.f32 %v1099, %v1103
        %v1109 = vadd.f32 %v1100, %v1103
        %v1110 = vadd.f32 %v1101, %v1103
        %v1111 = vadd.f32 %v1102, %v1103
        %vm1112 = vcmask 64512
        %v1113 = vsel %vm1112, %v1104, -inf
        %1114 = vmax.xlane.f32.xlu0 %v1113
        %v1115 = vpop.xlane.xlu0 %1114
        %v1116 = vsel %vm1112, %v1105, -inf
        %1117 = vmax.xlane.f32.xlu0 %v1116
        %v1118 = vpop.xlane.xlu0 %1117
        %v1119 = vsel %vm1112, %v1106, -inf
        %1120 = vmax.xlane.f32.xlu0 %v1119
        %v1121 = vpop.xlane.xlu0 %1120
        %v1122 = vsel %vm1112, %v1107, -inf
        %1123 = vmax.xlane.f32.xlu0 %v1122
        %v1124 = vpop.xlane.xlu0 %1123
        %v1125 = vsel %vm1112, %v1108, -inf
        %1126 = vmax.xlane.f32.xlu0 %v1125
        %v1127 = vpop.xlane.xlu0 %1126
        %v1128 = vsel %vm1112, %v1109, -inf
        %1129 = vmax.xlane.f32.xlu0 %v1128
        %v1130 = vpop.xlane.xlu0 %1129
        %v1131 = vsel %vm1112, %v1110, -inf
        %1132 = vmax.xlane.f32.xlu0 %v1131
        %v1133 = vpop.xlane.xlu0 %1132
        %v1134 = vsel %vm1112, %v1111, -inf
        %1135 = vmax.xlane.f32.xlu0 %v1134
        %v1136 = vpop.xlane.xlu0 %1135
        %v1137 = vsub.f32 %v1104, %v1115
        %v1138 = vsub.f32 %v1105, %v1118
        %v1139 = vsub.f32 %v1106, %v1121
        %v1140 = vsub.f32 %v1107, %v1124
        %v1141 = vsub.f32 %v1108, %v1127
        %v1142 = vsub.f32 %v1109, %v1130
        %v1143 = vsub.f32 %v1110, %v1133
        %v1144 = vsub.f32 %v1111, %v1136
        %v1145 = vmul.f32 %v1137, 1.442695
        %v1146 = vpow.pop %v1145
        %v1147 = vmul.f32 %v1138, 1.442695
        %v1148 = vpow.pop %v1147
        %v1149 = vmul.f32 %v1139, 1.442695
        %v1150 = vpow.pop %v1149
        %v1151 = vmul.f32 %v1140, 1.442695
        %v1152 = vpow.pop %v1151
        %v1153 = vmul.f32 %v1141, 1.442695
        %v1154 = vpow.pop %v1153
        %v1155 = vmul.f32 %v1142, 1.442695
        %v1156 = vpow.pop %v1155
        %v1157 = vmul.f32 %v1143, 1.442695
        %v1158 = vpow.pop %v1157
        %v1159 = vmul.f32 %v1144, 1.442695
        %v1160 = vpow.pop %v1159
        %v1161 = vsel %vm1112, %v1146, 0.0
        %1162 = vadd.xlane.f32.xlu0 %v1161
        %v1163 = vpop.xlane.xlu0 %1162
        %v1164 = vsel %vm1112, %v1148, 0.0
        %1165 = vadd.xlane.f32.xlu0 %v1164
        %v1166 = vpop.xlane.xlu0 %1165
        %v1167 = vsel %vm1112, %v1150, 0.0
        %1168 = vadd.xlane.f32.xlu0 %v1167
        %v1169 = vpop.xlane.xlu0 %1168
        %v1170 = vsel %vm1112, %v1152, 0.0
        %1171 = vadd.xlane.f32.xlu0 %v1170
        %v1172 = vpop.xlane.xlu0 %1171
        %v1173 = vsel %vm1112, %v1154, 0.0
        %1174 = vadd.xlane.f32.xlu0 %v1173
        %v1175 = vpop.xlane.xlu0 %1174
        %v1176 = vsel %vm1112, %v1156, 0.0
        %1177 = vadd.xlane.f32.xlu0 %v1176
        %v1178 = vpop.xlane.xlu0 %1177
        %v1179 = vsel %vm1112, %v1158, 0.0
        %1180 = vadd.xlane.f32.xlu0 %v1179
        %v1181 = vpop.xlane.xlu0 %1180
        %v1182 = vsel %vm1112, %v1160, 0.0
        %1183 = vadd.xlane.f32.xlu0 %v1182
        %v1184 = vpop.xlane.xlu0 %1183
        %v1185 = vrcp.pop %v1163
        %v1186 = vrcp.pop %v1166
        %v1187 = vrcp.pop %v1169
        %v1188 = vrcp.pop %v1172
        %v1189 = vrcp.pop %v1175
        %v1190 = vrcp.pop %v1178
        %v1191 = vrcp.pop %v1181
        %v1192 = vrcp.pop %v1184
        %v1193 = vmul.f32 %v1146, %v1185
        %v1194 = vmul.f32 %v1148, %v1186
        %v1195 = vmul.f32 %v1150, %v1187
        %v1196 = vmul.f32 %v1152, %v1188
        %v1197 = vmul.f32 %v1154, %v1189
        %v1198 = vmul.f32 %v1156, %v1190
        %v1199 = vmul.f32 %v1158, %v1191
        %v1200 = vmul.f32 %v1160, %v1192
        %v1201 = vpack.c.bf16 %v1193, %v1193
        %v1202 = vpack.c.bf16 %v1194, %v1194
        %v1203 = vpack.c.bf16 %v1195, %v1195
        %v1204 = vpack.c.bf16 %v1196, %v1196
        %v1205 = vpack.c.bf16 %v1197, %v1197
        %v1206 = vpack.c.bf16 %v1198, %v1198
        %v1207 = vpack.c.bf16 %v1199, %v1199
        %v1208 = vpack.c.bf16 %v1200, %v1200
        %v1210 = vsel %vm1112, %v1201, 0
        %vm1212 = vcmask 1043456
        %v1214 = vsel %vm1212, %v934, 0
        %1216 = vmatpush.bf16.msra.mxu0 0
        %1217 = vmatpush.bf16.msra.mxu0 0
        %1218 = vmatpush.bf16.msra.mxu0 0
        %1219 = vmatpush.bf16.msra.mxu0 0
        %1220 = vmatpush.bf16.msra.mxu0 0
        %1221 = vmatpush.bf16.msra.mxu0 0
        %1222 = vmatpush.bf16.msra.mxu0 0
        %1223 = vmatpush.bf16.msra.mxu0 %v1214
        %1224 = vmatmul.bf16.gmra.mxu0 %v1210
        %v1225 = vpop.f32.mrf.mxu0
        %v1226 = vadd.f32 0.0, %v1225
        %v1227 = vpop.f32.mrf.mxu0
        %1228 = vdwg.mxu0
        %v1230 = vsel %vm1112, %v1202, 0
        %v1233 = vsel %vm1212, %v935, 0
        %1235 = vmatpush.bf16.msra.mxu0 0
        %1236 = vmatpush.bf16.msra.mxu0 0
        %1237 = vmatpush.bf16.msra.mxu0 0
        %1238 = vmatpush.bf16.msra.mxu0 0
        %1239 = vmatpush.bf16.msra.mxu0 0
        %1240 = vmatpush.bf16.msra.mxu0 0
        %1241 = vmatpush.bf16.msra.mxu0 0
        %1242 = vmatpush.bf16.msra.mxu0 %v1233
        %1243 = vmatmul.bf16.gmra.mxu0 %v1230
        %v1244 = vpop.f32.mrf.mxu0
        %v1245 = vadd.f32 0.0, %v1244
        %v1246 = vpop.f32.mrf.mxu0
        %1247 = vdwg.mxu0
        %v1249 = vsel %vm1112, %v1203, 0
        %v1252 = vsel %vm1212, %v936, 0
        %1254 = vmatpush.bf16.msra.mxu0 0
        %1255 = vmatpush.bf16.msra.mxu0 0
        %1256 = vmatpush.bf16.msra.mxu0 0
        %1257 = vmatpush.bf16.msra.mxu0 0
        %1258 = vmatpush.bf16.msra.mxu0 0
        %1259 = vmatpush.bf16.msra.mxu0 0
        %1260 = vmatpush.bf16.msra.mxu0 0
        %1261 = vmatpush.bf16.msra.mxu0 %v1252
        %1262 = vmatmul.bf16.gmra.mxu0 %v1249
        %v1263 = vpop.f32.mrf.mxu0
        %v1264 = vadd.f32 0.0, %v1263
        %v1265 = vpop.f32.mrf.mxu0
        %1266 = vdwg.mxu0
        %v1268 = vsel %vm1112, %v1204, 0
        %v1271 = vsel %vm1212, %v937, 0
        %1273 = vmatpush.bf16.msra.mxu0 0
        %1274 = vmatpush.bf16.msra.mxu0 0
        %1275 = vmatpush.bf16.msra.mxu0 0
        %1276 = vmatpush.bf16.msra.mxu0 0
        %1277 = vmatpush.bf16.msra.mxu0 0
        %1278 = vmatpush.bf16.msra.mxu0 0
        %1279 = vmatpush.bf16.msra.mxu0 0
        %1280 = vmatpush.bf16.msra.mxu0 %v1271
        %1281 = vmatmul.bf16.gmra.mxu0 %v1268
        %v1282 = vpop.f32.mrf.mxu0
        %v1283 = vadd.f32 0.0, %v1282
        %v1284 = vpop.f32.mrf.mxu0
        %1285 = vdwg.mxu0
        %v1287 = vsel %vm1112, %v1205, 0
        %v1290 = vsel %vm1212, %v938, 0
        %1292 = vmatpush.bf16.msra.mxu0 0
        %1293 = vmatpush.bf16.msra.mxu0 0
        %1294 = vmatpush.bf16.msra.mxu0 0
        %1295 = vmatpush.bf16.msra.mxu0 0
        %1296 = vmatpush.bf16.msra.mxu0 0
        %1297 = vmatpush.bf16.msra.mxu0 0
        %1298 = vmatpush.bf16.msra.mxu0 0
        %1299 = vmatpush.bf16.msra.mxu0 %v1290
        %1300 = vmatmul.bf16.gmra.mxu0 %v1287
        %v1301 = vpop.f32.mrf.mxu0
        %v1302 = vadd.f32 0.0, %v1301
        %v1303 = vpop.f32.mrf.mxu0
        %1304 = vdwg.mxu0
        %v1306 = vsel %vm1112, %v1206, 0
        %v1309 = vsel %vm1212, %v939, 0
        %1311 = vmatpush.bf16.msra.mxu0 0
        %1312 = vmatpush.bf16.msra.mxu0 0
        %1313 = vmatpush.bf16.msra.mxu0 0
        %1314 = vmatpush.bf16.msra.mxu0 0
        %1315 = vmatpush.bf16.msra.mxu0 0
        %1316 = vmatpush.bf16.msra.mxu0 0
        %1317 = vmatpush.bf16.msra.mxu0 0
        %1318 = vmatpush.bf16.msra.mxu0 %v1309
        %1319 = vmatmul.bf16.gmra.mxu0 %v1306
        %v1320 = vpop.f32.mrf.mxu0
        %v1321 = vadd.f32 0.0, %v1320
        %v1322 = vpop.f32.mrf.mxu0
        %1323 = vdwg.mxu0
        %v1325 = vsel %vm1112, %v1207, 0
        %v1328 = vsel %vm1212, %v940, 0
        %1330 = vmatpush.bf16.msra.mxu0 0
        %1331 = vmatpush.bf16.msra.mxu0 0
        %1332 = vmatpush.bf16.msra.mxu0 0
        %1333 = vmatpush.bf16.msra.mxu0 0
        %1334 = vmatpush.bf16.msra.mxu0 0
        %1335 = vmatpush.bf16.msra.mxu0 0
        %1336 = vmatpush.bf16.msra.mxu0 0
        %1337 = vmatpush.bf16.msra.mxu0 %v1328
        %1338 = vmatmul.bf16.gmra.mxu0 %v1325
        %v1339 = vpop.f32.mrf.mxu0
        %v1340 = vadd.f32 0.0, %v1339
        %v1341 = vpop.f32.mrf.mxu0
        %1342 = vdwg.mxu0
        %v1344 = vsel %vm1112, %v1208, 0
        %v1347 = vsel %vm1212, %v941, 0
        %1349 = vmatpush.bf16.msra.mxu0 0
        %1350 = vmatpush.bf16.msra.mxu0 0
        %1351 = vmatpush.bf16.msra.mxu0 0
        %1352 = vmatpush.bf16.msra.mxu0 0
        %1353 = vmatpush.bf16.msra.mxu0 0
        %1354 = vmatpush.bf16.msra.mxu0 0
        %1355 = vmatpush.bf16.msra.mxu0 0
        %1356 = vmatpush.bf16.msra.mxu0 %v1347
        %1357 = vmatmul.bf16.gmra.mxu0 %v1344
        %v1358 = vpop.f32.mrf.mxu0
        %v1359 = vadd.f32 0.0, %v1358
        %v1360 = vpop.f32.mrf.mxu0
        %1361 = vdwg.mxu0
        %1364 = vrot.lane.b32.xlu0 %v1264, 32
        %v1365 = vpop.permute.xlu0 %1364
        %1366 = vrot.lane.b32.xlu0 %v1283, 32
        %v1367 = vpop.permute.xlu0 %1366
        %1372 = vrot.lane.b32.xlu0 %v1302, 64
        %v1373 = vpop.permute.xlu0 %1372
        %1374 = vrot.lane.b32.xlu0 %v1321, 64
        %v1375 = vpop.permute.xlu0 %1374
        %1380 = vrot.lane.b32.xlu0 %v1340, 96
        %v1381 = vpop.permute.xlu0 %1380
        %1382 = vrot.lane.b32.xlu0 %v1359, 96
        %v1383 = vpop.permute.xlu0 %1382
        %v1386 = vsel %vm942, %v1226, %v1365
        %v1387 = vsel %vm942, %v1245, %v1367
        %vm1388 = vcmask 523264
        %v1389 = vsel %vm1388, %v1386, %v1373
        %v1390 = vsel %vm1388, %v1387, %v1375
        %vm1391 = vcmask 785408
        %v1392 = vsel %vm1391, %v1389, %v1381
        %v1393 = vsel %vm1391, %v1390, %v1383
        %v1394 = vpack.c.bf16 %v1393, %v1392
        %v1395 = vld [vmem:[#allocation10] sm:$0xf]
        %v1396 = vld [vmem:[#allocation10 + $0x4] sm:$0xf]
        %v1397 = vld [vmem:[#allocation10 + $0x8] sm:$0xf]
        %v1398 = vld [vmem:[#allocation10 + $0xc] sm:$0xf]
        %v1399 = vld [vmem:[#allocation10 + $0x10] sm:$0xf]
        %v1400 = vld [vmem:[#allocation10 + $0x14] sm:$0xf]
        %v1401 = vld [vmem:[#allocation10 + $0x18] sm:$0xf]
        %v1402 = vld [vmem:[#allocation10 + $0x1c] sm:$0xf]
        %v1403 = vld [vmem:[#allocation10 + $0x20] sm:$0xf]
        %v1404 = vld [vmem:[#allocation10 + $0x24] sm:$0xf]
        %v1405 = vld [vmem:[#allocation10 + $0x28] sm:$0xf]
        %v1406 = vld [vmem:[#allocation10 + $0x2c] sm:$0xf]
        %v1407 = vld [vmem:[#allocation10 + $0x30] sm:$0xf]
        %v1408 = vld [vmem:[#allocation10 + $0x34] sm:$0xf]
        %v1409 = vld [vmem:[#allocation10 + $0x38] sm:$0xf]
        %v1410 = vld [vmem:[#allocation10 + $0x3c] sm:$0xf]
        %v1411 = vld [vmem:[%s5] sm:$0x1]
        %v1413 = vperm.slane %v1411, 0
        %v1431 = vunpack.c.l.b16 %v1395
        %v1432 = vunpack.c.l.b16 %v1396
        %v1433 = vunpack.c.l.b16 %v1397
        %v1434 = vunpack.c.l.b16 %v1398
        %v1435 = vunpack.c.l.b16 %v1399
        %v1436 = vunpack.c.l.b16 %v1400
        %v1437 = vunpack.c.l.b16 %v1401
        %v1438 = vunpack.c.l.b16 %v1402
        %v1439 = vunpack.c.l.b16 %v1403
        %v1440 = vunpack.c.l.b16 %v1404
        %v1441 = vunpack.c.l.b16 %v1405
        %v1442 = vunpack.c.l.b16 %v1406
        %v1443 = vunpack.c.l.b16 %v1407
        %v1444 = vunpack.c.l.b16 %v1408
        %v1445 = vunpack.c.l.b16 %v1409
        %v1446 = vunpack.c.l.b16 %v1410
        %v1447 = vpack.c.b16 %v1432, %v1431
        %v1448 = vpack.c.b16 %v1434, %v1433
        %v1449 = vpack.c.b16 %v1436, %v1435
        %v1450 = vpack.c.b16 %v1438, %v1437
        %v1451 = vpack.c.b16 %v1440, %v1439
        %v1452 = vpack.c.b16 %v1442, %v1441
        %v1453 = vpack.c.b16 %v1444, %v1443
        %v1454 = vpack.c.b16 %v1446, %v1445
        %1463 = vmatpush.bf16.msra.mxu0 %v1454
        %1464 = vmatpush.bf16.msra.mxu0 %v1453
        %1465 = vmatpush.bf16.msra.mxu0 %v1452
        %1466 = vmatpush.bf16.msra.mxu0 %v1451
        %1467 = vmatpush.bf16.msra.mxu0 %v1450
        %1468 = vmatpush.bf16.msra.mxu0 %v1449
        %1469 = vmatpush.bf16.msra.mxu0 %v1448
        %1470 = vmatpush.bf16.msra.mxu0 %v1447
        %1471 = vmatmul.bf16.gmra.mxu0 %v1394
        %v1472 = vpop.f32.mrf.mxu0
        %v1473 = vadd.f32 %v1413, %v1472
        %v1474 = vpop.f32.mrf.mxu0
        %v1475 = vadd.f32 %v1413, %v1474
        %1476 = vdwg.mxu0
        %v1477 = vadd.f32 %v586, %v1473
        %v1478 = vadd.f32 %v587, %v1475
        %v1479 = vld [vmem:[%s12] sm:$0x1]
        %v1480 = vld [vmem:[%s13] sm:$0x1]
        %1481 = vadd.xlane.f32.xlu0 %v1477
        %v1482 = vpop.xlane.xlu0 %1481
        %1483 = vadd.xlane.f32.xlu0 %v1478
        %v1484 = vpop.xlane.xlu0 %1483
        %v1485 = vmul.f32 %v1482, %v600
        %v1486 = vmul.f32 %v1484, %v600
        %v1487 = vsub.f32 %v1477, %v1485
        %v1488 = vsub.f32 %v1478, %v1486
        %v1489 = vmul.f32 %v1487, %v1487
        %v1490 = vmul.f32 %v1488, %v1488
        %1491 = vadd.xlane.f32.xlu0 %v1489
        %v1492 = vpop.xlane.xlu0 %1491
        %1493 = vadd.xlane.f32.xlu0 %v1490
        %v1494 = vpop.xlane.xlu0 %1493
        %v1495 = vmul.f32 %v1492, %v600
        %v1496 = vmul.f32 %v1494, %v600
        %v1497 = vadd.f32 %v1495, 1e-06
        %v1498 = vadd.f32 %v1496, 1e-06
        %v1499 = vrsqrt.pop %v1497
        %v1500 = vmul.f32 %v1499, %v1497
        %v1501 = vmul.f32 %v1500, %v1499
        %v1502 = vmul.f32 0.5, %v1501
        %v1503 = vsub.f32 1.5, %v1502
        %v1504 = vmul.f32 %v1499, %v1503
        %vm1505 = vweird.f32 %v1497
        %vm1506 = vweird.f32 %v1499
        %vm1507 = vmor %vm1505, %vm1506
        %v1508 = vsel %vm1507, %v1499, %v1504
        %v1509 = vrsqrt.pop %v1498
        %v1510 = vmul.f32 %v1509, %v1498
        %v1511 = vmul.f32 %v1510, %v1509
        %v1512 = vmul.f32 0.5, %v1511
        %v1513 = vsub.f32 1.5, %v1512
        %v1514 = vmul.f32 %v1509, %v1513
        %vm1515 = vweird.f32 %v1498
        %vm1516 = vweird.f32 %v1509
        %vm1517 = vmor %vm1515, %vm1516
        %v1518 = vsel %vm1517, %v1509, %v1514
        %v1519 = vmul.f32 %v1487, %v1508
        %v1520 = vmul.f32 %v1488, %v1518
        %v1522 = vperm.slane %v1479, 0
        %v1524 = vmul.f32 %v1519, %v1522
        %v1525 = vmul.f32 %v1520, %v1522
        %v1527 = vperm.slane %v1480, 0
        %v1529 = vadd.f32 %v1524, %v1527
        %v1530 = vadd.f32 %v1525, %v1527
        %v1531 = vpack.c.bf16 %v1530, %v1529
        %v1532 = vld [vmem:[#allocation11] sm:$0xff]
        %v1533 = vld [vmem:[#allocation11 + $0x8] sm:$0xff]
        %v1534 = vld [vmem:[#allocation11 + $0x10] sm:$0xff]
        %v1535 = vld [vmem:[#allocation11 + $0x18] sm:$0xff]
        %v1536 = vld [vmem:[#allocation11 + $0x20] sm:$0xff]
        %v1537 = vld [vmem:[#allocation11 + $0x28] sm:$0xff]
        %v1538 = vld [vmem:[#allocation11 + $0x30] sm:$0xff]
        %v1539 = vld [vmem:[#allocation11 + $0x38] sm:$0xff]
        %v1540 = vld [vmem:[#allocation11 + $0x40] sm:$0xff]
        %v1541 = vld [vmem:[#allocation11 + $0x48] sm:$0xff]
        %v1542 = vld [vmem:[#allocation11 + $0x50] sm:$0xff]
        %v1543 = vld [vmem:[#allocation11 + $0x58] sm:$0xff]
        %v1544 = vld [vmem:[#allocation11 + $0x60] sm:$0xff]
        %v1545 = vld [vmem:[#allocation11 + $0x68] sm:$0xff]
        %v1546 = vld [vmem:[#allocation11 + $0x70] sm:$0xff]
        %v1547 = vld [vmem:[#allocation11 + $0x78] sm:$0xff]
        %v1548 = vld [vmem:[#allocation11 + $0x80] sm:$0xff]
        %v1549 = vld [vmem:[#allocation11 + $0x88] sm:$0xff]
        %v1550 = vld [vmem:[#allocation11 + $0x90] sm:$0xff]
        %v1551 = vld [vmem:[#allocation11 + $0x98] sm:$0xff]
        %v1552 = vld [vmem:[#allocation11 + $0xa0] sm:$0xff]
        %v1553 = vld [vmem:[#allocation11 + $0xa8] sm:$0xff]
        %v1554 = vld [vmem:[#allocation11 + $0xb0] sm:$0xff]
        %v1555 = vld [vmem:[#allocation11 + $0xb8] sm:$0xff]
        %v1556 = vld [vmem:[#allocation11 + $0xc0] sm:$0xff]
        %v1557 = vld [vmem:[#allocation11 + $0xc8] sm:$0xff]
        %v1558 = vld [vmem:[#allocation11 + $0xd0] sm:$0xff]
        %v1559 = vld [vmem:[#allocation11 + $0xd8] sm:$0xff]
        %v1560 = vld [vmem:[#allocation11 + $0xe0] sm:$0xff]
        %v1561 = vld [vmem:[#allocation11 + $0xe8] sm:$0xff]
        %v1562 = vld [vmem:[#allocation11 + $0xf0] sm:$0xff]
        %v1563 = vld [vmem:[#allocation11 + $0xf8] sm:$0xff]
        %v1564 = vld [vmem:[%s7] sm:$0xf]
        %v1566 = vperm.slane %v1564, 0
        %v1567 = vperm.slane %v1564, 1
        %v1568 = vperm.slane %v1564, 2
        %v1569 = vperm.slane %v1564, 3
        %v1606 = vunpack.c.l.b16 %v1532
        %v1607 = vunpack.c.h.b16 %v1532
        %v1608 = vunpack.c.l.b16 %v1533
        %v1609 = vunpack.c.h.b16 %v1533
        %v1610 = vunpack.c.l.b16 %v1534
        %v1611 = vunpack.c.h.b16 %v1534
        %v1612 = vunpack.c.l.b16 %v1535
        %v1613 = vunpack.c.h.b16 %v1535
        %v1614 = vunpack.c.l.b16 %v1536
        %v1615 = vunpack.c.h.b16 %v1536
        %v1616 = vunpack.c.l.b16 %v1537
        %v1617 = vunpack.c.h.b16 %v1537
        %v1618 = vunpack.c.l.b16 %v1538
        %v1619 = vunpack.c.h.b16 %v1538
        %v1620 = vunpack.c.l.b16 %v1539
        %v1621 = vunpack.c.h.b16 %v1539
        %v1622 = vunpack.c.l.b16 %v1540
        %v1623 = vunpack.c.h.b16 %v1540
        %v1624 = vunpack.c.l.b16 %v1541
        %v1625 = vunpack.c.h.b16 %v1541
        %v1626 = vunpack.c.l.b16 %v1542
        %v1627 = vunpack.c.h.b16 %v1542
        %v1628 = vunpack.c.l.b16 %v1543
        %v1629 = vunpack.c.h.b16 %v1543
        %v1630 = vunpack.c.l.b16 %v1544
        %v1631 = vunpack.c.h.b16 %v1544
        %v1632 = vunpack.c.l.b16 %v1545
        %v1633 = vunpack.c.h.b16 %v1545
        %v1634 = vunpack.c.l.b16 %v1546
        %v1635 = vunpack.c.h.b16 %v1546
        %v1636 = vunpack.c.l.b16 %v1547
        %v1637 = vunpack.c.h.b16 %v1547
        %v1638 = vunpack.c.l.b16 %v1548
        %v1639 = vunpack.c.h.b16 %v1548
        %v1640 = vunpack.c.l.b16 %v1549
        %v1641 = vunpack.c.h.b16 %v1549
        %v1642 = vunpack.c.l.b16 %v1550
        %v1643 = vunpack.c.h.b16 %v1550
        %v1644 = vunpack.c.l.b16 %v1551
        %v1645 = vunpack.c.h.b16 %v1551
        %v1646 = vunpack.c.l.b16 %v1552
        %v1647 = vunpack.c.h.b16 %v1552
        %v1648 = vunpack.c.l.b16 %v1553
        %v1649 = vunpack.c.h.b16 %v1553
        %v1650 = vunpack.c.l.b16 %v1554
        %v1651 = vunpack.c.h.b16 %v1554
        %v1652 = vunpack.c.l.b16 %v1555
        %v1653 = vunpack.c.h.b16 %v1555
        %v1654 = vunpack.c.l.b16 %v1556
        %v1655 = vunpack.c.h.b16 %v1556
        %v1656 = vunpack.c.l.b16 %v1557
        %v1657 = vunpack.c.h.b16 %v1557
        %v1658 = vunpack.c.l.b16 %v1558
        %v1659 = vunpack.c.h.b16 %v1558
        %v1660 = vunpack.c.l.b16 %v1559
        %v1661 = vunpack.c.h.b16 %v1559
        %v1662 = vunpack.c.l.b16 %v1560
        %v1663 = vunpack.c.h.b16 %v1560
        %v1664 = vunpack.c.l.b16 %v1561
        %v1665 = vunpack.c.h.b16 %v1561
        %v1666 = vunpack.c.l.b16 %v1562
        %v1667 = vunpack.c.h.b16 %v1562
        %v1668 = vunpack.c.l.b16 %v1563
        %v1669 = vunpack.c.h.b16 %v1563
        %v1670 = vpack.c.b16 %v1610, %v1606
        %v1671 = vpack.c.b16 %v1611, %v1607
        %v1672 = vpack.c.b16 %v1612, %v1608
        %v1673 = vpack.c.b16 %v1613, %v1609
        %v1674 = vpack.c.b16 %v1618, %v1614
        %v1675 = vpack.c.b16 %v1619, %v1615
        %v1676 = vpack.c.b16 %v1620, %v1616
        %v1677 = vpack.c.b16 %v1621, %v1617
        %v1678 = vpack.c.b16 %v1626, %v1622
        %v1679 = vpack.c.b16 %v1627, %v1623
        %v1680 = vpack.c.b16 %v1628, %v1624
        %v1681 = vpack.c.b16 %v1629, %v1625
        %v1682 = vpack.c.b16 %v1634, %v1630
        %v1683 = vpack.c.b16 %v1635, %v1631
        %v1684 = vpack.c.b16 %v1636, %v1632
        %v1685 = vpack.c.b16 %v1637, %v1633
        %v1686 = vpack.c.b16 %v1642, %v1638
        %v1687 = vpack.c.b16 %v1643, %v1639
        %v1688 = vpack.c.b16 %v1644, %v1640
        %v1689 = vpack.c.b16 %v1645, %v1641
        %v1690 = vpack.c.b16 %v1650, %v1646
        %v1691 = vpack.c.b16 %v1651, %v1647
        %v1692 = vpack.c.b16 %v1652, %v1648
        %v1693 = vpack.c.b16 %v1653, %v1649
        %v1694 = vpack.c.b16 %v1658, %v1654
        %v1695 = vpack.c.b16 %v1659, %v1655
        %v1696 = vpack.c.b16 %v1660, %v1656
        %v1697 = vpack.c.b16 %v1661, %v1657
        %v1698 = vpack.c.b16 %v1666, %v1662
        %v1699 = vpack.c.b16 %v1667, %v1663
        %v1700 = vpack.c.b16 %v1668, %v1664
        %v1701 = vpack.c.b16 %v1669, %v1665
        %1734 = vmatpush.bf16.msra.mxu0 %v1698
        %1735 = vmatpush.bf16.msra.mxu0 %v1694
        %1736 = vmatpush.bf16.msra.mxu0 %v1690
        %1737 = vmatpush.bf16.msra.mxu0 %v1686
        %1738 = vmatpush.bf16.msra.mxu0 %v1682
        %1739 = vmatpush.bf16.msra.mxu0 %v1678
        %1740 = vmatpush.bf16.msra.mxu0 %v1674
        %1741 = vmatpush.bf16.msra.mxu0 %v1670
        %1742 = vmatmul.bf16.gmra.mxu0 %v1531
        %v1743 = vpop.f32.mrf.mxu0
        %v1744 = vadd.f32 %v1566, %v1743
        %v1745 = vpop.f32.mrf.mxu0
        %v1746 = vadd.f32 %v1566, %v1745
        %1747 = vdwg.mxu0
        %1748 = vmatpush.bf16.msra.mxu0 %v1699
        %1749 = vmatpush.bf16.msra.mxu0 %v1695
        %1750 = vmatpush.bf16.msra.mxu0 %v1691
        %1751 = vmatpush.bf16.msra.mxu0 %v1687
        %1752 = vmatpush.bf16.msra.mxu0 %v1683
        %1753 = vmatpush.bf16.msra.mxu0 %v1679
        %1754 = vmatpush.bf16.msra.mxu0 %v1675
        %1755 = vmatpush.bf16.msra.mxu0 %v1671
        %1756 = vmatmul.bf16.gmra.mxu0 %v1531
        %v1757 = vpop.f32.mrf.mxu0
        %v1758 = vadd.f32 %v1567, %v1757
        %v1759 = vpop.f32.mrf.mxu0
        %v1760 = vadd.f32 %v1567, %v1759
        %1761 = vdwg.mxu0
        %1762 = vmatpush.bf16.msra.mxu0 %v1700
        %1763 = vmatpush.bf16.msra.mxu0 %v1696
        %1764 = vmatpush.bf16.msra.mxu0 %v1692
        %1765 = vmatpush.bf16.msra.mxu0 %v1688
        %1766 = vmatpush.bf16.msra.mxu0 %v1684
        %1767 = vmatpush.bf16.msra.mxu0 %v1680
        %1768 = vmatpush.bf16.msra.mxu0 %v1676
        %1769 = vmatpush.bf16.msra.mxu0 %v1672
        %1770 = vmatmul.bf16.gmra.mxu0 %v1531
        %v1771 = vpop.f32.mrf.mxu0
        %v1772 = vadd.f32 %v1568, %v1771
        %v1773 = vpop.f32.mrf.mxu0
        %v1774 = vadd.f32 %v1568, %v1773
        %1775 = vdwg.mxu0
        %1776 = vmatpush.bf16.msra.mxu0 %v1701
        %1777 = vmatpush.bf16.msra.mxu0 %v1697
        %1778 = vmatpush.bf16.msra.mxu0 %v1693
        %1779 = vmatpush.bf16.msra.mxu0 %v1689
        %1780 = vmatpush.bf16.msra.mxu0 %v1685
        %1781 = vmatpush.bf16.msra.mxu0 %v1681
        %1782 = vmatpush.bf16.msra.mxu0 %v1677
        %1783 = vmatpush.bf16.msra.mxu0 %v1673
        %1784 = vmatmul.bf16.gmra.mxu0 %v1531
        %v1785 = vpop.f32.mrf.mxu0
        %v1786 = vadd.f32 %v1569, %v1785
        %v1787 = vpop.f32.mrf.mxu0
        %v1788 = vadd.f32 %v1569, %v1787
        %1789 = vdwg.mxu0
        %v1790 = vmax.f32 %v1744, 0.0
        %v1791 = vmax.f32 %v1758, 0.0
        %v1792 = vmax.f32 %v1772, 0.0
        %v1793 = vmax.f32 %v1786, 0.0
        %v1794 = vmax.f32 %v1746, 0.0
        %v1795 = vmax.f32 %v1760, 0.0
        %v1796 = vmax.f32 %v1774, 0.0
        %v1797 = vmax.f32 %v1788, 0.0
        %v1798 = vpack.c.bf16 %v1794, %v1790
        %v1799 = vpack.c.bf16 %v1795, %v1791
        %v1800 = vpack.c.bf16 %v1796, %v1792
        %v1801 = vpack.c.bf16 %v1797, %v1793
        %v1802 = vld [vmem:[#allocation13] sm:$0xf]
        %v1803 = vld [vmem:[#allocation13 + $0x4] sm:$0xf]
        %v1804 = vld [vmem:[#allocation13 + $0x8] sm:$0xf]
        %v1805 = vld [vmem:[#allocation13 + $0xc] sm:$0xf]
        %v1806 = vld [vmem:[#allocation13 + $0x10] sm:$0xf]
        %v1807 = vld [vmem:[#allocation13 + $0x14] sm:$0xf]
        %v1808 = vld [vmem:[#allocation13 + $0x18] sm:$0xf]
        %v1809 = vld [vmem:[#allocation13 + $0x1c] sm:$0xf]
        %v1810 = vld [vmem:[#allocation13 + $0x20] sm:$0xf]
        %v1811 = vld [vmem:[#allocation13 + $0x24] sm:$0xf]
        %v1812 = vld [vmem:[#allocation13 + $0x28] sm:$0xf]
        %v1813 = vld [vmem:[#allocation13 + $0x2c] sm:$0xf]
        %v1814 = vld [vmem:[#allocation13 + $0x30] sm:$0xf]
        %v1815 = vld [vmem:[#allocation13 + $0x34] sm:$0xf]
        %v1816 = vld [vmem:[#allocation13 + $0x38] sm:$0xf]
        %v1817 = vld [vmem:[#allocation13 + $0x3c] sm:$0xf]
        %v1818 = vld [vmem:[#allocation13 + $0x40] sm:$0xf]
        %v1819 = vld [vmem:[#allocation13 + $0x44] sm:$0xf]
        %v1820 = vld [vmem:[#allocation13 + $0x48] sm:$0xf]
        %v1821 = vld [vmem:[#allocation13 + $0x4c] sm:$0xf]
        %v1822 = vld [vmem:[#allocation13 + $0x50] sm:$0xf]
        %v1823 = vld [vmem:[#allocation13 + $0x54] sm:$0xf]
        %v1824 = vld [vmem:[#allocation13 + $0x58] sm:$0xf]
        %v1825 = vld [vmem:[#allocation13 + $0x5c] sm:$0xf]
        %v1826 = vld [vmem:[#allocation13 + $0x60] sm:$0xf]
        %v1827 = vld [vmem:[#allocation13 + $0x64] sm:$0xf]
        %v1828 = vld [vmem:[#allocation13 + $0x68] sm:$0xf]
        %v1829 = vld [vmem:[#allocation13 + $0x6c] sm:$0xf]
        %v1830 = vld [vmem:[#allocation13 + $0x70] sm:$0xf]
        %v1831 = vld [vmem:[#allocation13 + $0x74] sm:$0xf]
        %v1832 = vld [vmem:[#allocation13 + $0x78] sm:$0xf]
        %v1833 = vld [vmem:[#allocation13 + $0x7c] sm:$0xf]
        %v1834 = vld [vmem:[#allocation13 + $0x80] sm:$0xf]
        %v1835 = vld [vmem:[#allocation13 + $0x84] sm:$0xf]
        %v1836 = vld [vmem:[#allocation13 + $0x88] sm:$0xf]
        %v1837 = vld [vmem:[#allocation13 + $0x8c] sm:$0xf]
        %v1838 = vld [vmem:[#allocation13 + $0x90] sm:$0xf]
        %v1839 = vld [vmem:[#allocation13 + $0x94] sm:$0xf]
        %v1840 = vld [vmem:[#allocation13 + $0x98] sm:$0xf]
        %v1841 = vld [vmem:[#allocation13 + $0x9c] sm:$0xf]
        %v1842 = vld [vmem:[#allocation13 + $0xa0] sm:$0xf]
        %v1843 = vld [vmem:[#allocation13 + $0xa4] sm:$0xf]
        %v1844 = vld [vmem:[#allocation13 + $0xa8] sm:$0xf]
        %v1845 = vld [vmem:[#allocation13 + $0xac] sm:$0xf]
        %v1846 = vld [vmem:[#allocation13 + $0xb0] sm:$0xf]
        %v1847 = vld [vmem:[#allocation13 + $0xb4] sm:$0xf]
        %v1848 = vld [vmem:[#allocation13 + $0xb8] sm:$0xf]
        %v1849 = vld [vmem:[#allocation13 + $0xbc] sm:$0xf]
        %v1850 = vld [vmem:[#allocation13 + $0xc0] sm:$0xf]
        %v1851 = vld [vmem:[#allocation13 + $0xc4] sm:$0xf]
        %v1852 = vld [vmem:[#allocation13 + $0xc8] sm:$0xf]
        %v1853 = vld [vmem:[#allocation13 + $0xcc] sm:$0xf]
        %v1854 = vld [vmem:[#allocation13 + $0xd0] sm:$0xf]
        %v1855 = vld [vmem:[#allocation13 + $0xd4] sm:$0xf]
        %v1856 = vld [vmem:[#allocation13 + $0xd8] sm:$0xf]
        %v1857 = vld [vmem:[#allocation13 + $0xdc] sm:$0xf]
        %v1858 = vld [vmem:[#allocation13 + $0xe0] sm:$0xf]
        %v1859 = vld [vmem:[#allocation13 + $0xe4] sm:$0xf]
        %v1860 = vld [vmem:[#allocation13 + $0xe8] sm:$0xf]
        %v1861 = vld [vmem:[#allocation13 + $0xec] sm:$0xf]
        %v1862 = vld [vmem:[#allocation13 + $0xf0] sm:$0xf]
        %v1863 = vld [vmem:[#allocation13 + $0xf4] sm:$0xf]
        %v1864 = vld [vmem:[#allocation13 + $0xf8] sm:$0xf]
        %v1865 = vld [vmem:[#allocation13 + $0xfc] sm:$0xf]
        %v1866 = vld [vmem:[%s9] sm:$0x1]
        %v1868 = vperm.slane %v1866, 0
        %v1934 = vunpack.c.l.b16 %v1802
        %v1935 = vunpack.c.l.b16 %v1803
        %v1936 = vunpack.c.l.b16 %v1804
        %v1937 = vunpack.c.l.b16 %v1805
        %v1938 = vunpack.c.l.b16 %v1806
        %v1939 = vunpack.c.l.b16 %v1807
        %v1940 = vunpack.c.l.b16 %v1808
        %v1941 = vunpack.c.l.b16 %v1809
        %v1942 = vunpack.c.l.b16 %v1810
        %v1943 = vunpack.c.l.b16 %v1811
        %v1944 = vunpack.c.l.b16 %v1812
        %v1945 = vunpack.c.l.b16 %v1813
        %v1946 = vunpack.c.l.b16 %v1814
        %v1947 = vunpack.c.l.b16 %v1815
        %v1948 = vunpack.c.l.b16 %v1816
        %v1949 = vunpack.c.l.b16 %v1817
        %v1950 = vunpack.c.l.b16 %v1818
        %v1951 = vunpack.c.l.b16 %v1819
        %v1952 = vunpack.c.l.b16 %v1820
        %v1953 = vunpack.c.l.b16 %v1821
        %v1954 = vunpack.c.l.b16 %v1822
        %v1955 = vunpack.c.l.b16 %v1823
        %v1956 = vunpack.c.l.b16 %v1824
        %v1957 = vunpack.c.l.b16 %v1825
        %v1958 = vunpack.c.l.b16 %v1826
        %v1959 = vunpack.c.l.b16 %v1827
        %v1960 = vunpack.c.l.b16 %v1828
        %v1961 = vunpack.c.l.b16 %v1829
        %v1962 = vunpack.c.l.b16 %v1830
        %v1963 = vunpack.c.l.b16 %v1831
        %v1964 = vunpack.c.l.b16 %v1832
        %v1965 = vunpack.c.l.b16 %v1833
        %v1966 = vunpack.c.l.b16 %v1834
        %v1967 = vunpack.c.l.b16 %v1835
        %v1968 = vunpack.c.l.b16 %v1836
        %v1969 = vunpack.c.l.b16 %v1837
        %v1970 = vunpack.c.l.b16 %v1838
        %v1971 = vunpack.c.l.b16 %v1839
        %v1972 = vunpack.c.l.b16 %v1840
        %v1973 = vunpack.c.l.b16 %v1841
        %v1974 = vunpack.c.l.b16 %v1842
        %v1975 = vunpack.c.l.b16 %v1843
        %v1976 = vunpack.c.l.b16 %v1844
        %v1977 = vunpack.c.l.b16 %v1845
        %v1978 = vunpack.c.l.b16 %v1846
        %v1979 = vunpack.c.l.b16 %v1847
        %v1980 = vunpack.c.l.b16 %v1848
        %v1981 = vunpack.c.l.b16 %v1849
        %v1982 = vunpack.c.l.b16 %v1850
        %v1983 = vunpack.c.l.b16 %v1851
        %v1984 = vunpack.c.l.b16 %v1852
        %v1985 = vunpack.c.l.b16 %v1853
        %v1986 = vunpack.c.l.b16 %v1854
        %v1987 = vunpack.c.l.b16 %v1855
        %v1988 = vunpack.c.l.b16 %v1856
        %v1989 = vunpack.c.l.b16 %v1857
        %v1990 = vunpack.c.l.b16 %v1858
        %v1991 = vunpack.c.l.b16 %v1859
        %v1992 = vunpack.c.l.b16 %v1860
        %v1993 = vunpack.c.l.b16 %v1861
        %v1994 = vunpack.c.l.b16 %v1862
        %v1995 = vunpack.c.l.b16 %v1863
        %v1996 = vunpack.c.l.b16 %v1864
        %v1997 = vunpack.c.l.b16 %v1865
        %v1998 = vpack.c.b16 %v1935, %v1934
        %v1999 = vpack.c.b16 %v1937, %v1936
        %v2000 = vpack.c.b16 %v1939, %v1938
        %v2001 = vpack.c.b16 %v1941, %v1940
        %v2002 = vpack.c.b16 %v1943, %v1942
        %v2003 = vpack.c.b16 %v1945, %v1944
        %v2004 = vpack.c.b16 %v1947, %v1946
        %v2005 = vpack.c.b16 %v1949, %v1948
        %v2006 = vpack.c.b16 %v1951, %v1950
        %v2007 = vpack.c.b16 %v1953, %v1952
        %v2008 = vpack.c.b16 %v1955, %v1954
        %v2009 = vpack.c.b16 %v1957, %v1956
        %v2010 = vpack.c.b16 %v1959, %v1958
        %v2011 = vpack.c.b16 %v1961, %v1960
        %v2012 = vpack.c.b16 %v1963, %v1962
        %v2013 = vpack.c.b16 %v1965, %v1964
        %v2014 = vpack.c.b16 %v1967, %v1966
        %v2015 = vpack.c.b16 %v1969, %v1968
        %v2016 = vpack.c.b16 %v1971, %v1970
        %v2017 = vpack.c.b16 %v1973, %v1972
        %v2018 = vpack.c.b16 %v1975, %v1974
        %v2019 = vpack.c.b16 %v1977, %v1976
        %v2020 = vpack.c.b16 %v1979, %v1978
        %v2021 = vpack.c.b16 %v1981, %v1980
        %v2022 = vpack.c.b16 %v1983, %v1982
        %v2023 = vpack.c.b16 %v1985, %v1984
        %v2024 = vpack.c.b16 %v1987, %v1986
        %v2025 = vpack.c.b16 %v1989, %v1988
        %v2026 = vpack.c.b16 %v1991, %v1990
        %v2027 = vpack.c.b16 %v1993, %v1992
        %v2028 = vpack.c.b16 %v1995, %v1994
        %v2029 = vpack.c.b16 %v1997, %v1996
        %2062 = vmatpush.bf16.msra.mxu0 %v2005
        %2063 = vmatpush.bf16.msra.mxu0 %v2004
        %2064 = vmatpush.bf16.msra.mxu0 %v2003
        %2065 = vmatpush.bf16.msra.mxu0 %v2002
        %2066 = vmatpush.bf16.msra.mxu0 %v2001
        %2067 = vmatpush.bf16.msra.mxu0 %v2000
        %2068 = vmatpush.bf16.msra.mxu0 %v1999
        %2069 = vmatpush.bf16.msra.mxu0 %v1998
        %2070 = vmatmul.bf16.gmra.mxu0 %v1798
        %v2071 = vpop.f32.mrf.mxu0
        %v2072 = vadd.f32 %v1868, %v2071
        %v2073 = vpop.f32.mrf.mxu0
        %v2074 = vadd.f32 %v1868, %v2073
        %2075 = vdwg.mxu0
        %2076 = vmatpush.bf16.msra.mxu0 %v2013
        %2077 = vmatpush.bf16.msra.mxu0 %v2012
        %2078 = vmatpush.bf16.msra.mxu0 %v2011
        %2079 = vmatpush.bf16.msra.mxu0 %v2010
        %2080 = vmatpush.bf16.msra.mxu0 %v2009
        %2081 = vmatpush.bf16.msra.mxu0 %v2008
        %2082 = vmatpush.bf16.msra.mxu0 %v2007
        %2083 = vmatpush.bf16.msra.mxu0 %v2006
        %2084 = vmatmul.bf16.gmra.mxu0 %v1799
        %v2085 = vpop.f32.mrf.mxu0
        %v2086 = vadd.f32 %v2072, %v2085
        %v2087 = vpop.f32.mrf.mxu0
        %v2088 = vadd.f32 %v2074, %v2087
        %2089 = vdwg.mxu0
        %2090 = vmatpush.bf16.msra.mxu0 %v2021
        %2091 = vmatpush.bf16.msra.mxu0 %v2020
        %2092 = vmatpush.bf16.msra.mxu0 %v2019
        %2093 = vmatpush.bf16.msra.mxu0 %v2018
        %2094 = vmatpush.bf16.msra.mxu0 %v2017
        %2095 = vmatpush.bf16.msra.mxu0 %v2016
        %2096 = vmatpush.bf16.msra.mxu0 %v2015
        %2097 = vmatpush.bf16.msra.mxu0 %v2014
        %2098 = vmatmul.bf16.gmra.mxu0 %v1800
        %v2099 = vpop.f32.mrf.mxu0
        %v2100 = vadd.f32 %v2086, %v2099
        %v2101 = vpop.f32.mrf.mxu0
        %v2102 = vadd.f32 %v2088, %v2101
        %2103 = vdwg.mxu0
        %2104 = vmatpush.bf16.msra.mxu0 %v2029
        %2105 = vmatpush.bf16.msra.mxu0 %v2028
        %2106 = vmatpush.bf16.msra.mxu0 %v2027
        %2107 = vmatpush.bf16.msra.mxu0 %v2026
        %2108 = vmatpush.bf16.msra.mxu0 %v2025
        %2109 = vmatpush.bf16.msra.mxu0 %v2024
        %2110 = vmatpush.bf16.msra.mxu0 %v2023
        %2111 = vmatpush.bf16.msra.mxu0 %v2022
        %2112 = vmatmul.bf16.gmra.mxu0 %v1801
        %v2113 = vpop.f32.mrf.mxu0
        %v2114 = vadd.f32 %v2100, %v2113
        %v2115 = vpop.f32.mrf.mxu0
        %v2116 = vadd.f32 %v2102, %v2115
        %2117 = vdwg.mxu0
        %v2118 = vadd.f32 %v1477, %v2114
        %v2119 = vadd.f32 %v1478, %v2116
        %2120 = vst [vmem:[%s582] sm:$0xff] %v2118
        %2121 = vst [vmem:[%s582 + $0x8] sm:$0xff] %v2119
        %s2122 = sand.u32 %s341, 1
        %s2123 = scalar_lea.sflag [#allocation4], %s2122
        %s2124 = sand.u32 %s341, 1
        %s2125 = smul.addr %s2124, 16
        %s2126 = scalar_lea.vmem [#allocation14], %s2125
        // Predicated region
        $region105: #{tpu_custom_call.1} parent=75 // pred_check
          %p2127 = pneg %p351
        $region106: #{tpu_custom_call.1} parent=75 // pred_check_branch
          %2129 = sbr.rel (%p2127) target = $region108
        $region107: #{tpu_custom_call.1} parent=75 // pred_region
          %s2130 = smul.u32 2, %s34
          %2132 = vsyncadd %s2123, 0
          %s2133 = smul.addr %s2130, 8
          %s2134 = scalar_lea.hbm %s14, %s2133
          %s2135 = sshll.u32 %s2126, 4
          %s2136 = int_to_ptr.vmem [resolvable:$true] %s2135
          %s2137 = sshll.u32 %s2134, 4
          %s2138 = int_to_ptr.hbm [resolvable:$true] %s2137
          %2143 = dma.vmem_to_hbm [thread:$0]  %s2136, 256, %s2138, %s2123, 128, 128, 8
        $region108: #{tpu_custom_call.1} parent=75 // pred_fallthru
          _
      $region76: #{tpu_custom_call.1} parent=5 // pred_fallthru
        _
      %p2144 = scmp.le.s32.totalorder 2, %s29
      // Predicated region
      $region109: #{tpu_custom_call.1} parent=5 // pred_check
        %p2145 = pneg %p2144
      $region110: #{tpu_custom_call.1} parent=5 // pred_check_branch
        %2147 = sbr.rel (%p2145) target = $region112
      $region111: #{tpu_custom_call.1} parent=5 // pred_region
        %s2148 = ssub.s32 %s29, 2
        // Predicated region
        $region113: #{tpu_custom_call.1} parent=111 // pred_check
          %p2149 = pneg %p357
        $region114: #{tpu_custom_call.1} parent=111 // pred_check_branch
          %2151 = sbr.rel (%p2149) target = $region116
        $region115: #{tpu_custom_call.1} parent=111 // pred_region
          %s2152 = sand.u32 %s342, 1
          %s2153 = scalar_lea.sflag [#allocation4], %s2152
          %s2154 = sand.u32 %s342, 1
          %s2155 = smul.addr %s2154, 16
          %s2156 = scalar_lea.vmem [#allocation14], %s2155
          %2158 = dma.done %s2153, 256
        $region116: #{tpu_custom_call.1} parent=111 // pred_fallthru
          _
      $region112: #{tpu_custom_call.1} parent=5 // pred_fallthru
        _
    $region6: #{tpu_custom_call.1} parent=1 // loop_footer
      %s33 = sadd.s32 1, %s29
    $region7: #{tpu_custom_call.1} parent=1 // loop_footer_branch
      %28 = sbr.rel target = $region3
    $region8: #{tpu_custom_call.1} parent=1 // loop_exit
      _
    %2159 = vsyncpa [#allocation3], 1
    %s2160 = scalar_lea.sflag [#allocation3], 1
    %2161 = vsyncpa %s2160, 1
    %2162 = vsyncpa [#allocation6], 1
    %2163 = vsyncpa [#allocation9], 1
    %2164 = vsyncpa [#allocation12], 1
    %2165 = vsyncpa [#allocation4], 1
    %s2166 = scalar_lea.sflag [#allocation4], 1
    %2167 = vsyncpa %s2166, 1

// kernel: tpu_custom_call.1
$region0: #{tpu_custom_call.1}
  #allocation0 [shape = 'u32[]', space=smem, size = 0x4, offset = 0x4, fixed_abs, tag = 'smem constant byte address 0x4 - core index']
  #allocation1 [shape = 'u32[72,128]{1,0:T(1,128)}', space=vmem, size = 0x9000, scoped, tag = 'internal scratch']
  %s0 = inlined_call_operand.hbm [shape: f32[4,8,128], index: 0, kind: input, shape index: {}]
  %s1 = inlined_call_operand.hbm [shape: f32[8,8], index: 1, kind: input, shape index: {}]
  %s2 = inlined_call_operand.hbm [shape: bf16[128,384], index: 2, kind: input, shape index: {}]
  %s3 = inlined_call_operand.hbm [shape: f32[1,384], index: 3, kind: input, shape index: {}]
  %s4 = inlined_call_operand.hbm [shape: bf16[128,128], index: 4, kind: input, shape index: {}]
  %s5 = inlined_call_operand.vmem [shape: f32[1,128], index: 5, kind: input, shape index: {}]
  %s6 = inlined_call_operand.hbm [shape: bf16[128,512], index: 6, kind: input, shape index: {}]
  %s7 = inlined_call_operand.vmem [shape: f32[1,512], index: 7, kind: input, shape index: {}]
  %s8 = inlined_call_operand.hbm [shape: bf16[512,128], index: 8, kind: input, shape index: {}]
  %s9 = inlined_call_operand.vmem [shape: f32[1,128], index: 9, kind: input, shape index: {}]
  %s10 = inlined_call_operand.vmem [shape: f32[1,128], index: 10, kind: input, shape index: {}]
  %s11 = inlined_call_operand.vmem [shape: f32[1,128], index: 11, kind: input, shape index: {}]
  %s12 = inlined_call_operand.vmem [shape: f32[1,128], index: 12, kind: input, shape index: {}]
  %s13 = inlined_call_operand.vmem [shape: f32[1,128], index: 13, kind: input, shape index: {}]
  %s14 = inlined_call_operand.hbm [shape: f32[4,8,128], index: 14, kind: output, shape index: {}]
  %s15 = sld [smem:[#allocation0]]
  $region117: #{tpu_custom_call.1} parent=0
    _
  %s17 = ssub.s32 1, %s15
  %s18 = scalar_select 0, %s17, %s15
  $region1: #{tpu_custom_call.1} parent=0
    #allocation2 [shape = 'u8[16384]{0}', space=vmem, size = 0x4000, scoped, tag = 'input window, operand 0']
    #allocation3 [shape = 's32[2]{0}', space=sflag, size = 0x8, scoped, tag = 'scoped memory for tpu_custom_call.1']
    #allocation4 [shape = 's32[2]{0}', space=sflag, size = 0x8, scoped, tag = 'scoped memory for tpu_custom_call.1']
    #allocation5 [shape = 'u8[4096]{0}', space=vmem, size = 0x1000, scoped, tag = 'input window, operand 1, single buffered']
    #allocation6 [shape = 's32[1]{0}', space=sflag, size = 0x4, scoped, tag = 'scoped memory for tpu_custom_call.1']
    #allocation7 [shape = 'u8[98304]{0}', space=vmem, size = 0x18000, scoped, tag = 'input window, operand 2, single buffered']
    #allocation8 [shape = 'u8[1536]{0}', space=vmem, size = 0x800, scoped, tag = 'input window, operand 3, single buffered']
    #allocation9 [shape = 's32[1]{0}', space=sflag, size = 0x4, scoped, tag = 'scoped memory for tpu_custom_call.1']
    #allocation10 [shape = 'u8[32768]{0}', space=vmem, size = 0x8000, scoped, tag = 'input window, operand 4, single buffered']
    #allocation11 [shape = 'u8[131072]{0}', space=vmem, size = 0x20000, scoped, tag = 'input window, operand 6, single buffered']
    #allocation12 [shape = 's32[1]{0}', space=sflag, size = 0x4, scoped, tag = 'scoped memory for tpu_custom_call.1']
    #allocation13 [shape = 'u8[131072]{0}', space=vmem, size = 0x20000, scoped, tag = 'input window, operand 8, single buffered']
    #allocation14 [shape = 'u8[16384]{0}', space=vmem, size = 0x4000, scoped, tag = 'output window, operand 0']
    %19 = vsyncpa [#allocation3], 0
    %s20 = scalar_lea.sflag [#allocation3], 1
    %21 = vsyncpa %s20, 0
    %22 = vsyncpa [#allocation6], 0
    %23 = vsyncpa [#allocation9], 0
    %24 = vsyncpa [#allocation12], 0
    %25 = vsyncpa [#allocation4], 0
    %s26 = scalar_lea.sflag [#allocation4], 1
    %27 = vsyncpa %s26, 0
    loop: start=0, step=1, limit=4
    $region2: #{tpu_custom_call.1} parent=1 // loop_pre_header
      _
    $region3: #{tpu_custom_call.1} parent=1 // loop_header
      %s29 = sphi 0, %s33
      %p30 = scmp.ge.s32.totalorder %s29, 4
      %s39 = sphi 0, %s41
      %s42 = sphi 0, %s39
      %s43 = sphi 0, %s42
      %s59 = sphi 0, %s43
      %s63 = sphi 0, %s63
      %s65 = sphi 0, %s63
      %s66 = sphi 0, %s65
      %s80 = sphi 0, %s66
      %s84 = sphi 0, %s84
      %s86 = sphi 0, %s84
      %s87 = sphi 0, %s86
      %s101 = sphi 0, %s87
      %s105 = sphi 0, %s105
      %s107 = sphi 0, %s105
      %s108 = sphi 0, %s107
      %s122 = sphi 0, %s108
      %s126 = sphi 0, %s126
      %s128 = sphi 0, %s126
      %s129 = sphi 0, %s128
      %s143 = sphi 0, %s129
      %s147 = sphi 0, %s147
      %s149 = sphi 0, %s147
      %s150 = sphi 0, %s149
      %s164 = sphi 0, %s150
      %s168 = sphi 0, %s168
      %s170 = sphi 0, %s168
      %s171 = sphi 0, %s170
      %s185 = sphi 0, %s171
      %s189 = sphi 0, %s189
      %s191 = sphi 0, %s189
      %s192 = sphi 0, %s191
      %s206 = sphi 0, %s192
      %s210 = sphi 0, %s210
      %s212 = sphi 0, %s210
      %s213 = sphi 0, %s212
      %s227 = sphi 0, %s213
      %s231 = sphi 0, %s231
      %s233 = sphi 0, %s231
      %s234 = sphi 0, %s233
      %s248 = sphi 0, %s234
      %s252 = sphi 0, %s252
      %s254 = sphi 0, %s252
      %s255 = sphi 0, %s254
      %s269 = sphi 0, %s255
      %s273 = sphi 0, %s273
      %s275 = sphi 0, %s273
      %s276 = sphi 0, %s275
      %s290 = sphi 0, %s276
      %s294 = sphi 0, %s294
      %s296 = sphi 0, %s294
      %s297 = sphi 0, %s296
      %s311 = sphi 0, %s297
      %s315 = sphi 0, %s315
      %s317 = sphi 0, %s315
      %s318 = sphi 0, %s317
      %s332 = sphi 0, %s318
      %s338 = sphi 0, %s340
      %s341 = sphi 0, %s338
      %s342 = sphi 0, %s341
      %s358 = sphi 0, %s342
    $region4: #{tpu_custom_call.1} parent=1 // loop_header_branch
      %32 = sbr.rel (%p30) target = $region8
    $region5: #{tpu_custom_call.1} parent=1 // loop_body
      %s34 = ssub.s32 %s29, 1
      %s35 = ssub.s32 %s29, 2
      %s36 = sadd.s32 %s29, 1
      %s37 = ssub.s32 %s29, %s36
      %p38 = scmp.eq.s32.totalorder %s37, 0
      %s40 = sadd.s32 %s39, 1
      %s41 = scalar_select %p38, %s39, %s40
      %p44 = pneg %p38
      %p45 = scmp.eq.s32.totalorder %s29, 1
      %p46 = por %p44, %p45
      %p47 = scmp.ne.s32.totalorder %s39, %s42
      %p48 = scmp.eq.s32.totalorder %s29, 0
      %p49 = por %p47, %p48
      %p50 = scmp.ne.s32.totalorder %s39, %s42
      %p51 = scmp.eq.s32.totalorder %s34, 1
      %p52 = por %p50, %p51
      %p53 = scmp.ne.s32.totalorder %s42, %s43
      %p54 = scmp.eq.s32.totalorder %s34, 0
      %p55 = por %p53, %p54
      %p56 = scmp.ne.s32.totalorder %s42, %s43
      %p57 = scmp.eq.s32.totalorder %s35, 1
      %p58 = por %p56, %p57
      %p60 = scmp.ne.s32.totalorder %s43, %s59
      %p61 = scmp.eq.s32.totalorder %s35, 0
      %p62 = por %p60, %p61
      %s64 = sadd.s32 %s63, 1
      %p67 = scmp.eq.s32.totalorder %s29, 1
      %p68 = scmp.ne.s32.totalorder %s63, %s65
      %p69 = scmp.eq.s32.totalorder %s29, 0
      %p70 = por %p68, %p69
      %p71 = scmp.ne.s32.totalorder %s63, %s65
      %p72 = scmp.eq.s32.totalorder %s34, 1
      %p73 = por %p71, %p72
      %p74 = scmp.ne.s32.totalorder %s65, %s66
      %p75 = scmp.eq.s32.totalorder %s34, 0
      %p76 = por %p74, %p75
      %p77 = scmp.ne.s32.totalorder %s65, %s66
      %p78 = scmp.eq.s32.totalorder %s35, 1
      %p79 = por %p77, %p78
      %p81 = scmp.ne.s32.totalorder %s66, %s80
      %p82 = scmp.eq.s32.totalorder %s35, 0
      %p83 = por %p81, %p82
      %s85 = sadd.s32 %s84, 1
      %p88 = scmp.eq.s32.totalorder %s29, 1
      %p89 = scmp.ne.s32.totalorder %s84, %s86
      %p90 = scmp.eq.s32.totalorder %s29, 0
      %p91 = por %p89, %p90
      %p92 = scmp.ne.s32.totalorder %s84, %s86
      %p93 = scmp.eq.s32.totalorder %s34, 1
      %p94 = por %p92, %p93
      %p95 = scmp.ne.s32.totalorder %s86, %s87
      %p96 = scmp.eq.s32.totalorder %s34, 0
      %p97 = por %p95, %p96
      %p98 = scmp.ne.s32.totalorder %s86, %s87
      %p99 = scmp.eq.s32.totalorder %s35, 1
      %p100 = por %p98, %p99
      %p102 = scmp.ne.s32.totalorder %s87, %s101
      %p103 = scmp.eq.s32.totalorder %s35, 0
      %p104 = por %p102, %p103
      %s106 = sadd.s32 %s105, 1
      %p109 = scmp.eq.s32.totalorder %s29, 1
      %p110 = scmp.ne.s32.totalorder %s105, %s107
      %p111 = scmp.eq.s32.totalorder %s29, 0
      %p112 = por %p110, %p111
      %p113 = scmp.ne.s32.totalorder %s105, %s107
      %p114 = scmp.eq.s32.totalorder %s34, 1
      %p115 = por %p113, %p114
      %p116 = scmp.ne.s32.totalorder %s107, %s108
      %p117 = scmp.eq.s32.totalorder %s34, 0
      %p118 = por %p116, %p117
      %p119 = scmp.ne.s32.totalorder %s107, %s108
      %p120 = scmp.eq.s32.totalorder %s35, 1
      %p121 = por %p119, %p120
      %p123 = scmp.ne.s32.totalorder %s108, %s122
      %p124 = scmp.eq.s32.totalorder %s35, 0
      %p125 = por %p123, %p124
      %s127 = sadd.s32 %s126, 1
      %p130 = scmp.eq.s32.totalorder %s29, 1
      %p131 = scmp.ne.s32.totalorder %s126, %s128
      %p132 = scmp.eq.s32.totalorder %s29, 0
      %p133 = por %p131, %p132
      %p134 = scmp.ne.s32.totalorder %s126, %s128
      %p135 = scmp.eq.s32.totalorder %s34, 1
      %p136 = por %p134, %p135
      %p137 = scmp.ne.s32.totalorder %s128, %s129
      %p138 = scmp.eq.s32.totalorder %s34, 0
      %p139 = por %p137, %p138
      %p140 = scmp.ne.s32.totalorder %s128, %s129
      %p141 = scmp.eq.s32.totalorder %s35, 1
      %p142 = por %p140, %p141
      %p144 = scmp.ne.s32.totalorder %s129, %s143
      %p145 = scmp.eq.s32.totalorder %s35, 0
      %p146 = por %p144, %p145
      %s148 = sadd.s32 %s147, 1
      %p151 = scmp.eq.s32.totalorder %s29, 1
      %p152 = scmp.ne.s32.totalorder %s147, %s149
      %p153 = scmp.eq.s32.totalorder %s29, 0
      %p154 = por %p152, %p153
      %p155 = scmp.ne.s32.totalorder %s147, %s149
      %p156 = scmp.eq.s32.totalorder %s34, 1
      %p157 = por %p155, %p156
      %p158 = scmp.ne.s32.totalorder %s149, %s150
      %p159 = scmp.eq.s32.totalorder %s34, 0
      %p160 = por %p158, %p159
      %p161 = scmp.ne.s32.totalorder %s149, %s150
      %p162 = scmp.eq.s32.totalorder %s35, 1
      %p163 = por %p161, %p162
      %p165 = scmp.ne.s32.totalorder %s150, %s164
      %p166 = scmp.eq.s32.totalorder %s35, 0
      %p167 = por %p165, %p166
      %s169 = sadd.s32 %s168, 1
      %p172 = scmp.eq.s32.totalorder %s29, 1
      %p173 = scmp.ne.s32.totalorder %s168, %s170
      %p174 = scmp.eq.s32.totalorder %s29, 0
      %p175 = por %p173, %p174
      %p176 = scmp.ne.s32.totalorder %s168, %s170
      %p177 = scmp.eq.s32.totalorder %s34, 1
      %p178 = por %p176, %p177
      %p179 = scmp.ne.s32.totalorder %s170, %s171
      %p180 = scmp.eq.s32.totalorder %s34, 0
      %p181 = por %p179, %p180
      %p182 = scmp.ne.s32.totalorder %s170, %s171
      %p183 = scmp.eq.s32.totalorder %s35, 1
      %p184 = por %p182, %p183
      %p186 = scmp.ne.s32.totalorder %s171, %s185
      %p187 = scmp.eq.s32.totalorder %s35, 0
      %p188 = por %p186, %p187
      %s190 = sadd.s32 %s189, 1
      %p193 = scmp.eq.s32.totalorder %s29, 1
      %p194 = scmp.ne.s32.totalorder %s189, %s191
      %p195 = scmp.eq.s32.totalorder %s29, 0
      %p196 = por %p194, %p195
      %p197 = scmp.ne.s32.totalorder %s189, %s191
      %p198 = scmp.eq.s32.totalorder %s34, 1
      %p199 = por %p197, %p198
      %p200 = scmp.ne.s32.totalorder %s191, %s192
      %p201 = scmp.eq.s32.totalorder %s34, 0
      %p202 = por %p200, %p201
      %p203 = scmp.ne.s32.totalorder %s191, %s192
      %p204 = scmp.eq.s32.totalorder %s35, 1
      %p205 = por %p203, %p204
      %p207 = scmp.ne.s32.totalorder %s192, %s206
      %p208 = scmp.eq.s32.totalorder %s35, 0
      %p209 = por %p207, %p208
      %s211 = sadd.s32 %s210, 1
      %p214 = scmp.eq.s32.totalorder %s29, 1
      %p215 = scmp.ne.s32.totalorder %s210, %s212
      %p216 = scmp.eq.s32.totalorder %s29, 0
      %p217 = por %p215, %p216
      %p218 = scmp.ne.s32.totalorder %s210, %s212
      %p219 = scmp.eq.s32.totalorder %s34, 1
      %p220 = por %p218, %p219
      %p221 = scmp.ne.s32.totalorder %s212, %s213
      %p222 = scmp.eq.s32.totalorder %s34, 0
      %p223 = por %p221, %p222
      %p224 = scmp.ne.s32.totalorder %s212, %s213
      %p225 = scmp.eq.s32.totalorder %s35, 1
      %p226 = por %p224, %p225
      %p228 = scmp.ne.s32.totalorder %s213, %s227
      %p229 = scmp.eq.s32.totalorder %s35, 0
      %p230 = por %p228, %p229
      %s232 = sadd.s32 %s231, 1
      %p235 = scmp.eq.s32.totalorder %s29, 1
      %p236 = scmp.ne.s32.totalorder %s231, %s233
      %p237 = scmp.eq.s32.totalorder %s29, 0
      %p238 = por %p236, %p237
      %p239 = scmp.ne.s32.totalorder %s231, %s233
      %p240 = scmp.eq.s32.totalorder %s34, 1
      %p241 = por %p239, %p240
      %p242 = scmp.ne.s32.totalorder %s233, %s234
      %p243 = scmp.eq.s32.totalorder %s34, 0
      %p244 = por %p242, %p243
      %p245 = scmp.ne.s32.totalorder %s233, %s234
      %p246 = scmp.eq.s32.totalorder %s35, 1
      %p247 = por %p245, %p246
      %p249 = scmp.ne.s32.totalorder %s234, %s248
      %p250 = scmp.eq.s32.totalorder %s35, 0
      %p251 = por %p249, %p250
      %s253 = sadd.s32 %s252, 1
      %p256 = scmp.eq.s32.totalorder %s29, 1
      %p257 = scmp.ne.s32.totalorder %s252, %s254
      %p258 = scmp.eq.s32.totalorder %s29, 0
      %p259 = por %p257, %p258
      %p260 = scmp.ne.s32.totalorder %s252, %s254
      %p261 = scmp.eq.s32.totalorder %s34, 1
      %p262 = por %p260, %p261
      %p263 = scmp.ne.s32.totalorder %s254, %s255
      %p264 = scmp.eq.s32.totalorder %s34, 0
      %p265 = por %p263, %p264
      %p266 = scmp.ne.s32.totalorder %s254, %s255
      %p267 = scmp.eq.s32.totalorder %s35, 1
      %p268 = por %p266, %p267
      %p270 = scmp.ne.s32.totalorder %s255, %s269
      %p271 = scmp.eq.s32.totalorder %s35, 0
      %p272 = por %p270, %p271
      %s274 = sadd.s32 %s273, 1
      %p277 = scmp.eq.s32.totalorder %s29, 1
      %p278 = scmp.ne.s32.totalorder %s273, %s275
      %p279 = scmp.eq.s32.totalorder %s29, 0
      %p280 = por %p278, %p279
      %p281 = scmp.ne.s32.totalorder %s273, %s275
      %p282 = scmp.eq.s32.totalorder %s34, 1
      %p283 = por %p281, %p282
      %p284 = scmp.ne.s32.totalorder %s275, %s276
      %p285 = scmp.eq.s32.totalorder %s34, 0
      %p286 = por %p284, %p285
      %p287 = scmp.ne.s32.totalorder %s275, %s276
      %p288 = scmp.eq.s32.totalorder %s35, 1
      %p289 = por %p287, %p288
      %p291 = scmp.ne.s32.totalorder %s276, %s290
      %p292 = scmp.eq.s32.totalorder %s35, 0
      %p293 = por %p291, %p292
      %s295 = sadd.s32 %s294, 1
      %p298 = scmp.eq.s32.totalorder %s29, 1
      %p299 = scmp.ne.s32.totalorder %s294, %s296
      %p300 = scmp.eq.s32.totalorder %s29, 0
      %p301 = por %p299, %p300
      %p302 = scmp.ne.s32.totalorder %s294, %s296
      %p303 = scmp.eq.s32.totalorder %s34, 1
      %p304 = por %p302, %p303
      %p305 = scmp.ne.s32.totalorder %s296, %s297
      %p306 = scmp.eq.s32.totalorder %s34, 0
      %p307 = por %p305, %p306
      %p308 = scmp.ne.s32.totalorder %s296, %s297
      %p309 = scmp.eq.s32.totalorder %s35, 1
      %p310 = por %p308, %p309
      %p312 = scmp.ne.s32.totalorder %s297, %s311
      %p313 = scmp.eq.s32.totalorder %s35, 0
      %p314 = por %p312, %p313
      %s316 = sadd.s32 %s315, 1
      %p319 = scmp.eq.s32.totalorder %s29, 1
      %p320 = scmp.ne.s32.totalorder %s315, %s317
      %p321 = scmp.eq.s32.totalorder %s29, 0
      %p322 = por %p320, %p321
      %p323 = scmp.ne.s32.totalorder %s315, %s317
      %p324 = scmp.eq.s32.totalorder %s34, 1
      %p325 = por %p323, %p324
      %p326 = scmp.ne.s32.totalorder %s317, %s318
      %p327 = scmp.eq.s32.totalorder %s34, 0
      %p328 = por %p326, %p327
      %p329 = scmp.ne.s32.totalorder %s317, %s318
      %p330 = scmp.eq.s32.totalorder %s35, 1
      %p331 = por %p329, %p330
      %p333 = scmp.ne.s32.totalorder %s318, %s332
      %p334 = scmp.eq.s32.totalorder %s35, 0
      %p335 = por %p333, %p334
      %s336 = ssub.s32 %s29, %s36
      %p337 = scmp.eq.s32.totalorder %s336, 0
      %s339 = sadd.s32 %s338, 1
      %s340 = scalar_select %p337, %s338, %s339
      %p343 = pneg %p337
      %p344 = scmp.eq.s32.totalorder %s29, 1
      %p345 = por %p343, %p344
      %p346 = scmp.ne.s32.totalorder %s338, %s341
      %p347 = scmp.eq.s32.totalorder %s29, 0
      %p348 = por %p346, %p347
      %p349 = scmp.ne.s32.totalorder %s338, %s341
      %p350 = scmp.eq.s32.totalorder %s34, 1
      %p351 = por %p349, %p350
      %p352 = scmp.ne.s32.totalorder %s341, %s342
      %p353 = scmp.eq.s32.totalorder %s34, 0
      %p354 = por %p352, %p353
      %p355 = scmp.ne.s32.totalorder %s341, %s342
      %p356 = scmp.eq.s32.totalorder %s35, 1
      %p357 = por %p355, %p356
      %p359 = scmp.ne.s32.totalorder %s342, %s358
      %p360 = scmp.eq.s32.totalorder %s35, 0
      %p361 = por %p359, %p360
      %p362 = scmp.le.s32.totalorder 1, %s29
      %p363 = scmp.lt.s32.totalorder %s29, 3
      %p364 = pnand %p362, %p363
      %p365 = pneg %p364
      // Predicated region
      $region9: #{tpu_custom_call.1} parent=5 // pred_check
        _
      $region10: #{tpu_custom_call.1} parent=5 // pred_check_branch
        %367 = sbr.rel (%p364) target = $region12
      $region11: #{tpu_custom_call.1} parent=5 // pred_region
        %s368 = ssub.s32 %s29, 1
        // Predicated region
        $region13: #{tpu_custom_call.1} parent=11 // pred_check
          %p369 = pneg %p76
        $region14: #{tpu_custom_call.1} parent=11 // pred_check_branch
          %371 = sbr.rel (%p369) target = $region16
        $region15: #{tpu_custom_call.1} parent=11 // pred_region
          %373 = vsyncadd [#allocation6], 0
          %s375 = sshll.u32 %s1, 4
          %s376 = int_to_ptr.hbm [resolvable:$true] %s375
          %s377 = sshll.u32 [#allocation5], 4
          %s378 = int_to_ptr.vmem [resolvable:$true] %s377
          %380 = dma.hbm_to_vmem [thread:$0]  %s376, 128, %s378, [#allocation6]
        $region16: #{tpu_custom_call.1} parent=11 // pred_fallthru
          _
        // Predicated region
        $region17: #{tpu_custom_call.1} parent=11 // pred_check
          %p381 = pneg %p97
        $region18: #{tpu_custom_call.1} parent=11 // pred_check_branch
          %383 = sbr.rel (%p381) target = $region20
        $region19: #{tpu_custom_call.1} parent=11 // pred_region
          %385 = vsyncadd [#allocation6], 0
          %s386 = sshll.u32 %s2, 4
          %s387 = int_to_ptr.hbm [resolvable:$true] %s386
          %s388 = sshll.u32 [#allocation7], 4
          %s389 = int_to_ptr.vmem [resolvable:$true] %s388
          %394 = dma.hbm_to_vmem [thread:$0]  %s387, 3072, %s389, [#allocation6], 192, 192, 12
        $region20: #{tpu_custom_call.1} parent=11 // pred_fallthru
          _
        // Predicated region
        $region21: #{tpu_custom_call.1} parent=11 // pred_check
          %p395 = pneg %p118
        $region22: #{tpu_custom_call.1} parent=11 // pred_check_branch
          %397 = sbr.rel (%p395) target = $region24
        $region23: #{tpu_custom_call.1} parent=11 // pred_region
          %399 = vsyncadd [#allocation9], 0
          %s401 = sshll.u32 %s3, 4
          %s402 = int_to_ptr.hbm [resolvable:$true] %s401
          %s403 = sshll.u32 [#allocation8], 4
          %s404 = int_to_ptr.vmem [resolvable:$true] %s403
          %406 = dma.hbm_to_vmem [thread:$0]  %s402, 48, %s404, [#allocation9]
        $region24: #{tpu_custom_call.1} parent=11 // pred_fallthru
          _
        // Predicated region
        $region25: #{tpu_custom_call.1} parent=11 // pred_check
          %p407 = pneg %p139
        $region26: #{tpu_custom_call.1} parent=11 // pred_check_branch
          %409 = sbr.rel (%p407) target = $region28
        $region27: #{tpu_custom_call.1} parent=11 // pred_region
          %411 = vsyncadd [#allocation9], 0
          %s412 = sshll.u32 %s4, 4
          %s413 = int_to_ptr.hbm [resolvable:$true] %s412
          %s414 = sshll.u32 [#allocation10], 4
          %s415 = int_to_ptr.vmem [resolvable:$true] %s414
          %420 = dma.hbm_to_vmem [thread:$0]  %s413, 1024, %s415, [#allocation9], 64, 64, 4
        $region28: #{tpu_custom_call.1} parent=11 // pred_fallthru
          _
        // Predicated region
        $region29: #{tpu_custom_call.1} parent=11 // pred_check
          %p421 = pneg %p160
        $region30: #{tpu_custom_call.1} parent=11 // pred_check_branch
          %423 = sbr.rel (%p421) target = $region32
        $region31: #{tpu_custom_call.1} parent=11 // pred_region
          _
        $region32: #{tpu_custom_call.1} parent=11 // pred_fallthru
          _
        // Predicated region
        $region33: #{tpu_custom_call.1} parent=11 // pred_check
          %p424 = pneg %p181
        $region34: #{tpu_custom_call.1} parent=11 // pred_check_branch
          %426 = sbr.rel (%p424) target = $region36
        $region35: #{tpu_custom_call.1} parent=11 // pred_region
          %428 = vsyncadd [#allocation12], 0
          %s429 = sshll.u32 %s6, 4
          %s430 = int_to_ptr.hbm [resolvable:$true] %s429
          %s431 = sshll.u32 [#allocation11], 4
          %s432 = int_to_ptr.vmem [resolvable:$true] %s431
          %437 = dma.hbm_to_vmem [thread:$0]  %s430, 4096, %s432, [#allocation12], 256, 256, 16
        $region36: #{tpu_custom_call.1} parent=11 // pred_fallthru
          _
        // Predicated region
        $region37: #{tpu_custom_call.1} parent=11 // pred_check
          %p438 = pneg %p202
        $region38: #{tpu_custom_call.1} parent=11 // pred_check_branch
          %440 = sbr.rel (%p438) target = $region40
        $region39: #{tpu_custom_call.1} parent=11 // pred_region
          _
        $region40: #{tpu_custom_call.1} parent=11 // pred_fallthru
          _
        // Predicated region
        $region41: #{tpu_custom_call.1} parent=11 // pred_check
          %p441 = pneg %p223
        $region42: #{tpu_custom_call.1} parent=11 // pred_check_branch
          %443 = sbr.rel (%p441) target = $region44
        $region43: #{tpu_custom_call.1} parent=11 // pred_region
          %445 = vsyncadd [#allocation12], 0
          %s446 = sshll.u32 %s8, 4
          %s447 = int_to_ptr.hbm [resolvable:$true] %s446
          %s448 = sshll.u32 [#allocation13], 4
          %s449 = int_to_ptr.vmem [resolvable:$true] %s448
          %454 = dma.hbm_to_vmem [thread:$0]  %s447, 4096, %s449, [#allocation12], 64, 64, 4
        $region44: #{tpu_custom_call.1} parent=11 // pred_fallthru
          _
        // Predicated region
        $region45: #{tpu_custom_call.1} parent=11 // pred_check
          %p455 = pneg %p244
        $region46: #{tpu_custom_call.1} parent=11 // pred_check_branch
          %457 = sbr.rel (%p455) target = $region48
        $region47: #{tpu_custom_call.1} parent=11 // pred_region
          _
        $region48: #{tpu_custom_call.1} parent=11 // pred_fallthru
          _
        // Predicated region
        $region49: #{tpu_custom_call.1} parent=11 // pred_check
          %p458 = pneg %p265
        $region50: #{tpu_custom_call.1} parent=11 // pred_check_branch
          %460 = sbr.rel (%p458) target = $region52
        $region51: #{tpu_custom_call.1} parent=11 // pred_region
          _
        $region52: #{tpu_custom_call.1} parent=11 // pred_fallthru
          _
        // Predicated region
        $region53: #{tpu_custom_call.1} parent=11 // pred_check
          %p461 = pneg %p286
        $region54: #{tpu_custom_call.1} parent=11 // pred_check_branch
          %463 = sbr.rel (%p461) target = $region56
        $region55: #{tpu_custom_call.1} parent=11 // pred_region
          _
        $region56: #{tpu_custom_call.1} parent=11 // pred_fallthru
          _
        // Predicated region
        $region57: #{tpu_custom_call.1} parent=11 // pred_check
          %p464 = pneg %p307
        $region58: #{tpu_custom_call.1} parent=11 // pred_check_branch
          %466 = sbr.rel (%p464) target = $region60
        $region59: #{tpu_custom_call.1} parent=11 // pred_region
          _
        $region60: #{tpu_custom_call.1} parent=11 // pred_fallthru
          _
        // Predicated region
        $region61: #{tpu_custom_call.1} parent=11 // pred_check
          %p467 = pneg %p328
        $region62: #{tpu_custom_call.1} parent=11 // pred_check_branch
          %469 = sbr.rel (%p467) target = $region64
        $region63: #{tpu_custom_call.1} parent=11 // pred_region
          _
        $region64: #{tpu_custom_call.1} parent=11 // pred_fallthru
          _
      $region12: #{tpu_custom_call.1} parent=5 // pred_fallthru
        _
      %p470 = scmp.lt.s32.totalorder %s29, 2
      // Predicated region
      $region65: #{tpu_custom_call.1} parent=5 // pred_check
        %p471 = pneg %p470
      $region66: #{tpu_custom_call.1} parent=5 // pred_check_branch
        %473 = sbr.rel (%p471) target = $region68
      $region67: #{tpu_custom_call.1} parent=5 // pred_region
        // Predicated region
        $region69: #{tpu_custom_call.1} parent=67 // pred_check
          %p474 = pneg %p49
        $region70: #{tpu_custom_call.1} parent=67 // pred_check_branch
          %476 = sbr.rel (%p474) target = $region72
        $region71: #{tpu_custom_call.1} parent=67 // pred_region
          %s477 = sand.u32 %s39, 1
          %s478 = scalar_lea.sflag [#allocation3], %s477
          %s479 = sand.u32 %s39, 1
          %s480 = smul.addr %s479, 16
          %s481 = scalar_lea.vmem [#allocation2], %s480
          %s482 = smul.u32 2, %s29
          %484 = vsyncadd %s478, 0
          %s485 = smul.addr %s482, 8
          %s486 = scalar_lea.hbm %s0, %s485
          %s487 = sshll.u32 %s486, 4
          %s488 = int_to_ptr.hbm [resolvable:$true] %s487
          %s489 = sshll.u32 %s481, 4
          %s490 = int_to_ptr.vmem [resolvable:$true] %s489
          %495 = dma.hbm_to_vmem [thread:$0]  %s488, 256, %s490, %s478, 128, 128, 8
        $region72: #{tpu_custom_call.1} parent=67 // pred_fallthru
          _
      $region68: #{tpu_custom_call.1} parent=5 // pred_fallthru
        _
      %p496 = scmp.le.s32.totalorder 1, %s29
      %p497 = scmp.lt.s32.totalorder %s29, 3
      %p498 = pnand %p496, %p497
      %p499 = pneg %p498
      // Predicated region
      $region73: #{tpu_custom_call.1} parent=5 // pred_check
        _
      $region74: #{tpu_custom_call.1} parent=5 // pred_check_branch
        %501 = sbr.rel (%p498) target = $region76
      $region75: #{tpu_custom_call.1} parent=5 // pred_region
        %s502 = ssub.s32 %s29, 1
        %s503 = sand.u32 %s42, 1
        %s504 = scalar_lea.sflag [#allocation3], %s503
        %s505 = sand.u32 %s42, 1
        %s506 = smul.addr %s505, 16
        %s507 = scalar_lea.vmem [#allocation2], %s506
        // Predicated region
        $region77: #{tpu_custom_call.1} parent=75 // pred_check
          %p508 = pneg %p55
        $region78: #{tpu_custom_call.1} parent=75 // pred_check_branch
          %510 = sbr.rel (%p508) target = $region80
        $region79: #{tpu_custom_call.1} parent=75 // pred_region
          %512 = dma.done %s504, 256
        $region80: #{tpu_custom_call.1} parent=75 // pred_fallthru
          _
        // Predicated region
        $region81: #{tpu_custom_call.1} parent=75 // pred_check
          %p513 = pneg %p76
        $region82: #{tpu_custom_call.1} parent=75 // pred_check_branch
          %515 = sbr.rel (%p513) target = $region84
        $region83: #{tpu_custom_call.1} parent=75 // pred_region
          %517 = dma.done [#allocation6], 128
        $region84: #{tpu_custom_call.1} parent=75 // pred_fallthru
          _
        // Predicated region
        $region85: #{tpu_custom_call.1} parent=75 // pred_check
          %p518 = pneg %p97
        $region86: #{tpu_custom_call.1} parent=75 // pred_check_branch
          %520 = sbr.rel (%p518) target = $region88
        $region87: #{tpu_custom_call.1} parent=75 // pred_region
          %522 = dma.done [#allocation6], 3072
        $region88: #{tpu_custom_call.1} parent=75 // pred_fallthru
          _
        // Predicated region
        $region89: #{tpu_custom_call.1} parent=75 // pred_check
          %p523 = pneg %p118
        $region90: #{tpu_custom_call.1} parent=75 // pred_check_branch
          %525 = sbr.rel (%p523) target = $region92
        $region91: #{tpu_custom_call.1} parent=75 // pred_region
          %527 = dma.done [#allocation9], 48
        $region92: #{tpu_custom_call.1} parent=75 // pred_fallthru
          _
        // Predicated region
        $region93: #{tpu_custom_call.1} parent=75 // pred_check
          %p528 = pneg %p139
        $region94: #{tpu_custom_call.1} parent=75 // pred_check_branch
          %530 = sbr.rel (%p528) target = $region96
        $region95: #{tpu_custom_call.1} parent=75 // pred_region
          %532 = dma.done [#allocation9], 1024
        $region96: #{tpu_custom_call.1} parent=75 // pred_fallthru
          _
        // Predicated region
        $region97: #{tpu_custom_call.1} parent=75 // pred_check
          %p533 = pneg %p181
        $region98: #{tpu_custom_call.1} parent=75 // pred_check_branch
          %535 = sbr.rel (%p533) target = $region100
        $region99: #{tpu_custom_call.1} parent=75 // pred_region
          %537 = dma.done [#allocation12], 4096
        $region100: #{tpu_custom_call.1} parent=75 // pred_fallthru
          _
        // Predicated region
        $region101: #{tpu_custom_call.1} parent=75 // pred_check
          %p538 = pneg %p223
        $region102: #{tpu_custom_call.1} parent=75 // pred_check_branch
          %540 = sbr.rel (%p538) target = $region104
        $region103: #{tpu_custom_call.1} parent=75 // pred_region
          %542 = dma.done [#allocation12], 4096
        $region104: #{tpu_custom_call.1} parent=75 // pred_fallthru
          _
        %s543 = sand.u32 %s42, 1
        %s544 = scalar_lea.sflag [#allocation3], %s543
        %s545 = sand.u32 %s42, 1
        %s546 = smul.addr %s545, 16
        %s547 = scalar_lea.vmem [#allocation2], %s546
        %p548 = pneg %p55
        %p549 = pneg %p52
        %p550 = pneg %p76
        %p551 = pneg %p73
        %p552 = pneg %p97
        %p553 = pneg %p94
        %p554 = pneg %p118
        %p555 = pneg %p115
        %p556 = pneg %p139
        %p557 = pneg %p136
        %p558 = pneg %p160
        %p559 = pneg %p157
        %p560 = pneg %p181
        %p561 = pneg %p178
        %p562 = pneg %p202
        %p563 = pneg %p199
        %p564 = pneg %p223
        %p565 = pneg %p220
        %p566 = pneg %p244
        %p567 = pneg %p241
        %p568 = pneg %p265
        %p569 = pneg %p262
        %p570 = pneg %p286
        %p571 = pneg %p283
        %p572 = pneg %p307
        %p573 = pneg %p304
        %p574 = pneg %p328
        %p575 = pneg %p325
        %p576 = pneg %p354
        %p577 = pneg %p351
        %s578 = sand.u32 %s341, 1
        %s579 = scalar_lea.sflag [#allocation4], %s578
        %s580 = sand.u32 %s341, 1
        %s581 = smul.addr %s580, 16
        %s582 = scalar_lea.vmem [#allocation14], %s581
        %s583 = smul.u32 2, %s34
        %s584 = smul.u32 2, %s34
        %v586 = vld [vmem:[%s507] sm:$0xff]
        %v587 = vld [vmem:[%s507 + $0x8] sm:$0xff]
        %v588 = vld [vmem:[%s10] sm:$0x1]
        %v589 = vld [vmem:[%s11] sm:$0x1]
        %590 = vadd.xlane.f32.xlu0 %v586
        %v591 = vpop.xlane.xlu0 %590
        %592 = vadd.xlane.f32.xlu0 %v587
        %v593 = vpop.xlane.xlu0 %592
        %v594 = vrcp.pop 128.0
        %v595 = vmul.f32 128.0, %v594
        %v596 = vsub.f32 1.0, %v595
        %v597 = vmul.f32 %v594, %v596
        %v598 = vadd.f32 %v594, %v597
        %vm599 = vweird.f32 %v594
        %v600 = vsel %vm599, %v594, %v598
        %v601 = vmul.f32 %v591, %v600
        %v602 = vmul.f32 %v593, %v600
        %v603 = vsub.f32 %v586, %v601
        %v604 = vsub.f32 %v587, %v602
        %v605 = vmul.f32 %v603, %v603
        %v606 = vmul.f32 %v604, %v604
        %607 = vadd.xlane.f32.xlu0 %v605
        %v608 = vpop.xlane.xlu0 %607
        %609 = vadd.xlane.f32.xlu0 %v606
        %v610 = vpop.xlane.xlu0 %609
        %v611 = vmul.f32 %v608, %v600
        %v612 = vmul.f32 %v610, %v600
        %v613 = vadd.f32 %v611, 1e-06
        %v614 = vadd.f32 %v612, 1e-06
        %v615 = vrsqrt.pop %v613
        %v616 = vmul.f32 %v615, %v613
        %v617 = vmul.f32 %v616, %v615
        %v618 = vmul.f32 0.5, %v617
        %v619 = vsub.f32 1.5, %v618
        %v620 = vmul.f32 %v615, %v619
        %vm621 = vweird.f32 %v613
        %vm622 = vweird.f32 %v615
        %vm623 = vmor %vm621, %vm622
        %v624 = vsel %vm623, %v615, %v620
        %v625 = vrsqrt.pop %v614
        %v626 = vmul.f32 %v625, %v614
        %v627 = vmul.f32 %v626, %v625
        %v628 = vmul.f32 0.5, %v627
        %v629 = vsub.f32 1.5, %v628
        %v630 = vmul.f32 %v625, %v629
        %vm631 = vweird.f32 %v614
        %vm632 = vweird.f32 %v625
        %vm633 = vmor %vm631, %vm632
        %v634 = vsel %vm633, %v625, %v630
        %v635 = vmul.f32 %v603, %v624
        %v636 = vmul.f32 %v604, %v634
        %v638 = vperm.slane %v588, 0
        %v640 = vmul.f32 %v635, %v638
        %v641 = vmul.f32 %v636, %v638
        %v643 = vperm.slane %v589, 0
        %v645 = vadd.f32 %v640, %v643
        %v646 = vadd.f32 %v641, %v643
        %v647 = vpack.c.bf16 %v646, %v645
        %v648 = vld [vmem:[#allocation7] sm:$0xff]
        %v649 = vld [vmem:[#allocation7 + $0x8] sm:$0xf]
        %v650 = vld [vmem:[#allocation7 + $0xc] sm:$0xff]
        %v651 = vld [vmem:[#allocation7 + $0x14] sm:$0xf]
        %v652 = vld [vmem:[#allocation7 + $0x18] sm:$0xff]
        %v653 = vld [vmem:[#allocation7 + $0x20] sm:$0xf]
        %v654 = vld [vmem:[#allocation7 + $0x24] sm:$0xff]
        %v655 = vld [vmem:[#allocation7 + $0x2c] sm:$0xf]
        %v656 = vld [vmem:[#allocation7 + $0x30] sm:$0xff]
        %v657 = vld [vmem:[#allocation7 + $0x38] sm:$0xf]
        %v658 = vld [vmem:[#allocation7 + $0x3c] sm:$0xff]
        %v659 = vld [vmem:[#allocation7 + $0x44] sm:$0xf]
        %v660 = vld [vmem:[#allocation7 + $0x48] sm:$0xff]
        %v661 = vld [vmem:[#allocation7 + $0x50] sm:$0xf]
        %v662 = vld [vmem:[#allocation7 + $0x54] sm:$0xff]
        %v663 = vld [vmem:[#allocation7 + $0x5c] sm:$0xf]
        %v664 = vld [vmem:[#allocation7 + $0x60] sm:$0xff]
        %v665 = vld [vmem:[#allocation7 + $0x68] sm:$0xf]
        %v666 = vld [vmem:[#allocation7 + $0x6c] sm:$0xff]
        %v667 = vld [vmem:[#allocation7 + $0x74] sm:$0xf]
        %v668 = vld [vmem:[#allocation7 + $0x78] sm:$0xff]
        %v669 = vld [vmem:[#allocation7 + $0x80] sm:$0xf]
        %v670 = vld [vmem:[#allocation7 + $0x84] sm:$0xff]
        %v671 = vld [vmem:[#allocation7 + $0x8c] sm:$0xf]
        %v672 = vld [vmem:[#allocation7 + $0x90] sm:$0xff]
        %v673 = vld [vmem:[#allocation7 + $0x98] sm:$0xf]
        %v674 = vld [vmem:[#allocation7 + $0x9c] sm:$0xff]
        %v675 = vld [vmem:[#allocation7 + $0xa4] sm:$0xf]
        %v676 = vld [vmem:[#allocation7 + $0xa8] sm:$0xff]
        %v677 = vld [vmem:[#allocation7 + $0xb0] sm:$0xf]
        %v678 = vld [vmem:[#allocation7 + $0xb4] sm:$0xff]
        %v679 = vld [vmem:[#allocation7 + $0xbc] sm:$0xf]
        %v680 = vld [vmem:[#allocation8] sm:$0x7]
        %v682 = vperm.slane %v680, 0
        %v683 = vperm.slane %v680, 1
        %v684 = vperm.slane %v680, 2
        %v720 = vunpack.c.l.b16 %v648
        %v721 = vunpack.c.h.b16 %v648
        %v722 = vunpack.c.l.b16 %v649
        %v723 = vunpack.c.l.b16 %v650
        %v724 = vunpack.c.h.b16 %v650
        %v725 = vunpack.c.l.b16 %v651
        %v726 = vunpack.c.l.b16 %v652
        %v727 = vunpack.c.h.b16 %v652
        %v728 = vunpack.c.l.b16 %v653
        %v729 = vunpack.c.l.b16 %v654
        %v730 = vunpack.c.h.b16 %v654
        %v731 = vunpack.c.l.b16 %v655
        %v732 = vunpack.c.l.b16 %v656
        %v733 = vunpack.c.h.b16 %v656
        %v734 = vunpack.c.l.b16 %v657
        %v735 = vunpack.c.l.b16 %v658
        %v736 = vunpack.c.h.b16 %v658
        %v737 = vunpack.c.l.b16 %v659
        %v738 = vunpack.c.l.b16 %v660
        %v739 = vunpack.c.h.b16 %v660
        %v740 = vunpack.c.l.b16 %v661
        %v741 = vunpack.c.l.b16 %v662
        %v742 = vunpack.c.h.b16 %v662
        %v743 = vunpack.c.l.b16 %v663
        %v744 = vunpack.c.l.b16 %v664
        %v745 = vunpack.c.h.b16 %v664
        %v746 = vunpack.c.l.b16 %v665
        %v747 = vunpack.c.l.b16 %v666
        %v748 = vunpack.c.h.b16 %v666
        %v749 = vunpack.c.l.b16 %v667
        %v750 = vunpack.c.l.b16 %v668
        %v751 = vunpack.c.h.b16 %v668
        %v752 = vunpack.c.l.b16 %v669
        %v753 = vunpack.c.l.b16 %v670
        %v754 = vunpack.c.h.b16 %v670
        %v755 = vunpack.c.l.b16 %v671
        %v756 = vunpack.c.l.b16 %v672
        %v757 = vunpack.c.h.b16 %v672
        %v758 = vunpack.c.l.b16 %v673
        %v759 = vunpack.c.l.b16 %v674
        %v760 = vunpack.c.h.b16 %v674
        %v761 = vunpack.c.l.b16 %v675
        %v762 = vunpack.c.l.b16 %v676
        %v763 = vunpack.c.h.b16 %v676
        %v764 = vunpack.c.l.b16 %v677
        %v765 = vunpack.c.l.b16 %v678
        %v766 = vunpack.c.h.b16 %v678
        %v767 = vunpack.c.l.b16 %v679
        %v768 = vpack.c.b16 %v723, %v720
        %v769 = vpack.c.b16 %v724, %v721
        %v770 = vpack.c.b16 %v725, %v722
        %v771 = vpack.c.b16 %v729, %v726
        %v772 = vpack.c.b16 %v730, %v727
        %v773 = vpack.c.b16 %v731, %v728
        %v774 = vpack.c.b16 %v735, %v732
        %v775 = vpack.c.b16 %v736, %v733
        %v776 = vpack.c.b16 %v737, %v734
        %v777 = vpack.c.b16 %v741, %v738
        %v778 = vpack.c.b16 %v742, %v739
        %v779 = vpack.c.b16 %v743, %v740
        %v780 = vpack.c.b16 %v747, %v744
        %v781 = vpack.c.b16 %v748, %v745
        %v782 = vpack.c.b16 %v749, %v746
        %v783 = vpack.c.b16 %v753, %v750
        %v784 = vpack.c.b16 %v754, %v751
        %v785 = vpack.c.b16 %v755, %v752
        %v786 = vpack.c.b16 %v759, %v756
        %v787 = vpack.c.b16 %v760, %v757
        %v788 = vpack.c.b16 %v761, %v758
        %v789 = vpack.c.b16 %v765, %v762
        %v790 = vpack.c.b16 %v766, %v763
        %v791 = vpack.c.b16 %v767, %v764
        %816 = vmatpush.bf16.msra.mxu0 %v789
        %817 = vmatpush.bf16.msra.mxu0 %v786
        %818 = vmatpush.bf16.msra.mxu0 %v783
        %819 = vmatpush.bf16.msra.mxu0 %v780
        %820 = vmatpush.bf16.msra.mxu0 %v777
        %821 = vmatpush.bf16.msra.mxu0 %v774
        %822 = vmatpush.bf16.msra.mxu0 %v771
        %823 = vmatpush.bf16.msra.mxu0 %v768
        %824 = vmatmul.bf16.gmra.mxu0 %v647
        %v825 = vpop.f32.mrf.mxu0
        %v826 = vadd.f32 %v682, %v825
        %v827 = vpop.f32.mrf.mxu0
        %v828 = vadd.f32 %v682, %v827
        %829 = vdwg.mxu0
        %830 = vmatpush.bf16.msra.mxu0 %v790
        %831 = vmatpush.bf16.msra.mxu0 %v787
        %832 = vmatpush.bf16.msra.mxu0 %v784
        %833 = vmatpush.bf16.msra.mxu0 %v781
        %834 = vmatpush.bf16.msra.mxu0 %v778
        %835 = vmatpush.bf16.msra.mxu0 %v775
        %836 = vmatpush.bf16.msra.mxu0 %v772
        %837 = vmatpush.bf16.msra.mxu0 %v769
        %838 = vmatmul.bf16.gmra.mxu0 %v647
        %v839 = vpop.f32.mrf.mxu0
        %v840 = vadd.f32 %v683, %v839
        %v841 = vpop.f32.mrf.mxu0
        %v842 = vadd.f32 %v683, %v841
        %843 = vdwg.mxu0
        %844 = vmatpush.bf16.msra.mxu0 %v791
        %845 = vmatpush.bf16.msra.mxu0 %v788
        %846 = vmatpush.bf16.msra.mxu0 %v785
        %847 = vmatpush.bf16.msra.mxu0 %v782
        %848 = vmatpush.bf16.msra.mxu0 %v779
        %849 = vmatpush.bf16.msra.mxu0 %v776
        %850 = vmatpush.bf16.msra.mxu0 %v773
        %851 = vmatpush.bf16.msra.mxu0 %v770
        %852 = vmatmul.bf16.gmra.mxu0 %v647
        %v853 = vpop.f32.mrf.mxu0
        %v854 = vadd.f32 %v684, %v853
        %v855 = vpop.f32.mrf.mxu0
        %v856 = vadd.f32 %v684, %v855
        %857 = vdwg.mxu0
        %860 = vrot.lane.b32.xlu0 %v826, 96
        %v861 = vpop.permute.xlu0 %860
        %862 = vrot.lane.b32.xlu0 %v828, 96
        %v863 = vpop.permute.xlu0 %862
        %866 = vrot.lane.b32.xlu0 %v826, 64
        %v867 = vpop.permute.xlu0 %866
        %868 = vrot.lane.b32.xlu0 %v828, 64
        %v869 = vpop.permute.xlu0 %868
        %872 = vrot.lane.b32.xlu0 %v826, 32
        %v873 = vpop.permute.xlu0 %872
        %874 = vrot.lane.b32.xlu0 %v828, 32
        %v875 = vpop.permute.xlu0 %874
        %v878 = vpack.c.bf16 %v826, %v826
        %v879 = vpack.c.bf16 %v828, %v828
        %v880 = vpack.c.bf16 %v861, %v861
        %v881 = vpack.c.bf16 %v863, %v863
        %v882 = vpack.c.bf16 %v867, %v867
        %v883 = vpack.c.bf16 %v869, %v869
        %v884 = vpack.c.bf16 %v873, %v873
        %v885 = vpack.c.bf16 %v875, %v875
        %888 = vrot.lane.b32.xlu0 %v840, 96
        %v889 = vpop.permute.xlu0 %888
        %890 = vrot.lane.b32.xlu0 %v842, 96
        %v891 = vpop.permute.xlu0 %890
        %894 = vrot.lane.b32.xlu0 %v840, 64
        %v895 = vpop.permute.xlu0 %894
        %896 = vrot.lane.b32.xlu0 %v842, 64
        %v897 = vpop.permute.xlu0 %896
        %900 = vrot.lane.b32.xlu0 %v840, 32
        %v901 = vpop.permute.xlu0 %900
        %902 = vrot.lane.b32.xlu0 %v842, 32
        %v903 = vpop.permute.xlu0 %902
        %v906 = vpack.c.bf16 %v840, %v840
        %v907 = vpack.c.bf16 %v842, %v842
        %v908 = vpack.c.bf16 %v889, %v889
        %v909 = vpack.c.bf16 %v891, %v891
        %v910 = vpack.c.bf16 %v895, %v895
        %v911 = vpack.c.bf16 %v897, %v897
        %v912 = vpack.c.bf16 %v901, %v901
        %v913 = vpack.c.bf16 %v903, %v903
        %916 = vrot.lane.b32.xlu0 %v854, 96
        %v917 = vpop.permute.xlu0 %916
        %918 = vrot.lane.b32.xlu0 %v856, 96
        %v919 = vpop.permute.xlu0 %918
        %922 = vrot.lane.b32.xlu0 %v854, 64
        %v923 = vpop.permute.xlu0 %922
        %924 = vrot.lane.b32.xlu0 %v856, 64
        %v925 = vpop.permute.xlu0 %924
        %928 = vrot.lane.b32.xlu0 %v854, 32
        %v929 = vpop.permute.xlu0 %928
        %930 = vrot.lane.b32.xlu0 %v856, 32
        %v931 = vpop.permute.xlu0 %930
        %v934 = vpack.c.bf16 %v854, %v854
        %v935 = vpack.c.bf16 %v856, %v856
        %v936 = vpack.c.bf16 %v917, %v917
        %v937 = vpack.c.bf16 %v919, %v919
        %v938 = vpack.c.bf16 %v923, %v923
        %v939 = vpack.c.bf16 %v925, %v925
        %v940 = vpack.c.bf16 %v929, %v929
        %v941 = vpack.c.bf16 %v931, %v931
        %vm942 = vcmask 261120
        %v944 = vsel %vm942, %v878, 0
        %v947 = vsel %vm942, %v906, 0
        %949 = vmatpush.bf16.xpose.msra.mxu0 0
        %950 = vmatpush.bf16.xpose.msra.mxu0 0
        %951 = vmatpush.bf16.xpose.msra.mxu0 0
        %952 = vmatpush.bf16.xpose.msra.mxu0 0
        %953 = vmatpush.bf16.xpose.msra.mxu0 0
        %954 = vmatpush.bf16.xpose.msra.mxu0 0
        %955 = vmatpush.bf16.xpose.msra.mxu0 0
        %956 = vmatpush.bf16.xpose.msra.mxu0 %v947
        %957 = vmatmul.bf16.gmra.mxu0 %v944
        %v958 = vpop.f32.mrf.mxu0
        %v959 = vadd.f32 0.0, %v958
        %v960 = vpop.f32.mrf.mxu0
        %961 = vdwg.mxu0
        %v963 = vsel %vm942, %v879, 0
        %v966 = vsel %vm942, %v907, 0
        %968 = vmatpush.bf16.xpose.msra.mxu0 0
        %969 = vmatpush.bf16.xpose.msra.mxu0 0
        %970 = vmatpush.bf16.xpose.msra.mxu0 0
        %971 = vmatpush.bf16.xpose.msra.mxu0 0
        %972 = vmatpush.bf16.xpose.msra.mxu0 0
        %973 = vmatpush.bf16.xpose.msra.mxu0 0
        %974 = vmatpush.bf16.xpose.msra.mxu0 0
        %975 = vmatpush.bf16.xpose.msra.mxu0 %v966
        %976 = vmatmul.bf16.gmra.mxu0 %v963
        %v977 = vpop.f32.mrf.mxu0
        %v978 = vadd.f32 0.0, %v977
        %v979 = vpop.f32.mrf.mxu0
        %980 = vdwg.mxu0
        %v982 = vsel %vm942, %v880, 0
        %v985 = vsel %vm942, %v908, 0
        %987 = vmatpush.bf16.xpose.msra.mxu0 0
        %988 = vmatpush.bf16.xpose.msra.mxu0 0
        %989 = vmatpush.bf16.xpose.msra.mxu0 0
        %990 = vmatpush.bf16.xpose.msra.mxu0 0
        %991 = vmatpush.bf16.xpose.msra.mxu0 0
        %992 = vmatpush.bf16.xpose.msra.mxu0 0
        %993 = vmatpush.bf16.xpose.msra.mxu0 0
        %994 = vmatpush.bf16.xpose.msra.mxu0 %v985
        %995 = vmatmul.bf16.gmra.mxu0 %v982
        %v996 = vpop.f32.mrf.mxu0
        %v997 = vadd.f32 0.0, %v996
        %v998 = vpop.f32.mrf.mxu0
        %999 = vdwg.mxu0
        %v1001 = vsel %vm942, %v881, 0
        %v1004 = vsel %vm942, %v909, 0
        %1006 = vmatpush.bf16.xpose.msra.mxu0 0
        %1007 = vmatpush.bf16.xpose.msra.mxu0 0
        %1008 = vmatpush.bf16.xpose.msra.mxu0 0
        %1009 = vmatpush.bf16.xpose.msra.mxu0 0
        %1010 = vmatpush.bf16.xpose.msra.mxu0 0
        %1011 = vmatpush.bf16.xpose.msra.mxu0 0
        %1012 = vmatpush.bf16.xpose.msra.mxu0 0
        %1013 = vmatpush.bf16.xpose.msra.mxu0 %v1004
        %1014 = vmatmul.bf16.gmra.mxu0 %v1001
        %v1015 = vpop.f32.mrf.mxu0
        %v1016 = vadd.f32 0.0, %v1015
        %v1017 = vpop.f32.mrf.mxu0
        %1018 = vdwg.mxu0
        %v1020 = vsel %vm942, %v882, 0
        %v1023 = vsel %vm942, %v910, 0
        %1025 = vmatpush.bf16.xpose.msra.mxu0 0
        %1026 = vmatpush.bf16.xpose.msra.mxu0 0
        %1027 = vmatpush.bf16.xpose.msra.mxu0 0
        %1028 = vmatpush.bf16.xpose.msra.mxu0 0
        %1029 = vmatpush.bf16.xpose.msra.mxu0 0
        %1030 = vmatpush.bf16.xpose.msra.mxu0 0
        %1031 = vmatpush.bf16.xpose.msra.mxu0 0
        %1032 = vmatpush.bf16.xpose.msra.mxu0 %v1023
        %1033 = vmatmul.bf16.gmra.mxu0 %v1020
        %v1034 = vpop.f32.mrf.mxu0
        %v1035 = vadd.f32 0.0, %v1034
        %v1036 = vpop.f32.mrf.mxu0
        %1037 = vdwg.mxu0
        %v1039 = vsel %vm942, %v883, 0
        %v1042 = vsel %vm942, %v911, 0
        %1044 = vmatpush.bf16.xpose.msra.mxu0 0
        %1045 = vmatpush.bf16.xpose.msra.mxu0 0
        %1046 = vmatpush.bf16.xpose.msra.mxu0 0
        %1047 = vmatpush.bf16.xpose.msra.mxu0 0
        %1048 = vmatpush.bf16.xpose.msra.mxu0 0
        %1049 = vmatpush.bf16.xpose.msra.mxu0 0
        %1050 = vmatpush.bf16.xpose.msra.mxu0 0
        %1051 = vmatpush.bf16.xpose.msra.mxu0 %v1042
        %1052 = vmatmul.bf16.gmra.mxu0 %v1039
        %v1053 = vpop.f32.mrf.mxu0
        %v1054 = vadd.f32 0.0, %v1053
        %v1055 = vpop.f32.mrf.mxu0
        %1056 = vdwg.mxu0
        %v1058 = vsel %vm942, %v884, 0
        %v1061 = vsel %vm942, %v912, 0
        %1063 = vmatpush.bf16.xpose.msra.mxu0 0
        %1064 = vmatpush.bf16.xpose.msra.mxu0 0
        %1065 = vmatpush.bf16.xpose.msra.mxu0 0
        %1066 = vmatpush.bf16.xpose.msra.mxu0 0
        %1067 = vmatpush.bf16.xpose.msra.mxu0 0
        %1068 = vmatpush.bf16.xpose.msra.mxu0 0
        %1069 = vmatpush.bf16.xpose.msra.mxu0 0
        %1070 = vmatpush.bf16.xpose.msra.mxu0 %v1061
        %1071 = vmatmul.bf16.gmra.mxu0 %v1058
        %v1072 = vpop.f32.mrf.mxu0
        %v1073 = vadd.f32 0.0, %v1072
        %v1074 = vpop.f32.mrf.mxu0
        %1075 = vdwg.mxu0
        %v1077 = vsel %vm942, %v885, 0
        %v1080 = vsel %vm942, %v913, 0
        %1082 = vmatpush.bf16.xpose.msra.mxu0 0
        %1083 = vmatpush.bf16.xpose.msra.mxu0 0
        %1084 = vmatpush.bf16.xpose.msra.mxu0 0
        %1085 = vmatpush.bf16.xpose.msra.mxu0 0
        %1086 = vmatpush.bf16.xpose.msra.mxu0 0
        %1087 = vmatpush.bf16.xpose.msra.mxu0 0
        %1088 = vmatpush.bf16.xpose.msra.mxu0 0
        %1089 = vmatpush.bf16.xpose.msra.mxu0 %v1080
        %1090 = vmatmul.bf16.gmra.mxu0 %v1077
        %v1091 = vpop.f32.mrf.mxu0
        %v1092 = vadd.f32 0.0, %v1091
        %v1093 = vpop.f32.mrf.mxu0
        %1094 = vdwg.mxu0
        %v1095 = vmul.f32 %v959, 0.17677669
        %v1096 = vmul.f32 %v978, 0.17677669
        %v1097 = vmul.f32 %v997, 0.17677669
        %v1098 = vmul.f32 %v1016, 0.17677669
        %v1099 = vmul.f32 %v1035, 0.17677669
        %v1100 = vmul.f32 %v1054, 0.17677669
        %v1101 = vmul.f32 %v1073, 0.17677669
        %v1102 = vmul.f32 %v1092, 0.17677669
        %v1103 = vld [vmem:[#allocation5] sm:$0xff]
        %v1104 = vadd.f32 %v1095, %v1103
        %v1105 = vadd.f32 %v1096, %v1103
        %v1106 = vadd.f32 %v1097, %v1103
        %v1107 = vadd.f32 %v1098, %v1103
        %v1108 = vadd.f32 %v1099, %v1103
        %v1109 = vadd.f32 %v1100, %v1103
        %v1110 = vadd.f32 %v1101, %v1103
        %v1111 = vadd.f32 %v1102, %v1103
        %vm1112 = vcmask 64512
        %v1113 = vsel %vm1112, %v1104, -inf
        %1114 = vmax.xlane.f32.xlu0 %v1113
        %v1115 = vpop.xlane.xlu0 %1114
        %v1116 = vsel %vm1112, %v1105, -inf
        %1117 = vmax.xlane.f32.xlu0 %v1116
        %v1118 = vpop.xlane.xlu0 %1117
        %v1119 = vsel %vm1112, %v1106, -inf
        %1120 = vmax.xlane.f32.xlu0 %v1119
        %v1121 = vpop.xlane.xlu0 %1120
        %v1122 = vsel %vm1112, %v1107, -inf
        %1123 = vmax.xlane.f32.xlu0 %v1122
        %v1124 = vpop.xlane.xlu0 %1123
        %v1125 = vsel %vm1112, %v1108, -inf
        %1126 = vmax.xlane.f32.xlu0 %v1125
        %v1127 = vpop.xlane.xlu0 %1126
        %v1128 = vsel %vm1112, %v1109, -inf
        %1129 = vmax.xlane.f32.xlu0 %v1128
        %v1130 = vpop.xlane.xlu0 %1129
        %v1131 = vsel %vm1112, %v1110, -inf
        %1132 = vmax.xlane.f32.xlu0 %v1131
        %v1133 = vpop.xlane.xlu0 %1132
        %v1134 = vsel %vm1112, %v1111, -inf
        %1135 = vmax.xlane.f32.xlu0 %v1134
        %v1136 = vpop.xlane.xlu0 %1135
        %v1137 = vsub.f32 %v1104, %v1115
        %v1138 = vsub.f32 %v1105, %v1118
        %v1139 = vsub.f32 %v1106, %v1121
        %v1140 = vsub.f32 %v1107, %v1124
        %v1141 = vsub.f32 %v1108, %v1127
        %v1142 = vsub.f32 %v1109, %v1130
        %v1143 = vsub.f32 %v1110, %v1133
        %v1144 = vsub.f32 %v1111, %v1136
        %v1145 = vmul.f32 %v1137, 1.442695
        %v1146 = vpow.pop %v1145
        %v1147 = vmul.f32 %v1138, 1.442695
        %v1148 = vpow.pop %v1147
        %v1149 = vmul.f32 %v1139, 1.442695
        %v1150 = vpow.pop %v1149
        %v1151 = vmul.f32 %v1140, 1.442695
        %v1152 = vpow.pop %v1151
        %v1153 = vmul.f32 %v1141, 1.442695
        %v1154 = vpow.pop %v1153
        %v1155 = vmul.f32 %v1142, 1.442695
        %v1156 = vpow.pop %v1155
        %v1157 = vmul.f32 %v1143, 1.442695
        %v1158 = vpow.pop %v1157
        %v1159 = vmul.f32 %v1144, 1.442695
        %v1160 = vpow.pop %v1159
        %v1161 = vsel %vm1112, %v1146, 0.0
        %1162 = vadd.xlane.f32.xlu0 %v1161
        %v1163 = vpop.xlane.xlu0 %1162
        %v1164 = vsel %vm1112, %v1148, 0.0
        %1165 = vadd.xlane.f32.xlu0 %v1164
        %v1166 = vpop.xlane.xlu0 %1165
        %v1167 = vsel %vm1112, %v1150, 0.0
        %1168 = vadd.xlane.f32.xlu0 %v1167
        %v1169 = vpop.xlane.xlu0 %1168
        %v1170 = vsel %vm1112, %v1152, 0.0
        %1171 = vadd.xlane.f32.xlu0 %v1170
        %v1172 = vpop.xlane.xlu0 %1171
        %v1173 = vsel %vm1112, %v1154, 0.0
        %1174 = vadd.xlane.f32.xlu0 %v1173
        %v1175 = vpop.xlane.xlu0 %1174
        %v1176 = vsel %vm1112, %v1156, 0.0
        %1177 = vadd.xlane.f32.xlu0 %v1176
        %v1178 = vpop.xlane.xlu0 %1177
        %v1179 = vsel %vm1112, %v1158, 0.0
        %1180 = vadd.xlane.f32.xlu0 %v1179
        %v1181 = vpop.xlane.xlu0 %1180
        %v1182 = vsel %vm1112, %v1160, 0.0
        %1183 = vadd.xlane.f32.xlu0 %v1182
        %v1184 = vpop.xlane.xlu0 %1183
        %v1185 = vrcp.pop %v1163
        %v1186 = vrcp.pop %v1166
        %v1187 = vrcp.pop %v1169
        %v1188 = vrcp.pop %v1172
        %v1189 = vrcp.pop %v1175
        %v1190 = vrcp.pop %v1178
        %v1191 = vrcp.pop %v1181
        %v1192 = vrcp.pop %v1184
        %v1193 = vmul.f32 %v1146, %v1185
        %v1194 = vmul.f32 %v1148, %v1186
        %v1195 = vmul.f32 %v1150, %v1187
        %v1196 = vmul.f32 %v1152, %v1188
        %v1197 = vmul.f32 %v1154, %v1189
        %v1198 = vmul.f32 %v1156, %v1190
        %v1199 = vmul.f32 %v1158, %v1191
        %v1200 = vmul.f32 %v1160, %v1192
        %v1201 = vpack.c.bf16 %v1193, %v1193
        %v1202 = vpack.c.bf16 %v1194, %v1194
        %v1203 = vpack.c.bf16 %v1195, %v1195
        %v1204 = vpack.c.bf16 %v1196, %v1196
        %v1205 = vpack.c.bf16 %v1197, %v1197
        %v1206 = vpack.c.bf16 %v1198, %v1198
        %v1207 = vpack.c.bf16 %v1199, %v1199
        %v1208 = vpack.c.bf16 %v1200, %v1200
        %v1210 = vsel %vm1112, %v1201, 0
        %vm1212 = vcmask 1043456
        %v1214 = vsel %vm1212, %v934, 0
        %1216 = vmatpush.bf16.msra.mxu0 0
        %1217 = vmatpush.bf16.msra.mxu0 0
        %1218 = vmatpush.bf16.msra.mxu0 0
        %1219 = vmatpush.bf16.msra.mxu0 0
        %1220 = vmatpush.bf16.msra.mxu0 0
        %1221 = vmatpush.bf16.msra.mxu0 0
        %1222 = vmatpush.bf16.msra.mxu0 0
        %1223 = vmatpush.bf16.msra.mxu0 %v1214
        %1224 = vmatmul.bf16.gmra.mxu0 %v1210
        %v1225 = vpop.f32.mrf.mxu0
        %v1226 = vadd.f32 0.0, %v1225
        %v1227 = vpop.f32.mrf.mxu0
        %1228 = vdwg.mxu0
        %v1230 = vsel %vm1112, %v1202, 0
        %v1233 = vsel %vm1212, %v935, 0
        %1235 = vmatpush.bf16.msra.mxu0 0
        %1236 = vmatpush.bf16.msra.mxu0 0
        %1237 = vmatpush.bf16.msra.mxu0 0
        %1238 = vmatpush.bf16.msra.mxu0 0
        %1239 = vmatpush.bf16.msra.mxu0 0
        %1240 = vmatpush.bf16.msra.mxu0 0
        %1241 = vmatpush.bf16.msra.mxu0 0
        %1242 = vmatpush.bf16.msra.mxu0 %v1233
        %1243 = vmatmul.bf16.gmra.mxu0 %v1230
        %v1244 = vpop.f32.mrf.mxu0
        %v1245 = vadd.f32 0.0, %v1244
        %v1246 = vpop.f32.mrf.mxu0
        %1247 = vdwg.mxu0
        %v1249 = vsel %vm1112, %v1203, 0
        %v1252 = vsel %vm1212, %v936, 0
        %1254 = vmatpush.bf16.msra.mxu0 0
        %1255 = vmatpush.bf16.msra.mxu0 0
        %1256 = vmatpush.bf16.msra.mxu0 0
        %1257 = vmatpush.bf16.msra.mxu0 0
        %1258 = vmatpush.bf16.msra.mxu0 0
        %1259 = vmatpush.bf16.msra.mxu0 0
        %1260 = vmatpush.bf16.msra.mxu0 0
        %1261 = vmatpush.bf16.msra.mxu0 %v1252
        %1262 = vmatmul.bf16.gmra.mxu0 %v1249
        %v1263 = vpop.f32.mrf.mxu0
        %v1264 = vadd.f32 0.0, %v1263
        %v1265 = vpop.f32.mrf.mxu0
        %1266 = vdwg.mxu0
        %v1268 = vsel %vm1112, %v1204, 0
        %v1271 = vsel %vm1212, %v937, 0
        %1273 = vmatpush.bf16.msra.mxu0 0
        %1274 = vmatpush.bf16.msra.mxu0 0
        %1275 = vmatpush.bf16.msra.mxu0 0
        %1276 = vmatpush.bf16.msra.mxu0 0
        %1277 = vmatpush.bf16.msra.mxu0 0
        %1278 = vmatpush.bf16.msra.mxu0 0
        %1279 = vmatpush.bf16.msra.mxu0 0
        %1280 = vmatpush.bf16.msra.mxu0 %v1271
        %1281 = vmatmul.bf16.gmra.mxu0 %v1268
        %v1282 = vpop.f32.mrf.mxu0
        %v1283 = vadd.f32 0.0, %v1282
        %v1284 = vpop.f32.mrf.mxu0
        %1285 = vdwg.mxu0
        %v1287 = vsel %vm1112, %v1205, 0
        %v1290 = vsel %vm1212, %v938, 0
        %1292 = vmatpush.bf16.msra.mxu0 0
        %1293 = vmatpush.bf16.msra.mxu0 0
        %1294 = vmatpush.bf16.msra.mxu0 0
        %1295 = vmatpush.bf16.msra.mxu0 0
        %1296 = vmatpush.bf16.msra.mxu0 0
        %1297 = vmatpush.bf16.msra.mxu0 0
        %1298 = vmatpush.bf16.msra.mxu0 0
        %1299 = vmatpush.bf16.msra.mxu0 %v1290
        %1300 = vmatmul.bf16.gmra.mxu0 %v1287
        %v1301 = vpop.f32.mrf.mxu0
        %v1302 = vadd.f32 0.0, %v1301
        %v1303 = vpop.f32.mrf.mxu0
        %1304 = vdwg.mxu0
        %v1306 = vsel %vm1112, %v1206, 0
        %v1309 = vsel %vm1212, %v939, 0
        %1311 = vmatpush.bf16.msra.mxu0 0
        %1312 = vmatpush.bf16.msra.mxu0 0
        %1313 = vmatpush.bf16.msra.mxu0 0
        %1314 = vmatpush.bf16.msra.mxu0 0
        %1315 = vmatpush.bf16.msra.mxu0 0
        %1316 = vmatpush.bf16.msra.mxu0 0
        %1317 = vmatpush.bf16.msra.mxu0 0
        %1318 = vmatpush.bf16.msra.mxu0 %v1309
        %1319 = vmatmul.bf16.gmra.mxu0 %v1306
        %v1320 = vpop.f32.mrf.mxu0
        %v1321 = vadd.f32 0.0, %v1320
        %v1322 = vpop.f32.mrf.mxu0
        %1323 = vdwg.mxu0
        %v1325 = vsel %vm1112, %v1207, 0
        %v1328 = vsel %vm1212, %v940, 0
        %1330 = vmatpush.bf16.msra.mxu0 0
        %1331 = vmatpush.bf16.msra.mxu0 0
        %1332 = vmatpush.bf16.msra.mxu0 0
        %1333 = vmatpush.bf16.msra.mxu0 0
        %1334 = vmatpush.bf16.msra.mxu0 0
        %1335 = vmatpush.bf16.msra.mxu0 0
        %1336 = vmatpush.bf16.msra.mxu0 0
        %1337 = vmatpush.bf16.msra.mxu0 %v1328
        %1338 = vmatmul.bf16.gmra.mxu0 %v1325
        %v1339 = vpop.f32.mrf.mxu0
        %v1340 = vadd.f32 0.0, %v1339
        %v1341 = vpop.f32.mrf.mxu0
        %1342 = vdwg.mxu0
        %v1344 = vsel %vm1112, %v1208, 0
        %v1347 = vsel %vm1212, %v941, 0
        %1349 = vmatpush.bf16.msra.mxu0 0
        %1350 = vmatpush.bf16.msra.mxu0 0
        %1351 = vmatpush.bf16.msra.mxu0 0
        %1352 = vmatpush.bf16.msra.mxu0 0
        %1353 = vmatpush.bf16.msra.mxu0 0
        %1354 = vmatpush.bf16.msra.mxu0 0
        %1355 = vmatpush.bf16.msra.mxu0 0
        %1356 = vmatpush.bf16.msra.mxu0 %v1347
        %1357 = vmatmul.bf16.gmra.mxu0 %v1344
        %v1358 = vpop.f32.mrf.mxu0
        %v1359 = vadd.f32 0.0, %v1358
        %v1360 = vpop.f32.mrf.mxu0
        %1361 = vdwg.mxu0
        %1364 = vrot.lane.b32.xlu0 %v1264, 32
        %v1365 = vpop.permute.xlu0 %1364
        %1366 = vrot.lane.b32.xlu0 %v1283, 32
        %v1367 = vpop.permute.xlu0 %1366
        %1372 = vrot.lane.b32.xlu0 %v1302, 64
        %v1373 = vpop.permute.xlu0 %1372
        %1374 = vrot.lane.b32.xlu0 %v1321, 64
        %v1375 = vpop.permute.xlu0 %1374
        %1380 = vrot.lane.b32.xlu0 %v1340, 96
        %v1381 = vpop.permute.xlu0 %1380
        %1382 = vrot.lane.b32.xlu0 %v1359, 96
        %v1383 = vpop.permute.xlu0 %1382
        %v1386 = vsel %vm942, %v1226, %v1365
        %v1387 = vsel %vm942, %v1245, %v1367
        %vm1388 = vcmask 523264
        %v1389 = vsel %vm1388, %v1386, %v1373
        %v1390 = vsel %vm1388, %v1387, %v1375
        %vm1391 = vcmask 785408
        %v1392 = vsel %vm1391, %v1389, %v1381
        %v1393 = vsel %vm1391, %v1390, %v1383
        %v1394 = vpack.c.bf16 %v1393, %v1392
        %v1395 = vld [vmem:[#allocation10] sm:$0xf]
        %v1396 = vld [vmem:[#allocation10 + $0x4] sm:$0xf]
        %v1397 = vld [vmem:[#allocation10 + $0x8] sm:$0xf]
        %v1398 = vld [vmem:[#allocation10 + $0xc] sm:$0xf]
        %v1399 = vld [vmem:[#allocation10 + $0x10] sm:$0xf]
        %v1400 = vld [vmem:[#allocation10 + $0x14] sm:$0xf]
        %v1401 = vld [vmem:[#allocation10 + $0x18] sm:$0xf]
        %v1402 = vld [vmem:[#allocation10 + $0x1c] sm:$0xf]
        %v1403 = vld [vmem:[#allocation10 + $0x20] sm:$0xf]
        %v1404 = vld [vmem:[#allocation10 + $0x24] sm:$0xf]
        %v1405 = vld [vmem:[#allocation10 + $0x28] sm:$0xf]
        %v1406 = vld [vmem:[#allocation10 + $0x2c] sm:$0xf]
        %v1407 = vld [vmem:[#allocation10 + $0x30] sm:$0xf]
        %v1408 = vld [vmem:[#allocation10 + $0x34] sm:$0xf]
        %v1409 = vld [vmem:[#allocation10 + $0x38] sm:$0xf]
        %v1410 = vld [vmem:[#allocation10 + $0x3c] sm:$0xf]
        %v1411 = vld [vmem:[%s5] sm:$0x1]
        %v1413 = vperm.slane %v1411, 0
        %v1431 = vunpack.c.l.b16 %v1395
        %v1432 = vunpack.c.l.b16 %v1396
        %v1433 = vunpack.c.l.b16 %v1397
        %v1434 = vunpack.c.l.b16 %v1398
        %v1435 = vunpack.c.l.b16 %v1399
        %v1436 = vunpack.c.l.b16 %v1400
        %v1437 = vunpack.c.l.b16 %v1401
        %v1438 = vunpack.c.l.b16 %v1402
        %v1439 = vunpack.c.l.b16 %v1403
        %v1440 = vunpack.c.l.b16 %v1404
        %v1441 = vunpack.c.l.b16 %v1405
        %v1442 = vunpack.c.l.b16 %v1406
        %v1443 = vunpack.c.l.b16 %v1407
        %v1444 = vunpack.c.l.b16 %v1408
        %v1445 = vunpack.c.l.b16 %v1409
        %v1446 = vunpack.c.l.b16 %v1410
        %v1447 = vpack.c.b16 %v1432, %v1431
        %v1448 = vpack.c.b16 %v1434, %v1433
        %v1449 = vpack.c.b16 %v1436, %v1435
        %v1450 = vpack.c.b16 %v1438, %v1437
        %v1451 = vpack.c.b16 %v1440, %v1439
        %v1452 = vpack.c.b16 %v1442, %v1441
        %v1453 = vpack.c.b16 %v1444, %v1443
        %v1454 = vpack.c.b16 %v1446, %v1445
        %1463 = vmatpush.bf16.msra.mxu0 %v1454
        %1464 = vmatpush.bf16.msra.mxu0 %v1453
        %1465 = vmatpush.bf16.msra.mxu0 %v1452
        %1466 = vmatpush.bf16.msra.mxu0 %v1451
        %1467 = vmatpush.bf16.msra.mxu0 %v1450
        %1468 = vmatpush.bf16.msra.mxu0 %v1449
        %1469 = vmatpush.bf16.msra.mxu0 %v1448
        %1470 = vmatpush.bf16.msra.mxu0 %v1447
        %1471 = vmatmul.bf16.gmra.mxu0 %v1394
        %v1472 = vpop.f32.mrf.mxu0
        %v1473 = vadd.f32 %v1413, %v1472
        %v1474 = vpop.f32.mrf.mxu0
        %v1475 = vadd.f32 %v1413, %v1474
        %1476 = vdwg.mxu0
        %v1477 = vadd.f32 %v586, %v1473
        %v1478 = vadd.f32 %v587, %v1475
        %v1479 = vld [vmem:[%s12] sm:$0x1]
        %v1480 = vld [vmem:[%s13] sm:$0x1]
        %1481 = vadd.xlane.f32.xlu0 %v1477
        %v1482 = vpop.xlane.xlu0 %1481
        %1483 = vadd.xlane.f32.xlu0 %v1478
        %v1484 = vpop.xlane.xlu0 %1483
        %v1485 = vmul.f32 %v1482, %v600
        %v1486 = vmul.f32 %v1484, %v600
        %v1487 = vsub.f32 %v1477, %v1485
        %v1488 = vsub.f32 %v1478, %v1486
        %v1489 = vmul.f32 %v1487, %v1487
        %v1490 = vmul.f32 %v1488, %v1488
        %1491 = vadd.xlane.f32.xlu0 %v1489
        %v1492 = vpop.xlane.xlu0 %1491
        %1493 = vadd.xlane.f32.xlu0 %v1490
        %v1494 = vpop.xlane.xlu0 %1493
        %v1495 = vmul.f32 %v1492, %v600
        %v1496 = vmul.f32 %v1494, %v600
        %v1497 = vadd.f32 %v1495, 1e-06
        %v1498 = vadd.f32 %v1496, 1e-06
        %v1499 = vrsqrt.pop %v1497
        %v1500 = vmul.f32 %v1499, %v1497
        %v1501 = vmul.f32 %v1500, %v1499
        %v1502 = vmul.f32 0.5, %v1501
        %v1503 = vsub.f32 1.5, %v1502
        %v1504 = vmul.f32 %v1499, %v1503
        %vm1505 = vweird.f32 %v1497
        %vm1506 = vweird.f32 %v1499
        %vm1507 = vmor %vm1505, %vm1506
        %v1508 = vsel %vm1507, %v1499, %v1504
        %v1509 = vrsqrt.pop %v1498
        %v1510 = vmul.f32 %v1509, %v1498
        %v1511 = vmul.f32 %v1510, %v1509
        %v1512 = vmul.f32 0.5, %v1511
        %v1513 = vsub.f32 1.5, %v1512
        %v1514 = vmul.f32 %v1509, %v1513
        %vm1515 = vweird.f32 %v1498
        %vm1516 = vweird.f32 %v1509
        %vm1517 = vmor %vm1515, %vm1516
        %v1518 = vsel %vm1517, %v1509, %v1514
        %v1519 = vmul.f32 %v1487, %v1508
        %v1520 = vmul.f32 %v1488, %v1518
        %v1522 = vperm.slane %v1479, 0
        %v1524 = vmul.f32 %v1519, %v1522
        %v1525 = vmul.f32 %v1520, %v1522
        %v1527 = vperm.slane %v1480, 0
        %v1529 = vadd.f32 %v1524, %v1527
        %v1530 = vadd.f32 %v1525, %v1527
        %v1531 = vpack.c.bf16 %v1530, %v1529
        %v1532 = vld [vmem:[#allocation11] sm:$0xff]
        %v1533 = vld [vmem:[#allocation11 + $0x8] sm:$0xff]
        %v1534 = vld [vmem:[#allocation11 + $0x10] sm:$0xff]
        %v1535 = vld [vmem:[#allocation11 + $0x18] sm:$0xff]
        %v1536 = vld [vmem:[#allocation11 + $0x20] sm:$0xff]
        %v1537 = vld [vmem:[#allocation11 + $0x28] sm:$0xff]
        %v1538 = vld [vmem:[#allocation11 + $0x30] sm:$0xff]
        %v1539 = vld [vmem:[#allocation11 + $0x38] sm:$0xff]
        %v1540 = vld [vmem:[#allocation11 + $0x40] sm:$0xff]
        %v1541 = vld [vmem:[#allocation11 + $0x48] sm:$0xff]
        %v1542 = vld [vmem:[#allocation11 + $0x50] sm:$0xff]
        %v1543 = vld [vmem:[#allocation11 + $0x58] sm:$0xff]
        %v1544 = vld [vmem:[#allocation11 + $0x60] sm:$0xff]
        %v1545 = vld [vmem:[#allocation11 + $0x68] sm:$0xff]
        %v1546 = vld [vmem:[#allocation11 + $0x70] sm:$0xff]
        %v1547 = vld [vmem:[#allocation11 + $0x78] sm:$0xff]
        %v1548 = vld [vmem:[#allocation11 + $0x80] sm:$0xff]
        %v1549 = vld [vmem:[#allocation11 + $0x88] sm:$0xff]
        %v1550 = vld [vmem:[#allocation11 + $0x90] sm:$0xff]
        %v1551 = vld [vmem:[#allocation11 + $0x98] sm:$0xff]
        %v1552 = vld [vmem:[#allocation11 + $0xa0] sm:$0xff]
        %v1553 = vld [vmem:[#allocation11 + $0xa8] sm:$0xff]
        %v1554 = vld [vmem:[#allocation11 + $0xb0] sm:$0xff]
        %v1555 = vld [vmem:[#allocation11 + $0xb8] sm:$0xff]
        %v1556 = vld [vmem:[#allocation11 + $0xc0] sm:$0xff]
        %v1557 = vld [vmem:[#allocation11 + $0xc8] sm:$0xff]
        %v1558 = vld [vmem:[#allocation11 + $0xd0] sm:$0xff]
        %v1559 = vld [vmem:[#allocation11 + $0xd8] sm:$0xff]
        %v1560 = vld [vmem:[#allocation11 + $0xe0] sm:$0xff]
        %v1561 = vld [vmem:[#allocation11 + $0xe8] sm:$0xff]
        %v1562 = vld [vmem:[#allocation11 + $0xf0] sm:$0xff]
        %v1563 = vld [vmem:[#allocation11 + $0xf8] sm:$0xff]
        %v1564 = vld [vmem:[%s7] sm:$0xf]
        %v1566 = vperm.slane %v1564, 0
        %v1567 = vperm.slane %v1564, 1
        %v1568 = vperm.slane %v1564, 2
        %v1569 = vperm.slane %v1564, 3
        %v1606 = vunpack.c.l.b16 %v1532
        %v1607 = vunpack.c.h.b16 %v1532
        %v1608 = vunpack.c.l.b16 %v1533
        %v1609 = vunpack.c.h.b16 %v1533
        %v1610 = vunpack.c.l.b16 %v1534
        %v1611 = vunpack.c.h.b16 %v1534
        %v1612 = vunpack.c.l.b16 %v1535
        %v1613 = vunpack.c.h.b16 %v1535
        %v1614 = vunpack.c.l.b16 %v1536
        %v1615 = vunpack.c.h.b16 %v1536
        %v1616 = vunpack.c.l.b16 %v1537
        %v1617 = vunpack.c.h.b16 %v1537
        %v1618 = vunpack.c.l.b16 %v1538
        %v1619 = vunpack.c.h.b16 %v1538
        %v1620 = vunpack.c.l.b16 %v1539
        %v1621 = vunpack.c.h.b16 %v1539
        %v1622 = vunpack.c.l.b16 %v1540
        %v1623 = vunpack.c.h.b16 %v1540
        %v1624 = vunpack.c.l.b16 %v1541
        %v1625 = vunpack.c.h.b16 %v1541
        %v1626 = vunpack.c.l.b16 %v1542
        %v1627 = vunpack.c.h.b16 %v1542
        %v1628 = vunpack.c.l.b16 %v1543
        %v1629 = vunpack.c.h.b16 %v1543
        %v1630 = vunpack.c.l.b16 %v1544
        %v1631 = vunpack.c.h.b16 %v1544
        %v1632 = vunpack.c.l.b16 %v1545
        %v1633 = vunpack.c.h.b16 %v1545
        %v1634 = vunpack.c.l.b16 %v1546
        %v1635 = vunpack.c.h.b16 %v1546
        %v1636 = vunpack.c.l.b16 %v1547
        %v1637 = vunpack.c.h.b16 %v1547
        %v1638 = vunpack.c.l.b16 %v1548
        %v1639 = vunpack.c.h.b16 %v1548
        %v1640 = vunpack.c.l.b16 %v1549
        %v1641 = vunpack.c.h.b16 %v1549
        %v1642 = vunpack.c.l.b16 %v1550
        %v1643 = vunpack.c.h.b16 %v1550
        %v1644 = vunpack.c.l.b16 %v1551
        %v1645 = vunpack.c.h.b16 %v1551
        %v1646 = vunpack.c.l.b16 %v1552
        %v1647 = vunpack.c.h.b16 %v1552
        %v1648 = vunpack.c.l.b16 %v1553
        %v1649 = vunpack.c.h.b16 %v1553
        %v1650 = vunpack.c.l.b16 %v1554
        %v1651 = vunpack.c.h.b16 %v1554
        %v1652 = vunpack.c.l.b16 %v1555
        %v1653 = vunpack.c.h.b16 %v1555
        %v1654 = vunpack.c.l.b16 %v1556
        %v1655 = vunpack.c.h.b16 %v1556
        %v1656 = vunpack.c.l.b16 %v1557
        %v1657 = vunpack.c.h.b16 %v1557
        %v1658 = vunpack.c.l.b16 %v1558
        %v1659 = vunpack.c.h.b16 %v1558
        %v1660 = vunpack.c.l.b16 %v1559
        %v1661 = vunpack.c.h.b16 %v1559
        %v1662 = vunpack.c.l.b16 %v1560
        %v1663 = vunpack.c.h.b16 %v1560
        %v1664 = vunpack.c.l.b16 %v1561
        %v1665 = vunpack.c.h.b16 %v1561
        %v1666 = vunpack.c.l.b16 %v1562
        %v1667 = vunpack.c.h.b16 %v1562
        %v1668 = vunpack.c.l.b16 %v1563
        %v1669 = vunpack.c.h.b16 %v1563
        %v1670 = vpack.c.b16 %v1610, %v1606
        %v1671 = vpack.c.b16 %v1611, %v1607
        %v1672 = vpack.c.b16 %v1612, %v1608
        %v1673 = vpack.c.b16 %v1613, %v1609
        %v1674 = vpack.c.b16 %v1618, %v1614
        %v1675 = vpack.c.b16 %v1619, %v1615
        %v1676 = vpack.c.b16 %v1620, %v1616
        %v1677 = vpack.c.b16 %v1621, %v1617
        %v1678 = vpack.c.b16 %v1626, %v1622
        %v1679 = vpack.c.b16 %v1627, %v1623
        %v1680 = vpack.c.b16 %v1628, %v1624
        %v1681 = vpack.c.b16 %v1629, %v1625
        %v1682 = vpack.c.b16 %v1634, %v1630
        %v1683 = vpack.c.b16 %v1635, %v1631
        %v1684 = vpack.c.b16 %v1636, %v1632
        %v1685 = vpack.c.b16 %v1637, %v1633
        %v1686 = vpack.c.b16 %v1642, %v1638
        %v1687 = vpack.c.b16 %v1643, %v1639
        %v1688 = vpack.c.b16 %v1644, %v1640
        %v1689 = vpack.c.b16 %v1645, %v1641
        %v1690 = vpack.c.b16 %v1650, %v1646
        %v1691 = vpack.c.b16 %v1651, %v1647
        %v1692 = vpack.c.b16 %v1652, %v1648
        %v1693 = vpack.c.b16 %v1653, %v1649
        %v1694 = vpack.c.b16 %v1658, %v1654
        %v1695 = vpack.c.b16 %v1659, %v1655
        %v1696 = vpack.c.b16 %v1660, %v1656
        %v1697 = vpack.c.b16 %v1661, %v1657
        %v1698 = vpack.c.b16 %v1666, %v1662
        %v1699 = vpack.c.b16 %v1667, %v1663
        %v1700 = vpack.c.b16 %v1668, %v1664
        %v1701 = vpack.c.b16 %v1669, %v1665
        %1734 = vmatpush.bf16.msra.mxu0 %v1698
        %1735 = vmatpush.bf16.msra.mxu0 %v1694
        %1736 = vmatpush.bf16.msra.mxu0 %v1690
        %1737 = vmatpush.bf16.msra.mxu0 %v1686
        %1738 = vmatpush.bf16.msra.mxu0 %v1682
        %1739 = vmatpush.bf16.msra.mxu0 %v1678
        %1740 = vmatpush.bf16.msra.mxu0 %v1674
        %1741 = vmatpush.bf16.msra.mxu0 %v1670
        %1742 = vmatmul.bf16.gmra.mxu0 %v1531
        %v1743 = vpop.f32.mrf.mxu0
        %v1744 = vadd.f32 %v1566, %v1743
        %v1745 = vpop.f32.mrf.mxu0
        %v1746 = vadd.f32 %v1566, %v1745
        %1747 = vdwg.mxu0
        %1748 = vmatpush.bf16.msra.mxu0 %v1699
        %1749 = vmatpush.bf16.msra.mxu0 %v1695
        %1750 = vmatpush.bf16.msra.mxu0 %v1691
        %1751 = vmatpush.bf16.msra.mxu0 %v1687
        %1752 = vmatpush.bf16.msra.mxu0 %v1683
        %1753 = vmatpush.bf16.msra.mxu0 %v1679
        %1754 = vmatpush.bf16.msra.mxu0 %v1675
        %1755 = vmatpush.bf16.msra.mxu0 %v1671
        %1756 = vmatmul.bf16.gmra.mxu0 %v1531
        %v1757 = vpop.f32.mrf.mxu0
        %v1758 = vadd.f32 %v1567, %v1757
        %v1759 = vpop.f32.mrf.mxu0
        %v1760 = vadd.f32 %v1567, %v1759
        %1761 = vdwg.mxu0
        %1762 = vmatpush.bf16.msra.mxu0 %v1700
        %1763 = vmatpush.bf16.msra.mxu0 %v1696
        %1764 = vmatpush.bf16.msra.mxu0 %v1692
        %1765 = vmatpush.bf16.msra.mxu0 %v1688
        %1766 = vmatpush.bf16.msra.mxu0 %v1684
        %1767 = vmatpush.bf16.msra.mxu0 %v1680
        %1768 = vmatpush.bf16.msra.mxu0 %v1676
        %1769 = vmatpush.bf16.msra.mxu0 %v1672
        %1770 = vmatmul.bf16.gmra.mxu0 %v1531
        %v1771 = vpop.f32.mrf.mxu0
        %v1772 = vadd.f32 %v1568, %v1771
        %v1773 = vpop.f32.mrf.mxu0
        %v1774 = vadd.f32 %v1568, %v1773
        %1775 = vdwg.mxu0
        %1776 = vmatpush.bf16.msra.mxu0 %v1701
        %1777 = vmatpush.bf16.msra.mxu0 %v1697
        %1778 = vmatpush.bf16.msra.mxu0 %v1693
        %1779 = vmatpush.bf16.msra.mxu0 %v1689
        %1780 = vmatpush.bf16.msra.mxu0 %v1685
        %1781 = vmatpush.bf16.msra.mxu0 %v1681
        %1782 = vmatpush.bf16.msra.mxu0 %v1677
        %1783 = vmatpush.bf16.msra.mxu0 %v1673
        %1784 = vmatmul.bf16.gmra.mxu0 %v1531
        %v1785 = vpop.f32.mrf.mxu0
        %v1786 = vadd.f32 %v1569, %v1785
        %v1787 = vpop.f32.mrf.mxu0
        %v1788 = vadd.f32 %v1569, %v1787
        %1789 = vdwg.mxu0
        %v1790 = vmax.f32 %v1744, 0.0
        %v1791 = vmax.f32 %v1758, 0.0
        %v1792 = vmax.f32 %v1772, 0.0
        %v1793 = vmax.f32 %v1786, 0.0
        %v1794 = vmax.f32 %v1746, 0.0
        %v1795 = vmax.f32 %v1760, 0.0
        %v1796 = vmax.f32 %v1774, 0.0
        %v1797 = vmax.f32 %v1788, 0.0
        %v1798 = vpack.c.bf16 %v1794, %v1790
        %v1799 = vpack.c.bf16 %v1795, %v1791
        %v1800 = vpack.c.bf16 %v1796, %v1792
        %v1801 = vpack.c.bf16 %v1797, %v1793
        %v1802 = vld [vmem:[#allocation13] sm:$0xf]
        %v1803 = vld [vmem:[#allocation13 + $0x4] sm:$0xf]
        %v1804 = vld [vmem:[#allocation13 + $0x8] sm:$0xf]
        %v1805 = vld [vmem:[#allocation13 + $0xc] sm:$0xf]
        %v1806 = vld [vmem:[#allocation13 + $0x10] sm:$0xf]
        %v1807 = vld [vmem:[#allocation13 + $0x14] sm:$0xf]
        %v1808 = vld [vmem:[#allocation13 + $0x18] sm:$0xf]
        %v1809 = vld [vmem:[#allocation13 + $0x1c] sm:$0xf]
        %v1810 = vld [vmem:[#allocation13 + $0x20] sm:$0xf]
        %v1811 = vld [vmem:[#allocation13 + $0x24] sm:$0xf]
        %v1812 = vld [vmem:[#allocation13 + $0x28] sm:$0xf]
        %v1813 = vld [vmem:[#allocation13 + $0x2c] sm:$0xf]
        %v1814 = vld [vmem:[#allocation13 + $0x30] sm:$0xf]
        %v1815 = vld [vmem:[#allocation13 + $0x34] sm:$0xf]
        %v1816 = vld [vmem:[#allocation13 + $0x38] sm:$0xf]
        %v1817 = vld [vmem:[#allocation13 + $0x3c] sm:$0xf]
        %v1818 = vld [vmem:[#allocation13 + $0x40] sm:$0xf]
        %v1819 = vld [vmem:[#allocation13 + $0x44] sm:$0xf]
        %v1820 = vld [vmem:[#allocation13 + $0x48] sm:$0xf]
        %v1821 = vld [vmem:[#allocation13 + $0x4c] sm:$0xf]
        %v1822 = vld [vmem:[#allocation13 + $0x50] sm:$0xf]
        %v1823 = vld [vmem:[#allocation13 + $0x54] sm:$0xf]
        %v1824 = vld [vmem:[#allocation13 + $0x58] sm:$0xf]
        %v1825 = vld [vmem:[#allocation13 + $0x5c] sm:$0xf]
        %v1826 = vld [vmem:[#allocation13 + $0x60] sm:$0xf]
        %v1827 = vld [vmem:[#allocation13 + $0x64] sm:$0xf]
        %v1828 = vld [vmem:[#allocation13 + $0x68] sm:$0xf]
        %v1829 = vld [vmem:[#allocation13 + $0x6c] sm:$0xf]
        %v1830 = vld [vmem:[#allocation13 + $0x70] sm:$0xf]
        %v1831 = vld [vmem:[#allocation13 + $0x74] sm:$0xf]
        %v1832 = vld [vmem:[#allocation13 + $0x78] sm:$0xf]
        %v1833 = vld [vmem:[#allocation13 + $0x7c] sm:$0xf]
        %v1834 = vld [vmem:[#allocation13 + $0x80] sm:$0xf]
        %v1835 = vld [vmem:[#allocation13 + $0x84] sm:$0xf]
        %v1836 = vld [vmem:[#allocation13 + $0x88] sm:$0xf]
        %v1837 = vld [vmem:[#allocation13 + $0x8c] sm:$0xf]
        %v1838 = vld [vmem:[#allocation13 + $0x90] sm:$0xf]
        %v1839 = vld [vmem:[#allocation13 + $0x94] sm:$0xf]
        %v1840 = vld [vmem:[#allocation13 + $0x98] sm:$0xf]
        %v1841 = vld [vmem:[#allocation13 + $0x9c] sm:$0xf]
        %v1842 = vld [vmem:[#allocation13 + $0xa0] sm:$0xf]
        %v1843 = vld [vmem:[#allocation13 + $0xa4] sm:$0xf]
        %v1844 = vld [vmem:[#allocation13 + $0xa8] sm:$0xf]
        %v1845 = vld [vmem:[#allocation13 + $0xac] sm:$0xf]
        %v1846 = vld [vmem:[#allocation13 + $0xb0] sm:$0xf]
        %v1847 = vld [vmem:[#allocation13 + $0xb4] sm:$0xf]
        %v1848 = vld [vmem:[#allocation13 + $0xb8] sm:$0xf]
        %v1849 = vld [vmem:[#allocation13 + $0xbc] sm:$0xf]
        %v1850 = vld [vmem:[#allocation13 + $0xc0] sm:$0xf]
        %v1851 = vld [vmem:[#allocation13 + $0xc4] sm:$0xf]
        %v1852 = vld [vmem:[#allocation13 + $0xc8] sm:$0xf]
        %v1853 = vld [vmem:[#allocation13 + $0xcc] sm:$0xf]
        %v1854 = vld [vmem:[#allocation13 + $0xd0] sm:$0xf]
        %v1855 = vld [vmem:[#allocation13 + $0xd4] sm:$0xf]
        %v1856 = vld [vmem:[#allocation13 + $0xd8] sm:$0xf]
        %v1857 = vld [vmem:[#allocation13 + $0xdc] sm:$0xf]
        %v1858 = vld [vmem:[#allocation13 + $0xe0] sm:$0xf]
        %v1859 = vld [vmem:[#allocation13 + $0xe4] sm:$0xf]
        %v1860 = vld [vmem:[#allocation13 + $0xe8] sm:$0xf]
        %v1861 = vld [vmem:[#allocation13 + $0xec] sm:$0xf]
        %v1862 = vld [vmem:[#allocation13 + $0xf0] sm:$0xf]
        %v1863 = vld [vmem:[#allocation13 + $0xf4] sm:$0xf]
        %v1864 = vld [vmem:[#allocation13 + $0xf8] sm:$0xf]
        %v1865 = vld [vmem:[#allocation13 + $0xfc] sm:$0xf]
        %v1866 = vld [vmem:[%s9] sm:$0x1]
        %v1868 = vperm.slane %v1866, 0
        %v1934 = vunpack.c.l.b16 %v1802
        %v1935 = vunpack.c.l.b16 %v1803
        %v1936 = vunpack.c.l.b16 %v1804
        %v1937 = vunpack.c.l.b16 %v1805
        %v1938 = vunpack.c.l.b16 %v1806
        %v1939 = vunpack.c.l.b16 %v1807
        %v1940 = vunpack.c.l.b16 %v1808
        %v1941 = vunpack.c.l.b16 %v1809
        %v1942 = vunpack.c.l.b16 %v1810
        %v1943 = vunpack.c.l.b16 %v1811
        %v1944 = vunpack.c.l.b16 %v1812
        %v1945 = vunpack.c.l.b16 %v1813
        %v1946 = vunpack.c.l.b16 %v1814
        %v1947 = vunpack.c.l.b16 %v1815
        %v1948 = vunpack.c.l.b16 %v1816
        %v1949 = vunpack.c.l.b16 %v1817
        %v1950 = vunpack.c.l.b16 %v1818
        %v1951 = vunpack.c.l.b16 %v1819
        %v1952 = vunpack.c.l.b16 %v1820
        %v1953 = vunpack.c.l.b16 %v1821
        %v1954 = vunpack.c.l.b16 %v1822
        %v1955 = vunpack.c.l.b16 %v1823
        %v1956 = vunpack.c.l.b16 %v1824
        %v1957 = vunpack.c.l.b16 %v1825
        %v1958 = vunpack.c.l.b16 %v1826
        %v1959 = vunpack.c.l.b16 %v1827
        %v1960 = vunpack.c.l.b16 %v1828
        %v1961 = vunpack.c.l.b16 %v1829
        %v1962 = vunpack.c.l.b16 %v1830
        %v1963 = vunpack.c.l.b16 %v1831
        %v1964 = vunpack.c.l.b16 %v1832
        %v1965 = vunpack.c.l.b16 %v1833
        %v1966 = vunpack.c.l.b16 %v1834
        %v1967 = vunpack.c.l.b16 %v1835
        %v1968 = vunpack.c.l.b16 %v1836
        %v1969 = vunpack.c.l.b16 %v1837
        %v1970 = vunpack.c.l.b16 %v1838
        %v1971 = vunpack.c.l.b16 %v1839
        %v1972 = vunpack.c.l.b16 %v1840
        %v1973 = vunpack.c.l.b16 %v1841
        %v1974 = vunpack.c.l.b16 %v1842
        %v1975 = vunpack.c.l.b16 %v1843
        %v1976 = vunpack.c.l.b16 %v1844
        %v1977 = vunpack.c.l.b16 %v1845
        %v1978 = vunpack.c.l.b16 %v1846
        %v1979 = vunpack.c.l.b16 %v1847
        %v1980 = vunpack.c.l.b16 %v1848
        %v1981 = vunpack.c.l.b16 %v1849
        %v1982 = vunpack.c.l.b16 %v1850
        %v1983 = vunpack.c.l.b16 %v1851
        %v1984 = vunpack.c.l.b16 %v1852
        %v1985 = vunpack.c.l.b16 %v1853
        %v1986 = vunpack.c.l.b16 %v1854
        %v1987 = vunpack.c.l.b16 %v1855
        %v1988 = vunpack.c.l.b16 %v1856
        %v1989 = vunpack.c.l.b16 %v1857
        %v1990 = vunpack.c.l.b16 %v1858
        %v1991 = vunpack.c.l.b16 %v1859
        %v1992 = vunpack.c.l.b16 %v1860
        %v1993 = vunpack.c.l.b16 %v1861
        %v1994 = vunpack.c.l.b16 %v1862
        %v1995 = vunpack.c.l.b16 %v1863
        %v1996 = vunpack.c.l.b16 %v1864
        %v1997 = vunpack.c.l.b16 %v1865
        %v1998 = vpack.c.b16 %v1935, %v1934
        %v1999 = vpack.c.b16 %v1937, %v1936
        %v2000 = vpack.c.b16 %v1939, %v1938
        %v2001 = vpack.c.b16 %v1941, %v1940
        %v2002 = vpack.c.b16 %v1943, %v1942
        %v2003 = vpack.c.b16 %v1945, %v1944
        %v2004 = vpack.c.b16 %v1947, %v1946
        %v2005 = vpack.c.b16 %v1949, %v1948
        %v2006 = vpack.c.b16 %v1951, %v1950
        %v2007 = vpack.c.b16 %v1953, %v1952
        %v2008 = vpack.c.b16 %v1955, %v1954
        %v2009 = vpack.c.b16 %v1957, %v1956
        %v2010 = vpack.c.b16 %v1959, %v1958
        %v2011 = vpack.c.b16 %v1961, %v1960
        %v2012 = vpack.c.b16 %v1963, %v1962
        %v2013 = vpack.c.b16 %v1965, %v1964
        %v2014 = vpack.c.b16 %v1967, %v1966
        %v2015 = vpack.c.b16 %v1969, %v1968
        %v2016 = vpack.c.b16 %v1971, %v1970
        %v2017 = vpack.c.b16 %v1973, %v1972
        %v2018 = vpack.c.b16 %v1975, %v1974
        %v2019 = vpack.c.b16 %v1977, %v1976
        %v2020 = vpack.c.b16 %v1979, %v1978
        %v2021 = vpack.c.b16 %v1981, %v1980
        %v2022 = vpack.c.b16 %v1983, %v1982
        %v2023 = vpack.c.b16 %v1985, %v1984
        %v2024 = vpack.c.b16 %v1987, %v1986
        %v2025 = vpack.c.b16 %v1989, %v1988
        %v2026 = vpack.c.b16 %v1991, %v1990
        %v2027 = vpack.c.b16 %v1993, %v1992
        %v2028 = vpack.c.b16 %v1995, %v1994
        %v2029 = vpack.c.b16 %v1997, %v1996
        %2062 = vmatpush.bf16.msra.mxu0 %v2005
        %2063 = vmatpush.bf16.msra.mxu0 %v2004
        %2064 = vmatpush.bf16.msra.mxu0 %v2003
        %2065 = vmatpush.bf16.msra.mxu0 %v2002
        %2066 = vmatpush.bf16.msra.mxu0 %v2001
        %2067 = vmatpush.bf16.msra.mxu0 %v2000
        %2068 = vmatpush.bf16.msra.mxu0 %v1999
        %2069 = vmatpush.bf16.msra.mxu0 %v1998
        %2070 = vmatmul.bf16.gmra.mxu0 %v1798
        %v2071 = vpop.f32.mrf.mxu0
        %v2072 = vadd.f32 %v1868, %v2071
        %v2073 = vpop.f32.mrf.mxu0
        %v2074 = vadd.f32 %v1868, %v2073
        %2075 = vdwg.mxu0
        %2076 = vmatpush.bf16.msra.mxu0 %v2013
        %2077 = vmatpush.bf16.msra.mxu0 %v2012
        %2078 = vmatpush.bf16.msra.mxu0 %v2011
        %2079 = vmatpush.bf16.msra.mxu0 %v2010
        %2080 = vmatpush.bf16.msra.mxu0 %v2009
        %2081 = vmatpush.bf16.msra.mxu0 %v2008
        %2082 = vmatpush.bf16.msra.mxu0 %v2007
        %2083 = vmatpush.bf16.msra.mxu0 %v2006
        %2084 = vmatmul.bf16.gmra.mxu0 %v1799
        %v2085 = vpop.f32.mrf.mxu0
        %v2086 = vadd.f32 %v2072, %v2085
        %v2087 = vpop.f32.mrf.mxu0
        %v2088 = vadd.f32 %v2074, %v2087
        %2089 = vdwg.mxu0
        %2090 = vmatpush.bf16.msra.mxu0 %v2021
        %2091 = vmatpush.bf16.msra.mxu0 %v2020
        %2092 = vmatpush.bf16.msra.mxu0 %v2019
        %2093 = vmatpush.bf16.msra.mxu0 %v2018
        %2094 = vmatpush.bf16.msra.mxu0 %v2017
        %2095 = vmatpush.bf16.msra.mxu0 %v2016
        %2096 = vmatpush.bf16.msra.mxu0 %v2015
        %2097 = vmatpush.bf16.msra.mxu0 %v2014
        %2098 = vmatmul.bf16.gmra.mxu0 %v1800
        %v2099 = vpop.f32.mrf.mxu0
        %v2100 = vadd.f32 %v2086, %v2099
        %v2101 = vpop.f32.mrf.mxu0
        %v2102 = vadd.f32 %v2088, %v2101
        %2103 = vdwg.mxu0
        %2104 = vmatpush.bf16.msra.mxu0 %v2029
        %2105 = vmatpush.bf16.msra.mxu0 %v2028
        %2106 = vmatpush.bf16.msra.mxu0 %v2027
        %2107 = vmatpush.bf16.msra.mxu0 %v2026
        %2108 = vmatpush.bf16.msra.mxu0 %v2025
        %2109 = vmatpush.bf16.msra.mxu0 %v2024
        %2110 = vmatpush.bf16.msra.mxu0 %v2023
        %2111 = vmatpush.bf16.msra.mxu0 %v2022
        %2112 = vmatmul.bf16.gmra.mxu0 %v1801
        %v2113 = vpop.f32.mrf.mxu0
        %v2114 = vadd.f32 %v2100, %v2113
        %v2115 = vpop.f32.mrf.mxu0
        %v2116 = vadd.f32 %v2102, %v2115
        %2117 = vdwg.mxu0
        %v2118 = vadd.f32 %v1477, %v2114
        %v2119 = vadd.f32 %v1478, %v2116
        %2120 = vst [vmem:[%s582] sm:$0xff] %v2118
        %2121 = vst [vmem:[%s582 + $0x8] sm:$0xff] %v2119
        %s2122 = sand.u32 %s341, 1
        %s2123 = scalar_lea.sflag [#allocation4], %s2122
        %s2124 = sand.u32 %s341, 1
        %s2125 = smul.addr %s2124, 16
        %s2126 = scalar_lea.vmem [#allocation14], %s2125
        // Predicated region
        $region105: #{tpu_custom_call.1} parent=75 // pred_check
          %p2127 = pneg %p351
        $region106: #{tpu_custom_call.1} parent=75 // pred_check_branch
          %2129 = sbr.rel (%p2127) target = $region108
        $region107: #{tpu_custom_call.1} parent=75 // pred_region
          %s2130 = smul.u32 2, %s34
          %2132 = vsyncadd %s2123, 0
          %s2133 = smul.addr %s2130, 8
          %s2134 = scalar_lea.hbm %s14, %s2133
          %s2135 = sshll.u32 %s2126, 4
          %s2136 = int_to_ptr.vmem [resolvable:$true] %s2135
          %s2137 = sshll.u32 %s2134, 4
          %s2138 = int_to_ptr.hbm [resolvable:$true] %s2137
          %2143 = dma.vmem_to_hbm [thread:$0]  %s2136, 256, %s2138, %s2123, 128, 128, 8
        $region108: #{tpu_custom_call.1} parent=75 // pred_fallthru
          _
      $region76: #{tpu_custom_call.1} parent=5 // pred_fallthru
        _
      %p2144 = scmp.le.s32.totalorder 2, %s29
      // Predicated region
      $region109: #{tpu_custom_call.1} parent=5 // pred_check
        %p2145 = pneg %p2144
      $region110: #{tpu_custom_call.1} parent=5 // pred_check_branch
        %2147 = sbr.rel (%p2145) target = $region112
      $region111: #{tpu_custom_call.1} parent=5 // pred_region
        %s2148 = ssub.s32 %s29, 2
        // Predicated region
        $region113: #{tpu_custom_call.1} parent=111 // pred_check
          %p2149 = pneg %p357
        $region114: #{tpu_custom_call.1} parent=111 // pred_check_branch
          %2151 = sbr.rel (%p2149) target = $region116
        $region115: #{tpu_custom_call.1} parent=111 // pred_region
          %s2152 = sand.u32 %s342, 1
          %s2153 = scalar_lea.sflag [#allocation4], %s2152
          %s2154 = sand.u32 %s342, 1
          %s2155 = smul.addr %s2154, 16
          %s2156 = scalar_lea.vmem [#allocation14], %s2155
          %2158 = dma.done %s2153, 256
        $region116: #{tpu_custom_call.1} parent=111 // pred_fallthru
          _
      $region112: #{tpu_custom_call.1} parent=5 // pred_fallthru
        _
    $region6: #{tpu_custom_call.1} parent=1 // loop_footer
      %s33 = sadd.s32 1, %s29
    $region7: #{tpu_custom_call.1} parent=1 // loop_footer_branch
      %28 = sbr.rel target = $region3
    $region8: #{tpu_custom_call.1} parent=1 // loop_exit
      _
    %2159 = vsyncpa [#allocation3], 1
    %s2160 = scalar_lea.sflag [#allocation3], 1
    %2161 = vsyncpa %s2160, 1
    %2162 = vsyncpa [#allocation6], 1
    %2163 = vsyncpa [#allocation9], 1
    %2164 = vsyncpa [#allocation12], 1
    %2165 = vsyncpa [#allocation4], 1
    %s2166 = scalar_lea.sflag [#allocation4], 1
    %2167 = vsyncpa %s2166, 1

</llo_original>
